<compile_context>
chip_gen: v5e
topology: v5e:2x2
jax: 0.10.0
libtpu: 0.0.40
codegen_flags: <defaults>
</compile_context>

<pallas_src>
import functools

import jax
import jax.numpy as jnp
from jax import lax
from jax.experimental import pallas as pl
from jax.experimental.pallas import tpu as pltpu


# ---------------------------------------------------------------------------
# Fused encoder+decoder kernel. Grid = (batch_blocks,), batch rows independent.
# ---------------------------------------------------------------------------
def _disc_seq2seq_kernel(enc_x_ref, dec_x_ref,
                         enc_wih_ref, enc_whh_ref, enc_bi_ref, enc_bhn_ref,
                         dec_wih_ref, dec_whh_ref, dec_bi_ref, dec_bhn_ref,
                         wout_ref, bout_ref,
                         logits_ref, hfin_ref,
                         gi_enc_sc, gi_dec_sc, hall_sc,
                         *, unroll):
    S, bb, H = enc_x_ref.shape

    # ---- input-side gate pre-activations: ONE bf16 MXU matmul per GRU, bias
    #      folded, fully off the serial recurrence chain. -------------------
    enc_x2 = enc_x_ref[...].reshape(S * bb, H)                     # bf16
    dec_x2 = dec_x_ref[...].reshape(S * bb, H)
    gi_enc = jnp.dot(enc_x2, enc_wih_ref[...],
                     preferred_element_type=jnp.float32) + enc_bi_ref[...]
    gi_dec = jnp.dot(dec_x2, dec_wih_ref[...],
                     preferred_element_type=jnp.float32) + dec_bi_ref[...]
    gi_enc_sc[...] = gi_enc.reshape(S, bb, 3 * H)
    gi_dec_sc[...] = gi_dec.reshape(S, bb, 3 * H)

    # Hoisted bias broadcasts (re-emitted per unrolled step otherwise).
    enc_bhn = jnp.broadcast_to(enc_bhn_ref[...], (bb, H))
    dec_bhn = jnp.broadcast_to(dec_bhn_ref[...], (bb, H))

    def make_step(whh, bhn, gi_sc):
        # PyTorch nn.GRU gate math, (r|z|n) fused weight layout; only the
        # hidden-side matmul remains inside the recurrence.
        def step(t, h):
            gi = gi_sc[t]                                           # (bb, 3H) f32
            gh = jnp.dot(h.astype(whh.dtype), whh,
                         preferred_element_type=jnp.float32)        # (bb, 3H)
            # sigmoid(x) == 0.5*(tanh(0.5*x)+1): one EUP op per gate.
            r = 0.5 * (jnp.tanh(0.5 * (gi[:, 0 * H:1 * H] + gh[:, 0 * H:1 * H])) + 1.0)
            z = 0.5 * (jnp.tanh(0.5 * (gi[:, 1 * H:2 * H] + gh[:, 1 * H:2 * H])) + 1.0)
            n = jnp.tanh(gi[:, 2 * H:3 * H] + r * (gh[:, 2 * H:3 * H] + bhn))
            return (1.0 - z) * n + z * h
        return step

    enc_step = make_step(enc_whh_ref[...], enc_bhn, gi_enc_sc)
    dec_step = make_step(dec_whh_ref[...], dec_bhn, gi_dec_sc)

    h0 = jnp.zeros((bb, H), jnp.float32)

    # --- encoder recurrence -------------------------------------------------
    h_enc = lax.fori_loop(0, S, enc_step, h0, unroll=unroll)

    # --- decoder recurrence; stash hiddens for the fused head ---------------
    def dec_body(t, h):
        h_new = dec_step(t, h)
        hall_sc[t] = h_new                                          # full (bb,H) tile store
        return h_new

    h_dec = lax.fori_loop(0, S, dec_body, h_enc, unroll=unroll)
    hfin_ref[...] = h_dec.astype(hfin_ref.dtype)

    # --- label_size == 1 head: VPU multiply + lane reduce (lane-dense out) --
    w = wout_ref[...]                                               # (1, H) f32
    logits_sb = jnp.sum(hall_sc[...] * w[None, :, :], axis=-1)      # (S, bb)
    logits_ref[...] = (logits_sb.T + bout_ref[...]).astype(logits_ref.dtype)


def seq2seq_discriminator(enc_x, dec_x, p, *, batch_block=8):
    """enc_x/dec_x: (S, B, H) bf16 embedded sequences -> (pred_logits, h_dec)."""
    S, B, H = enc_x.shape
    bb = min(batch_block, B)
    assert B % bb == 0, "batch must be a multiple of the batch block"
    nb = B // bb
    unroll = True if S <= 32 else 4

    kernel = functools.partial(_disc_seq2seq_kernel, unroll=unroll)

    grid_spec = pltpu.PrefetchScalarGridSpec(
        num_scalar_prefetch=0,
        grid=(nb,),
        in_specs=[
            pl.BlockSpec((S, bb, H), lambda i: (0, i, 0)),   # enc_x
            pl.BlockSpec((S, bb, H), lambda i: (0, i, 0)),   # dec_x
            pl.BlockSpec((H, 3 * H), lambda i: (0, 0)),      # enc_wih
            pl.BlockSpec((H, 3 * H), lambda i: (0, 0)),      # enc_whh
            pl.BlockSpec((1, 3 * H), lambda i: (0, 0)),      # enc_bi
            pl.BlockSpec((1, H), lambda i: (0, 0)),          # enc_bhn
            pl.BlockSpec((H, 3 * H), lambda i: (0, 0)),      # dec_wih
            pl.BlockSpec((H, 3 * H), lambda i: (0, 0)),      # dec_whh
            pl.BlockSpec((1, 3 * H), lambda i: (0, 0)),      # dec_bi
            pl.BlockSpec((1, H), lambda i: (0, 0)),          # dec_bhn
            pl.BlockSpec((1, H), lambda i: (0, 0)),          # wout (row vector)
            pl.BlockSpec((1, 1), lambda i: (0, 0)),          # bout
        ],
        out_specs=(
            pl.BlockSpec((bb, S), lambda i: (i, 0)),         # logits (B, S) slab
            pl.BlockSpec((bb, H), lambda i: (i, 0)),         # final dec hidden
        ),
        scratch_shapes=[
            pltpu.VMEM((S, bb, 3 * H), jnp.float32),         # gi_enc (precomputed)
            pltpu.VMEM((S, bb, 3 * H), jnp.float32),         # gi_dec (precomputed)
            pltpu.VMEM((S, bb, H), jnp.float32),             # stacked dec hiddens
        ],
    )

    logits_bs, h_dec = pl.pallas_call(
        kernel,
        out_shape=(
            jax.ShapeDtypeStruct((B, S), jnp.float32),
            jax.ShapeDtypeStruct((B, H), jnp.float32),
        ),
        grid_spec=grid_spec,
        # Batch blocks are independent -> feed both v7x TensorCores.
        # VMEM footprint at realistic sizes must be re-budgeted for v7x (64MiB);
        # at these sizes the default scoped limit is ample.
        compiler_params=pltpu.CompilerParams(
            dimension_semantics=("parallel",)),
    )(enc_x, dec_x,
      p["enc_wih"], p["enc_whh"], p["enc_bi"], p["enc_bhn"],
      p["dec_wih"], p["dec_whh"], p["dec_bi"], p["dec_bhn"],
      p["dec_wout"], p["dec_bout"])

    pred_logits = logits_bs.T[:, :, None]                    # (S, B, 1)
    return pred_logits, h_dec


# ---------------------------------------------------------------------------
# Parameter init (deterministic, in-script) in the fused weight layout.
# ---------------------------------------------------------------------------
def init_params(key, n_vocabs, hidden_size, label_size):
    H, L, V = hidden_size, label_size, n_vocabs
    # TODO(synk): head specialized to label_size == 1 (MaskGAN discriminator);
    #             generalize the lane-dense head for L > 1 if ever needed.
    assert L == 1
    ks = jax.random.split(key, 12)
    s = 0.1

    def fused_gru(kw, ku, kbi, kbh):
        # Per-gate (r, z, n) params in nn.GRU convention, stored pre-fused:
        # Wih/Whh -> (H, 3H) bf16; r/z biases folded (they sum before the
        # sigmoid); only the hidden-side n bias stays separate (scaled by r).
        wih = s * jax.random.normal(kw, (3, H, H), jnp.float32)
        whh = s * jax.random.normal(ku, (3, H, H), jnp.float32)
        bih = s * jax.random.normal(kbi, (3, H), jnp.float32)
        bhh = s * jax.random.normal(kbh, (3, H), jnp.float32)
        wih_cat = jnp.concatenate([wih[0], wih[1], wih[2]], axis=1).astype(jnp.bfloat16)
        whh_cat = jnp.concatenate([whh[0], whh[1], whh[2]], axis=1).astype(jnp.bfloat16)
        bi = jnp.concatenate([bih[0] + bhh[0], bih[1] + bhh[1], bih[2]])[None, :]
        bhn = bhh[2][None, :]
        return wih_cat, whh_cat, bi, bhn

    e_wih, e_whh, e_bi, e_bhn = fused_gru(ks[1], ks[2], ks[3], ks[4])
    d_wih, d_whh, d_bi, d_bhn = fused_gru(ks[6], ks[7], ks[8], ks[9])
    return dict(
        enc_embedding=(s * jax.random.normal(ks[0], (V, H), jnp.float32)).astype(jnp.bfloat16),
        enc_wih=e_wih, enc_whh=e_whh, enc_bi=e_bi, enc_bhn=e_bhn,
        dec_embedding=(s * jax.random.normal(ks[5], (V, H), jnp.float32)).astype(jnp.bfloat16),
        dec_wih=d_wih, dec_whh=d_whh, dec_bi=d_bi, dec_bhn=d_bhn,
        dec_wout=s * jax.random.normal(ks[10], (1, H), jnp.float32),   # head as row vector
        dec_bout=s * jax.random.normal(ks[11], (1, 1), jnp.float32),
    )


@jax.jit
def discriminator_forward(params, input_batch, label_batch):
    """Equivalent of Discriminator.forward -> (pred_logits, decoder_hidden).

    input_batch, label_batch: (batch, seq) int32 token ids.
    Returns pred_logits (max_seq_len, batch, label_size) and the decoder final
    hidden state (batch, hidden).
    """
    # Gather with transposed int32 ids -> (S, B, H) directly (no f32 transpose).
    enc_x = jnp.take(params["enc_embedding"], input_batch.T, axis=0)
    dec_x = jnp.take(params["dec_embedding"], label_batch.T, axis=0)
    return seq2seq_discriminator(enc_x, dec_x, params)


if __name__ == "__main__":
    # Small, lane/sublane-friendly shapes: hidden multiple of 128, batch split
    # into two 8-row blocks so the parallel grid exercises both v7x cores.
    n_vocabs = 50
    hidden_size = 128
    label_size = 1
    max_seq_len = 8
    batch = 16

    root = jax.random.PRNGKey(0)
    k_params, k_in, k_lab = jax.random.split(root, 3)

    params = init_params(k_params, n_vocabs, hidden_size, label_size)
    input_batch = jax.random.randint(k_in, (batch, max_seq_len), 0, n_vocabs,
                                     dtype=jnp.int32)
    label_batch = jax.random.randint(k_lab, (batch, max_seq_len), 0, n_vocabs,
                                     dtype=jnp.int32)

    pred_logits, dec_hidden = discriminator_forward(params, input_batch,
                                                    label_batch)
    jax.block_until_ready((pred_logits, dec_hidden))

    assert pred_logits.shape == (max_seq_len, batch, label_size)
    assert dec_hidden.shape == (batch, hidden_size)
    assert bool(jnp.all(jnp.isfinite(pred_logits)))
    assert bool(jnp.all(jnp.isfinite(dec_hidden)))
    print("KERNEL_OK")
</pallas_src>

<mosaic_0001>
module attributes {stable_mosaic.version = 11 : i64} {
  func.func @_disc_seq2seq_kernel(%arg0: i32, %arg1: memref<8x8x128xbf16, #tpu.memory_space<vmem>>, %arg2: memref<8x8x128xbf16, #tpu.memory_space<vmem>>, %arg3: memref<128x384xbf16, #tpu.memory_space<vmem>>, %arg4: memref<128x384xbf16, #tpu.memory_space<vmem>>, %arg5: memref<1x384xf32, #tpu.memory_space<vmem>>, %arg6: memref<1x128xf32, #tpu.memory_space<vmem>>, %arg7: memref<128x384xbf16, #tpu.memory_space<vmem>>, %arg8: memref<128x384xbf16, #tpu.memory_space<vmem>>, %arg9: memref<1x384xf32, #tpu.memory_space<vmem>>, %arg10: memref<1x128xf32, #tpu.memory_space<vmem>>, %arg11: memref<1x128xf32, #tpu.memory_space<vmem>>, %arg12: memref<1x1xf32, #tpu.memory_space<vmem>>, %arg13: memref<8x8xf32, #tpu.memory_space<vmem>>, %arg14: memref<8x128xf32, #tpu.memory_space<vmem>>, %arg15: memref<8x8x384xf32, #tpu.memory_space<vmem>>, %arg16: memref<8x8x384xf32, #tpu.memory_space<vmem>>, %arg17: memref<8x8x128xf32, #tpu.memory_space<vmem>>) attributes {dimension_semantics = [#tpu.dimension_semantics<parallel>], iteration_bounds = array<i64: 2>, scalar_prefetch = 0 : i64, scratch_operands = 3 : i64, tpu.core_type = #tpu.core_type<tc>, window_params = [{transform_indices = @transform_0, window_bounds = array<i64: 8, 8, 128>}, {transform_indices = @transform_1, window_bounds = array<i64: 8, 8, 128>}, {pipeline_mode = #tpu.pipeline_mode<synchronous>, transform_indices = @transform_2, window_bounds = array<i64: 128, 384>}, {pipeline_mode = #tpu.pipeline_mode<synchronous>, transform_indices = @transform_3, window_bounds = array<i64: 128, 384>}, {pipeline_mode = #tpu.pipeline_mode<synchronous>, transform_indices = @transform_4, window_bounds = array<i64: 1, 384>}, {pipeline_mode = #tpu.pipeline_mode<synchronous>, transform_indices = @transform_5, window_bounds = array<i64: 1, 128>}, {pipeline_mode = #tpu.pipeline_mode<synchronous>, transform_indices = @transform_6, window_bounds = array<i64: 128, 384>}, {pipeline_mode = #tpu.pipeline_mode<synchronous>, transform_indices = @transform_7, window_bounds = array<i64: 128, 384>}, {pipeline_mode = #tpu.pipeline_mode<synchronous>, transform_indices = @transform_8, window_bounds = array<i64: 1, 384>}, {pipeline_mode = #tpu.pipeline_mode<synchronous>, transform_indices = @transform_9, window_bounds = array<i64: 1, 128>}, {pipeline_mode = #tpu.pipeline_mode<synchronous>, transform_indices = @transform_10, window_bounds = array<i64: 1, 128>}, {pipeline_mode = #tpu.pipeline_mode<synchronous>, transform_indices = @transform_11, window_bounds = array<i64: 1, 1>}, {transform_indices = @transform_12, window_bounds = array<i64: 8, 8>}, {transform_indices = @transform_13, window_bounds = array<i64: 8, 128>}]} {
    %c0 = arith.constant 0 : index
    %c0_0 = arith.constant 0 : index
    %c0_1 = arith.constant 0 : index
    %0 = vector.load %arg1[%c0, %c0_0, %c0_1] : memref<8x8x128xbf16, #tpu.memory_space<vmem>>, vector<8x8x128xbf16>
    %1 = vector.shape_cast %0 : vector<8x8x128xbf16> to vector<64x128xbf16>
    %c0_2 = arith.constant 0 : index
    %c0_3 = arith.constant 0 : index
    %c0_4 = arith.constant 0 : index
    %2 = vector.load %arg2[%c0_2, %c0_3, %c0_4] : memref<8x8x128xbf16, #tpu.memory_space<vmem>>, vector<8x8x128xbf16>
    %3 = vector.shape_cast %2 : vector<8x8x128xbf16> to vector<64x128xbf16>
    %c0_5 = arith.constant 0 : index
    %c0_6 = arith.constant 0 : index
    %4 = vector.load %arg3[%c0_5, %c0_6] : memref<128x384xbf16, #tpu.memory_space<vmem>>, vector<128x384xbf16>
    %cst = arith.constant dense<0.000000e+00> : vector<64x384xf32>
    %5 = tpu.matmul %1, %4, %cst {dimension_numbers = #tpu.dot_dimension_numbers<[1], [0], [0], [1], [0, 0, 1, 1], [], []>} : vector<64x128xbf16>, vector<128x384xbf16>, vector<64x384xf32> -> vector<64x384xf32>
    %c0_7 = arith.constant 0 : index
    %c0_8 = arith.constant 0 : index
    %6 = vector.load %arg5[%c0_7, %c0_8] : memref<1x384xf32, #tpu.memory_space<vmem>>, vector<1x384xf32>
    %7 = vector.broadcast %6 : vector<1x384xf32> to vector<64x384xf32>
    %8 = arith.addf %5, %7 : vector<64x384xf32>
    %c0_9 = arith.constant 0 : index
    %c0_10 = arith.constant 0 : index
    %9 = vector.load %arg7[%c0_9, %c0_10] : memref<128x384xbf16, #tpu.memory_space<vmem>>, vector<128x384xbf16>
    %cst_11 = arith.constant dense<0.000000e+00> : vector<64x384xf32>
    %10 = tpu.matmul %3, %9, %cst_11 {dimension_numbers = #tpu.dot_dimension_numbers<[1], [0], [0], [1], [0, 0, 1, 1], [], []>} : vector<64x128xbf16>, vector<128x384xbf16>, vector<64x384xf32> -> vector<64x384xf32>
    %c0_12 = arith.constant 0 : index
    %c0_13 = arith.constant 0 : index
    %11 = vector.load %arg9[%c0_12, %c0_13] : memref<1x384xf32, #tpu.memory_space<vmem>>, vector<1x384xf32>
    %12 = vector.broadcast %11 : vector<1x384xf32> to vector<64x384xf32>
    %13 = arith.addf %10, %12 : vector<64x384xf32>
    %14 = vector.shape_cast %8 : vector<64x384xf32> to vector<8x8x384xf32>
    %c0_14 = arith.constant 0 : index
    %c0_15 = arith.constant 0 : index
    %c0_16 = arith.constant 0 : index
    %15 = vector.load %arg15[%c0_14, %c0_15, %c0_16] : memref<8x8x384xf32, #tpu.memory_space<vmem>>, vector<8x8x384xf32>
    tpu.vector_store %arg15[%c0_14, %c0_15, %c0_16], %14 {strides = array<i32>} : memref<8x8x384xf32, #tpu.memory_space<vmem>>, vector<8x8x384xf32>,
    %16 = vector.shape_cast %13 : vector<64x384xf32> to vector<8x8x384xf32>
    %c0_17 = arith.constant 0 : index
    %c0_18 = arith.constant 0 : index
    %c0_19 = arith.constant 0 : index
    %17 = vector.load %arg16[%c0_17, %c0_18, %c0_19] : memref<8x8x384xf32, #tpu.memory_space<vmem>>, vector<8x8x384xf32>
    tpu.vector_store %arg16[%c0_17, %c0_18, %c0_19], %16 {strides = array<i32>} : memref<8x8x384xf32, #tpu.memory_space<vmem>>, vector<8x8x384xf32>,
    %c0_20 = arith.constant 0 : index
    %c0_21 = arith.constant 0 : index
    %18 = vector.load %arg6[%c0_20, %c0_21] : memref<1x128xf32, #tpu.memory_space<vmem>>, vector<1x128xf32>
    %19 = vector.shape_cast %18 : vector<1x128xf32> to vector<1x128xf32>
    %20 = vector.broadcast %19 : vector<1x128xf32> to vector<8x128xf32>
    %c0_22 = arith.constant 0 : index
    %c0_23 = arith.constant 0 : index
    %21 = vector.load %arg10[%c0_22, %c0_23] : memref<1x128xf32, #tpu.memory_space<vmem>>, vector<1x128xf32>
    %22 = vector.shape_cast %21 : vector<1x128xf32> to vector<1x128xf32>
    %23 = vector.broadcast %22 : vector<1x128xf32> to vector<8x128xf32>
    %c0_24 = arith.constant 0 : index
    %c0_25 = arith.constant 0 : index
    %24 = vector.load %arg4[%c0_24, %c0_25] : memref<128x384xbf16, #tpu.memory_space<vmem>>, vector<128x384xbf16>
    %c0_26 = arith.constant 0 : index
    %c0_27 = arith.constant 0 : index
    %25 = vector.load %arg8[%c0_26, %c0_27] : memref<128x384xbf16, #tpu.memory_space<vmem>>, vector<128x384xbf16>
    %cst_28 = arith.constant 0.000000e+00 : f32
    %26 = vector.broadcast %cst_28 : f32 to vector<8x128xf32>
    %c0_i32 = arith.constant 0 : i32
    %27 = arith.index_cast %c0_i32 : i32 to index
    %c0_29 = arith.constant 0 : index
    %c0_30 = arith.constant 0 : index
    %28 = vector.load %arg15[%27, %c0_29, %c0_30] : memref<8x8x384xf32, #tpu.memory_space<vmem>>, vector<1x8x384xf32>
    %29 = vector.shape_cast %28 : vector<1x8x384xf32> to vector<8x384xf32>
    %30 = arith.truncf %26 : vector<8x128xf32> to vector<8x128xbf16>
    %cst_31 = arith.constant dense<0.000000e+00> : vector<8x384xf32>
    %31 = tpu.matmul %30, %24, %cst_31 {dimension_numbers = #tpu.dot_dimension_numbers<[1], [0], [0], [1], [0, 0, 1, 1], [], []>} : vector<8x128xbf16>, vector<128x384xbf16>, vector<8x384xf32> -> vector<8x384xf32>
    %32 = vector.extract_strided_slice %29 {offsets = [0, 0], sizes = [8, 128], strides = [1, 1]} : vector<8x384xf32> to vector<8x128xf32>
    %33 = vector.extract_strided_slice %31 {offsets = [0, 0], sizes = [8, 128], strides = [1, 1]} : vector<8x384xf32> to vector<8x128xf32>
    %34 = arith.addf %32, %33 : vector<8x128xf32>
    %cst_32 = arith.constant 5.000000e-01 : f32
    %35 = vector.broadcast %cst_32 : f32 to vector<8x128xf32>
    %36 = arith.mulf %35, %34 : vector<8x128xf32>
    %37 = math.tanh %36 : vector<8x128xf32>
    %cst_33 = arith.constant 1.000000e+00 : f32
    %38 = vector.broadcast %cst_33 : f32 to vector<8x128xf32>
    %39 = arith.addf %37, %38 : vector<8x128xf32>
    %cst_34 = arith.constant 5.000000e-01 : f32
    %40 = vector.broadcast %cst_34 : f32 to vector<8x128xf32>
    %41 = arith.mulf %40, %39 : vector<8x128xf32>
    %42 = vector.extract_strided_slice %29 {offsets = [0, 128], sizes = [8, 128], strides = [1, 1]} : vector<8x384xf32> to vector<8x128xf32>
    %43 = vector.extract_strided_slice %31 {offsets = [0, 128], sizes = [8, 128], strides = [1, 1]} : vector<8x384xf32> to vector<8x128xf32>
    %44 = arith.addf %42, %43 : vector<8x128xf32>
    %cst_35 = arith.constant 5.000000e-01 : f32
    %45 = vector.broadcast %cst_35 : f32 to vector<8x128xf32>
    %46 = arith.mulf %45, %44 : vector<8x128xf32>
    %47 = math.tanh %46 : vector<8x128xf32>
    %cst_36 = arith.constant 1.000000e+00 : f32
    %48 = vector.broadcast %cst_36 : f32 to vector<8x128xf32>
    %49 = arith.addf %47, %48 : vector<8x128xf32>
    %cst_37 = arith.constant 5.000000e-01 : f32
    %50 = vector.broadcast %cst_37 : f32 to vector<8x128xf32>
    %51 = arith.mulf %50, %49 : vector<8x128xf32>
    %52 = vector.extract_strided_slice %29 {offsets = [0, 256], sizes = [8, 128], strides = [1, 1]} : vector<8x384xf32> to vector<8x128xf32>
    %53 = vector.extract_strided_slice %31 {offsets = [0, 256], sizes = [8, 128], strides = [1, 1]} : vector<8x384xf32> to vector<8x128xf32>
    %54 = arith.addf %53, %20 : vector<8x128xf32>
    %55 = arith.mulf %41, %54 : vector<8x128xf32>
    %56 = arith.addf %52, %55 : vector<8x128xf32>
    %57 = math.tanh %56 : vector<8x128xf32>
    %cst_38 = arith.constant 1.000000e+00 : f32
    %58 = vector.broadcast %cst_38 : f32 to vector<8x128xf32>
    %59 = arith.subf %58, %51 : vector<8x128xf32>
    %60 = arith.mulf %59, %57 : vector<8x128xf32>
    %61 = arith.mulf %51, %26 : vector<8x128xf32>
    %62 = arith.addf %60, %61 : vector<8x128xf32>
    %c1_i32 = arith.constant 1 : i32
    %63 = arith.index_cast %c1_i32 : i32 to index
    %c0_39 = arith.constant 0 : index
    %c0_40 = arith.constant 0 : index
    %64 = vector.load %arg15[%63, %c0_39, %c0_40] : memref<8x8x384xf32, #tpu.memory_space<vmem>>, vector<1x8x384xf32>
    %65 = vector.shape_cast %64 : vector<1x8x384xf32> to vector<8x384xf32>
    %66 = arith.truncf %62 : vector<8x128xf32> to vector<8x128xbf16>
    %cst_41 = arith.constant dense<0.000000e+00> : vector<8x384xf32>
    %67 = tpu.matmul %66, %24, %cst_41 {dimension_numbers = #tpu.dot_dimension_numbers<[1], [0], [0], [1], [0, 0, 1, 1], [], []>} : vector<8x128xbf16>, vector<128x384xbf16>, vector<8x384xf32> -> vector<8x384xf32>
    %68 = vector.extract_strided_slice %65 {offsets = [0, 0], sizes = [8, 128], strides = [1, 1]} : vector<8x384xf32> to vector<8x128xf32>
    %69 = vector.extract_strided_slice %67 {offsets = [0, 0], sizes = [8, 128], strides = [1, 1]} : vector<8x384xf32> to vector<8x128xf32>
    %70 = arith.addf %68, %69 : vector<8x128xf32>
    %cst_42 = arith.constant 5.000000e-01 : f32
    %71 = vector.broadcast %cst_42 : f32 to vector<8x128xf32>
    %72 = arith.mulf %71, %70 : vector<8x128xf32>
    %73 = math.tanh %72 : vector<8x128xf32>
    %cst_43 = arith.constant 1.000000e+00 : f32
    %74 = vector.broadcast %cst_43 : f32 to vector<8x128xf32>
    %75 = arith.addf %73, %74 : vector<8x128xf32>
    %cst_44 = arith.constant 5.000000e-01 : f32
    %76 = vector.broadcast %cst_44 : f32 to vector<8x128xf32>
    %77 = arith.mulf %76, %75 : vector<8x128xf32>
    %78 = vector.extract_strided_slice %65 {offsets = [0, 128], sizes = [8, 128], strides = [1, 1]} : vector<8x384xf32> to vector<8x128xf32>
    %79 = vector.extract_strided_slice %67 {offsets = [0, 128], sizes = [8, 128], strides = [1, 1]} : vector<8x384xf32> to vector<8x128xf32>
    %80 = arith.addf %78, %79 : vector<8x128xf32>
    %cst_45 = arith.constant 5.000000e-01 : f32
    %81 = vector.broadcast %cst_45 : f32 to vector<8x128xf32>
    %82 = arith.mulf %81, %80 : vector<8x128xf32>
    %83 = math.tanh %82 : vector<8x128xf32>
    %cst_46 = arith.constant 1.000000e+00 : f32
    %84 = vector.broadcast %cst_46 : f32 to vector<8x128xf32>
    %85 = arith.addf %83, %84 : vector<8x128xf32>
    %cst_47 = arith.constant 5.000000e-01 : f32
    %86 = vector.broadcast %cst_47 : f32 to vector<8x128xf32>
    %87 = arith.mulf %86, %85 : vector<8x128xf32>
    %88 = vector.extract_strided_slice %65 {offsets = [0, 256], sizes = [8, 128], strides = [1, 1]} : vector<8x384xf32> to vector<8x128xf32>
    %89 = vector.extract_strided_slice %67 {offsets = [0, 256], sizes = [8, 128], strides = [1, 1]} : vector<8x384xf32> to vector<8x128xf32>
    %90 = arith.addf %89, %20 : vector<8x128xf32>
    %91 = arith.mulf %77, %90 : vector<8x128xf32>
    %92 = arith.addf %88, %91 : vector<8x128xf32>
    %93 = math.tanh %92 : vector<8x128xf32>
    %cst_48 = arith.constant 1.000000e+00 : f32
    %94 = vector.broadcast %cst_48 : f32 to vector<8x128xf32>
    %95 = arith.subf %94, %87 : vector<8x128xf32>
    %96 = arith.mulf %95, %93 : vector<8x128xf32>
    %97 = arith.mulf %87, %62 : vector<8x128xf32>
    %98 = arith.addf %96, %97 : vector<8x128xf32>
    %c2_i32 = arith.constant 2 : i32
    %99 = arith.index_cast %c2_i32 : i32 to index
    %c0_49 = arith.constant 0 : index
    %c0_50 = arith.constant 0 : index
    %100 = vector.load %arg15[%99, %c0_49, %c0_50] : memref<8x8x384xf32, #tpu.memory_space<vmem>>, vector<1x8x384xf32>
    %101 = vector.shape_cast %100 : vector<1x8x384xf32> to vector<8x384xf32>
    %102 = arith.truncf %98 : vector<8x128xf32> to vector<8x128xbf16>
    %cst_51 = arith.constant dense<0.000000e+00> : vector<8x384xf32>
    %103 = tpu.matmul %102, %24, %cst_51 {dimension_numbers = #tpu.dot_dimension_numbers<[1], [0], [0], [1], [0, 0, 1, 1], [], []>} : vector<8x128xbf16>, vector<128x384xbf16>, vector<8x384xf32> -> vector<8x384xf32>
    %104 = vector.extract_strided_slice %101 {offsets = [0, 0], sizes = [8, 128], strides = [1, 1]} : vector<8x384xf32> to vector<8x128xf32>
    %105 = vector.extract_strided_slice %103 {offsets = [0, 0], sizes = [8, 128], strides = [1, 1]} : vector<8x384xf32> to vector<8x128xf32>
    %106 = arith.addf %104, %105 : vector<8x128xf32>
    %cst_52 = arith.constant 5.000000e-01 : f32
    %107 = vector.broadcast %cst_52 : f32 to vector<8x128xf32>
    %108 = arith.mulf %107, %106 : vector<8x128xf32>
    %109 = math.tanh %108 : vector<8x128xf32>
    %cst_53 = arith.constant 1.000000e+00 : f32
    %110 = vector.broadcast %cst_53 : f32 to vector<8x128xf32>
    %111 = arith.addf %109, %110 : vector<8x128xf32>
    %cst_54 = arith.constant 5.000000e-01 : f32
    %112 = vector.broadcast %cst_54 : f32 to vector<8x128xf32>
    %113 = arith.mulf %112, %111 : vector<8x128xf32>
    %114 = vector.extract_strided_slice %101 {offsets = [0, 128], sizes = [8, 128], strides = [1, 1]} : vector<8x384xf32> to vector<8x128xf32>
    %115 = vector.extract_strided_slice %103 {offsets = [0, 128], sizes = [8, 128], strides = [1, 1]} : vector<8x384xf32> to vector<8x128xf32>
    %116 = arith.addf %114, %115 : vector<8x128xf32>
    %cst_55 = arith.constant 5.000000e-01 : f32
    %117 = vector.broadcast %cst_55 : f32 to vector<8x128xf32>
    %118 = arith.mulf %117, %116 : vector<8x128xf32>
    %119 = math.tanh %118 : vector<8x128xf32>
    %cst_56 = arith.constant 1.000000e+00 : f32
    %120 = vector.broadcast %cst_56 : f32 to vector<8x128xf32>
    %121 = arith.addf %119, %120 : vector<8x128xf32>
    %cst_57 = arith.constant 5.000000e-01 : f32
    %122 = vector.broadcast %cst_57 : f32 to vector<8x128xf32>
    %123 = arith.mulf %122, %121 : vector<8x128xf32>
    %124 = vector.extract_strided_slice %101 {offsets = [0, 256], sizes = [8, 128], strides = [1, 1]} : vector<8x384xf32> to vector<8x128xf32>
    %125 = vector.extract_strided_slice %103 {offsets = [0, 256], sizes = [8, 128], strides = [1, 1]} : vector<8x384xf32> to vector<8x128xf32>
    %126 = arith.addf %125, %20 : vector<8x128xf32>
    %127 = arith.mulf %113, %126 : vector<8x128xf32>
    %128 = arith.addf %124, %127 : vector<8x128xf32>
    %129 = math.tanh %128 : vector<8x128xf32>
    %cst_58 = arith.constant 1.000000e+00 : f32
    %130 = vector.broadcast %cst_58 : f32 to vector<8x128xf32>
    %131 = arith.subf %130, %123 : vector<8x128xf32>
    %132 = arith.mulf %131, %129 : vector<8x128xf32>
    %133 = arith.mulf %123, %98 : vector<8x128xf32>
    %134 = arith.addf %132, %133 : vector<8x128xf32>
    %c3_i32 = arith.constant 3 : i32
    %135 = arith.index_cast %c3_i32 : i32 to index
    %c0_59 = arith.constant 0 : index
    %c0_60 = arith.constant 0 : index
    %136 = vector.load %arg15[%135, %c0_59, %c0_60] : memref<8x8x384xf32, #tpu.memory_space<vmem>>, vector<1x8x384xf32>
    %137 = vector.shape_cast %136 : vector<1x8x384xf32> to vector<8x384xf32>
    %138 = arith.truncf %134 : vector<8x128xf32> to vector<8x128xbf16>
    %cst_61 = arith.constant dense<0.000000e+00> : vector<8x384xf32>
    %139 = tpu.matmul %138, %24, %cst_61 {dimension_numbers = #tpu.dot_dimension_numbers<[1], [0], [0], [1], [0, 0, 1, 1], [], []>} : vector<8x128xbf16>, vector<128x384xbf16>, vector<8x384xf32> -> vector<8x384xf32>
    %140 = vector.extract_strided_slice %137 {offsets = [0, 0], sizes = [8, 128], strides = [1, 1]} : vector<8x384xf32> to vector<8x128xf32>
    %141 = vector.extract_strided_slice %139 {offsets = [0, 0], sizes = [8, 128], strides = [1, 1]} : vector<8x384xf32> to vector<8x128xf32>
    %142 = arith.addf %140, %141 : vector<8x128xf32>
    %cst_62 = arith.constant 5.000000e-01 : f32
    %143 = vector.broadcast %cst_62 : f32 to vector<8x128xf32>
    %144 = arith.mulf %143, %142 : vector<8x128xf32>
    %145 = math.tanh %144 : vector<8x128xf32>
    %cst_63 = arith.constant 1.000000e+00 : f32
    %146 = vector.broadcast %cst_63 : f32 to vector<8x128xf32>
    %147 = arith.addf %145, %146 : vector<8x128xf32>
    %cst_64 = arith.constant 5.000000e-01 : f32
    %148 = vector.broadcast %cst_64 : f32 to vector<8x128xf32>
    %149 = arith.mulf %148, %147 : vector<8x128xf32>
    %150 = vector.extract_strided_slice %137 {offsets = [0, 128], sizes = [8, 128], strides = [1, 1]} : vector<8x384xf32> to vector<8x128xf32>
    %151 = vector.extract_strided_slice %139 {offsets = [0, 128], sizes = [8, 128], strides = [1, 1]} : vector<8x384xf32> to vector<8x128xf32>
    %152 = arith.addf %150, %151 : vector<8x128xf32>
    %cst_65 = arith.constant 5.000000e-01 : f32
    %153 = vector.broadcast %cst_65 : f32 to vector<8x128xf32>
    %154 = arith.mulf %153, %152 : vector<8x128xf32>
    %155 = math.tanh %154 : vector<8x128xf32>
    %cst_66 = arith.constant 1.000000e+00 : f32
    %156 = vector.broadcast %cst_66 : f32 to vector<8x128xf32>
    %157 = arith.addf %155, %156 : vector<8x128xf32>
    %cst_67 = arith.constant 5.000000e-01 : f32
    %158 = vector.broadcast %cst_67 : f32 to vector<8x128xf32>
    %159 = arith.mulf %158, %157 : vector<8x128xf32>
    %160 = vector.extract_strided_slice %137 {offsets = [0, 256], sizes = [8, 128], strides = [1, 1]} : vector<8x384xf32> to vector<8x128xf32>
    %161 = vector.extract_strided_slice %139 {offsets = [0, 256], sizes = [8, 128], strides = [1, 1]} : vector<8x384xf32> to vector<8x128xf32>
    %162 = arith.addf %161, %20 : vector<8x128xf32>
    %163 = arith.mulf %149, %162 : vector<8x128xf32>
    %164 = arith.addf %160, %163 : vector<8x128xf32>
    %165 = math.tanh %164 : vector<8x128xf32>
    %cst_68 = arith.constant 1.000000e+00 : f32
    %166 = vector.broadcast %cst_68 : f32 to vector<8x128xf32>
    %167 = arith.subf %166, %159 : vector<8x128xf32>
    %168 = arith.mulf %167, %165 : vector<8x128xf32>
    %169 = arith.mulf %159, %134 : vector<8x128xf32>
    %170 = arith.addf %168, %169 : vector<8x128xf32>
    %c4_i32 = arith.constant 4 : i32
    %171 = arith.index_cast %c4_i32 : i32 to index
    %c0_69 = arith.constant 0 : index
    %c0_70 = arith.constant 0 : index
    %172 = vector.load %arg15[%171, %c0_69, %c0_70] : memref<8x8x384xf32, #tpu.memory_space<vmem>>, vector<1x8x384xf32>
    %173 = vector.shape_cast %172 : vector<1x8x384xf32> to vector<8x384xf32>
    %174 = arith.truncf %170 : vector<8x128xf32> to vector<8x128xbf16>
    %cst_71 = arith.constant dense<0.000000e+00> : vector<8x384xf32>
    %175 = tpu.matmul %174, %24, %cst_71 {dimension_numbers = #tpu.dot_dimension_numbers<[1], [0], [0], [1], [0, 0, 1, 1], [], []>} : vector<8x128xbf16>, vector<128x384xbf16>, vector<8x384xf32> -> vector<8x384xf32>
    %176 = vector.extract_strided_slice %173 {offsets = [0, 0], sizes = [8, 128], strides = [1, 1]} : vector<8x384xf32> to vector<8x128xf32>
    %177 = vector.extract_strided_slice %175 {offsets = [0, 0], sizes = [8, 128], strides = [1, 1]} : vector<8x384xf32> to vector<8x128xf32>
    %178 = arith.addf %176, %177 : vector<8x128xf32>
    %cst_72 = arith.constant 5.000000e-01 : f32
    %179 = vector.broadcast %cst_72 : f32 to vector<8x128xf32>
    %180 = arith.mulf %179, %178 : vector<8x128xf32>
    %181 = math.tanh %180 : vector<8x128xf32>
    %cst_73 = arith.constant 1.000000e+00 : f32
    %182 = vector.broadcast %cst_73 : f32 to vector<8x128xf32>
    %183 = arith.addf %181, %182 : vector<8x128xf32>
    %cst_74 = arith.constant 5.000000e-01 : f32
    %184 = vector.broadcast %cst_74 : f32 to vector<8x128xf32>
    %185 = arith.mulf %184, %183 : vector<8x128xf32>
    %186 = vector.extract_strided_slice %173 {offsets = [0, 128], sizes = [8, 128], strides = [1, 1]} : vector<8x384xf32> to vector<8x128xf32>
    %187 = vector.extract_strided_slice %175 {offsets = [0, 128], sizes = [8, 128], strides = [1, 1]} : vector<8x384xf32> to vector<8x128xf32>
    %188 = arith.addf %186, %187 : vector<8x128xf32>
    %cst_75 = arith.constant 5.000000e-01 : f32
    %189 = vector.broadcast %cst_75 : f32 to vector<8x128xf32>
    %190 = arith.mulf %189, %188 : vector<8x128xf32>
    %191 = math.tanh %190 : vector<8x128xf32>
    %cst_76 = arith.constant 1.000000e+00 : f32
    %192 = vector.broadcast %cst_76 : f32 to vector<8x128xf32>
    %193 = arith.addf %191, %192 : vector<8x128xf32>
    %cst_77 = arith.constant 5.000000e-01 : f32
    %194 = vector.broadcast %cst_77 : f32 to vector<8x128xf32>
    %195 = arith.mulf %194, %193 : vector<8x128xf32>
    %196 = vector.extract_strided_slice %173 {offsets = [0, 256], sizes = [8, 128], strides = [1, 1]} : vector<8x384xf32> to vector<8x128xf32>
    %197 = vector.extract_strided_slice %175 {offsets = [0, 256], sizes = [8, 128], strides = [1, 1]} : vector<8x384xf32> to vector<8x128xf32>
    %198 = arith.addf %197, %20 : vector<8x128xf32>
    %199 = arith.mulf %185, %198 : vector<8x128xf32>
    %200 = arith.addf %196, %199 : vector<8x128xf32>
    %201 = math.tanh %200 : vector<8x128xf32>
    %cst_78 = arith.constant 1.000000e+00 : f32
    %202 = vector.broadcast %cst_78 : f32 to vector<8x128xf32>
    %203 = arith.subf %202, %195 : vector<8x128xf32>
    %204 = arith.mulf %203, %201 : vector<8x128xf32>
    %205 = arith.mulf %195, %170 : vector<8x128xf32>
    %206 = arith.addf %204, %205 : vector<8x128xf32>
    %c5_i32 = arith.constant 5 : i32
    %207 = arith.index_cast %c5_i32 : i32 to index
    %c0_79 = arith.constant 0 : index
    %c0_80 = arith.constant 0 : index
    %208 = vector.load %arg15[%207, %c0_79, %c0_80] : memref<8x8x384xf32, #tpu.memory_space<vmem>>, vector<1x8x384xf32>
    %209 = vector.shape_cast %208 : vector<1x8x384xf32> to vector<8x384xf32>
    %210 = arith.truncf %206 : vector<8x128xf32> to vector<8x128xbf16>
    %cst_81 = arith.constant dense<0.000000e+00> : vector<8x384xf32>
    %211 = tpu.matmul %210, %24, %cst_81 {dimension_numbers = #tpu.dot_dimension_numbers<[1], [0], [0], [1], [0, 0, 1, 1], [], []>} : vector<8x128xbf16>, vector<128x384xbf16>, vector<8x384xf32> -> vector<8x384xf32>
    %212 = vector.extract_strided_slice %209 {offsets = [0, 0], sizes = [8, 128], strides = [1, 1]} : vector<8x384xf32> to vector<8x128xf32>
    %213 = vector.extract_strided_slice %211 {offsets = [0, 0], sizes = [8, 128], strides = [1, 1]} : vector<8x384xf32> to vector<8x128xf32>
    %214 = arith.addf %212, %213 : vector<8x128xf32>
    %cst_82 = arith.constant 5.000000e-01 : f32
    %215 = vector.broadcast %cst_82 : f32 to vector<8x128xf32>
    %216 = arith.mulf %215, %214 : vector<8x128xf32>
    %217 = math.tanh %216 : vector<8x128xf32>
    %cst_83 = arith.constant 1.000000e+00 : f32
    %218 = vector.broadcast %cst_83 : f32 to vector<8x128xf32>
    %219 = arith.addf %217, %218 : vector<8x128xf32>
    %cst_84 = arith.constant 5.000000e-01 : f32
    %220 = vector.broadcast %cst_84 : f32 to vector<8x128xf32>
    %221 = arith.mulf %220, %219 : vector<8x128xf32>
    %222 = vector.extract_strided_slice %209 {offsets = [0, 128], sizes = [8, 128], strides = [1, 1]} : vector<8x384xf32> to vector<8x128xf32>
    %223 = vector.extract_strided_slice %211 {offsets = [0, 128], sizes = [8, 128], strides = [1, 1]} : vector<8x384xf32> to vector<8x128xf32>
    %224 = arith.addf %222, %223 : vector<8x128xf32>
    %cst_85 = arith.constant 5.000000e-01 : f32
    %225 = vector.broadcast %cst_85 : f32 to vector<8x128xf32>
    %226 = arith.mulf %225, %224 : vector<8x128xf32>
    %227 = math.tanh %226 : vector<8x128xf32>
    %cst_86 = arith.constant 1.000000e+00 : f32
    %228 = vector.broadcast %cst_86 : f32 to vector<8x128xf32>
    %229 = arith.addf %227, %228 : vector<8x128xf32>
    %cst_87 = arith.constant 5.000000e-01 : f32
    %230 = vector.broadcast %cst_87 : f32 to vector<8x128xf32>
    %231 = arith.mulf %230, %229 : vector<8x128xf32>
    %232 = vector.extract_strided_slice %209 {offsets = [0, 256], sizes = [8, 128], strides = [1, 1]} : vector<8x384xf32> to vector<8x128xf32>
    %233 = vector.extract_strided_slice %211 {offsets = [0, 256], sizes = [8, 128], strides = [1, 1]} : vector<8x384xf32> to vector<8x128xf32>
    %234 = arith.addf %233, %20 : vector<8x128xf32>
    %235 = arith.mulf %221, %234 : vector<8x128xf32>
    %236 = arith.addf %232, %235 : vector<8x128xf32>
    %237 = math.tanh %236 : vector<8x128xf32>
    %cst_88 = arith.constant 1.000000e+00 : f32
    %238 = vector.broadcast %cst_88 : f32 to vector<8x128xf32>
    %239 = arith.subf %238, %231 : vector<8x128xf32>
    %240 = arith.mulf %239, %237 : vector<8x128xf32>
    %241 = arith.mulf %231, %206 : vector<8x128xf32>
    %242 = arith.addf %240, %241 : vector<8x128xf32>
    %c6_i32 = arith.constant 6 : i32
    %243 = arith.index_cast %c6_i32 : i32 to index
    %c0_89 = arith.constant 0 : index
    %c0_90 = arith.constant 0 : index
    %244 = vector.load %arg15[%243, %c0_89, %c0_90] : memref<8x8x384xf32, #tpu.memory_space<vmem>>, vector<1x8x384xf32>
    %245 = vector.shape_cast %244 : vector<1x8x384xf32> to vector<8x384xf32>
    %246 = arith.truncf %242 : vector<8x128xf32> to vector<8x128xbf16>
    %cst_91 = arith.constant dense<0.000000e+00> : vector<8x384xf32>
    %247 = tpu.matmul %246, %24, %cst_91 {dimension_numbers = #tpu.dot_dimension_numbers<[1], [0], [0], [1], [0, 0, 1, 1], [], []>} : vector<8x128xbf16>, vector<128x384xbf16>, vector<8x384xf32> -> vector<8x384xf32>
    %248 = vector.extract_strided_slice %245 {offsets = [0, 0], sizes = [8, 128], strides = [1, 1]} : vector<8x384xf32> to vector<8x128xf32>
    %249 = vector.extract_strided_slice %247 {offsets = [0, 0], sizes = [8, 128], strides = [1, 1]} : vector<8x384xf32> to vector<8x128xf32>
    %250 = arith.addf %248, %249 : vector<8x128xf32>
    %cst_92 = arith.constant 5.000000e-01 : f32
    %251 = vector.broadcast %cst_92 : f32 to vector<8x128xf32>
    %252 = arith.mulf %251, %250 : vector<8x128xf32>
    %253 = math.tanh %252 : vector<8x128xf32>
    %cst_93 = arith.constant 1.000000e+00 : f32
    %254 = vector.broadcast %cst_93 : f32 to vector<8x128xf32>
    %255 = arith.addf %253, %254 : vector<8x128xf32>
    %cst_94 = arith.constant 5.000000e-01 : f32
    %256 = vector.broadcast %cst_94 : f32 to vector<8x128xf32>
    %257 = arith.mulf %256, %255 : vector<8x128xf32>
    %258 = vector.extract_strided_slice %245 {offsets = [0, 128], sizes = [8, 128], strides = [1, 1]} : vector<8x384xf32> to vector<8x128xf32>
    %259 = vector.extract_strided_slice %247 {offsets = [0, 128], sizes = [8, 128], strides = [1, 1]} : vector<8x384xf32> to vector<8x128xf32>
    %260 = arith.addf %258, %259 : vector<8x128xf32>
    %cst_95 = arith.constant 5.000000e-01 : f32
    %261 = vector.broadcast %cst_95 : f32 to vector<8x128xf32>
    %262 = arith.mulf %261, %260 : vector<8x128xf32>
    %263 = math.tanh %262 : vector<8x128xf32>
    %cst_96 = arith.constant 1.000000e+00 : f32
    %264 = vector.broadcast %cst_96 : f32 to vector<8x128xf32>
    %265 = arith.addf %263, %264 : vector<8x128xf32>
    %cst_97 = arith.constant 5.000000e-01 : f32
    %266 = vector.broadcast %cst_97 : f32 to vector<8x128xf32>
    %267 = arith.mulf %266, %265 : vector<8x128xf32>
    %268 = vector.extract_strided_slice %245 {offsets = [0, 256], sizes = [8, 128], strides = [1, 1]} : vector<8x384xf32> to vector<8x128xf32>
    %269 = vector.extract_strided_slice %247 {offsets = [0, 256], sizes = [8, 128], strides = [1, 1]} : vector<8x384xf32> to vector<8x128xf32>
    %270 = arith.addf %269, %20 : vector<8x128xf32>
    %271 = arith.mulf %257, %270 : vector<8x128xf32>
    %272 = arith.addf %268, %271 : vector<8x128xf32>
    %273 = math.tanh %272 : vector<8x128xf32>
    %cst_98 = arith.constant 1.000000e+00 : f32
    %274 = vector.broadcast %cst_98 : f32 to vector<8x128xf32>
    %275 = arith.subf %274, %267 : vector<8x128xf32>
    %276 = arith.mulf %275, %273 : vector<8x128xf32>
    %277 = arith.mulf %267, %242 : vector<8x128xf32>
    %278 = arith.addf %276, %277 : vector<8x128xf32>
    %c7_i32 = arith.constant 7 : i32
    %279 = arith.index_cast %c7_i32 : i32 to index
    %c0_99 = arith.constant 0 : index
    %c0_100 = arith.constant 0 : index
    %280 = vector.load %arg15[%279, %c0_99, %c0_100] : memref<8x8x384xf32, #tpu.memory_space<vmem>>, vector<1x8x384xf32>
    %281 = vector.shape_cast %280 : vector<1x8x384xf32> to vector<8x384xf32>
    %282 = arith.truncf %278 : vector<8x128xf32> to vector<8x128xbf16>
    %cst_101 = arith.constant dense<0.000000e+00> : vector<8x384xf32>
    %283 = tpu.matmul %282, %24, %cst_101 {dimension_numbers = #tpu.dot_dimension_numbers<[1], [0], [0], [1], [0, 0, 1, 1], [], []>} : vector<8x128xbf16>, vector<128x384xbf16>, vector<8x384xf32> -> vector<8x384xf32>
    %284 = vector.extract_strided_slice %281 {offsets = [0, 0], sizes = [8, 128], strides = [1, 1]} : vector<8x384xf32> to vector<8x128xf32>
    %285 = vector.extract_strided_slice %283 {offsets = [0, 0], sizes = [8, 128], strides = [1, 1]} : vector<8x384xf32> to vector<8x128xf32>
    %286 = arith.addf %284, %285 : vector<8x128xf32>
    %cst_102 = arith.constant 5.000000e-01 : f32
    %287 = vector.broadcast %cst_102 : f32 to vector<8x128xf32>
    %288 = arith.mulf %287, %286 : vector<8x128xf32>
    %289 = math.tanh %288 : vector<8x128xf32>
    %cst_103 = arith.constant 1.000000e+00 : f32
    %290 = vector.broadcast %cst_103 : f32 to vector<8x128xf32>
    %291 = arith.addf %289, %290 : vector<8x128xf32>
    %cst_104 = arith.constant 5.000000e-01 : f32
    %292 = vector.broadcast %cst_104 : f32 to vector<8x128xf32>
    %293 = arith.mulf %292, %291 : vector<8x128xf32>
    %294 = vector.extract_strided_slice %281 {offsets = [0, 128], sizes = [8, 128], strides = [1, 1]} : vector<8x384xf32> to vector<8x128xf32>
    %295 = vector.extract_strided_slice %283 {offsets = [0, 128], sizes = [8, 128], strides = [1, 1]} : vector<8x384xf32> to vector<8x128xf32>
    %296 = arith.addf %294, %295 : vector<8x128xf32>
    %cst_105 = arith.constant 5.000000e-01 : f32
    %297 = vector.broadcast %cst_105 : f32 to vector<8x128xf32>
    %298 = arith.mulf %297, %296 : vector<8x128xf32>
    %299 = math.tanh %298 : vector<8x128xf32>
    %cst_106 = arith.constant 1.000000e+00 : f32
    %300 = vector.broadcast %cst_106 : f32 to vector<8x128xf32>
    %301 = arith.addf %299, %300 : vector<8x128xf32>
    %cst_107 = arith.constant 5.000000e-01 : f32
    %302 = vector.broadcast %cst_107 : f32 to vector<8x128xf32>
    %303 = arith.mulf %302, %301 : vector<8x128xf32>
    %304 = vector.extract_strided_slice %281 {offsets = [0, 256], sizes = [8, 128], strides = [1, 1]} : vector<8x384xf32> to vector<8x128xf32>
    %305 = vector.extract_strided_slice %283 {offsets = [0, 256], sizes = [8, 128], strides = [1, 1]} : vector<8x384xf32> to vector<8x128xf32>
    %306 = arith.addf %305, %20 : vector<8x128xf32>
    %307 = arith.mulf %293, %306 : vector<8x128xf32>
    %308 = arith.addf %304, %307 : vector<8x128xf32>
    %309 = math.tanh %308 : vector<8x128xf32>
    %cst_108 = arith.constant 1.000000e+00 : f32
    %310 = vector.broadcast %cst_108 : f32 to vector<8x128xf32>
    %311 = arith.subf %310, %303 : vector<8x128xf32>
    %312 = arith.mulf %311, %309 : vector<8x128xf32>
    %313 = arith.mulf %303, %278 : vector<8x128xf32>
    %314 = arith.addf %312, %313 : vector<8x128xf32>
    %c8_i32 = arith.constant 8 : i32
    %c0_i32_109 = arith.constant 0 : i32
    %315 = arith.index_cast %c0_i32_109 : i32 to index
    %c0_110 = arith.constant 0 : index
    %c0_111 = arith.constant 0 : index
    %316 = vector.load %arg16[%315, %c0_110, %c0_111] : memref<8x8x384xf32, #tpu.memory_space<vmem>>, vector<1x8x384xf32>
    %317 = vector.shape_cast %316 : vector<1x8x384xf32> to vector<8x384xf32>
    %318 = arith.truncf %314 : vector<8x128xf32> to vector<8x128xbf16>
    %cst_112 = arith.constant dense<0.000000e+00> : vector<8x384xf32>
    %319 = tpu.matmul %318, %25, %cst_112 {dimension_numbers = #tpu.dot_dimension_numbers<[1], [0], [0], [1], [0, 0, 1, 1], [], []>} : vector<8x128xbf16>, vector<128x384xbf16>, vector<8x384xf32> -> vector<8x384xf32>
    %320 = vector.extract_strided_slice %317 {offsets = [0, 0], sizes = [8, 128], strides = [1, 1]} : vector<8x384xf32> to vector<8x128xf32>
    %321 = vector.extract_strided_slice %319 {offsets = [0, 0], sizes = [8, 128], strides = [1, 1]} : vector<8x384xf32> to vector<8x128xf32>
    %322 = arith.addf %320, %321 : vector<8x128xf32>
    %cst_113 = arith.constant 5.000000e-01 : f32
    %323 = vector.broadcast %cst_113 : f32 to vector<8x128xf32>
    %324 = arith.mulf %323, %322 : vector<8x128xf32>
    %325 = math.tanh %324 : vector<8x128xf32>
    %cst_114 = arith.constant 1.000000e+00 : f32
    %326 = vector.broadcast %cst_114 : f32 to vector<8x128xf32>
    %327 = arith.addf %325, %326 : vector<8x128xf32>
    %cst_115 = arith.constant 5.000000e-01 : f32
    %328 = vector.broadcast %cst_115 : f32 to vector<8x128xf32>
    %329 = arith.mulf %328, %327 : vector<8x128xf32>
    %330 = vector.extract_strided_slice %317 {offsets = [0, 128], sizes = [8, 128], strides = [1, 1]} : vector<8x384xf32> to vector<8x128xf32>
    %331 = vector.extract_strided_slice %319 {offsets = [0, 128], sizes = [8, 128], strides = [1, 1]} : vector<8x384xf32> to vector<8x128xf32>
    %332 = arith.addf %330, %331 : vector<8x128xf32>
    %cst_116 = arith.constant 5.000000e-01 : f32
    %333 = vector.broadcast %cst_116 : f32 to vector<8x128xf32>
    %334 = arith.mulf %333, %332 : vector<8x128xf32>
    %335 = math.tanh %334 : vector<8x128xf32>
    %cst_117 = arith.constant 1.000000e+00 : f32
    %336 = vector.broadcast %cst_117 : f32 to vector<8x128xf32>
    %337 = arith.addf %335, %336 : vector<8x128xf32>
    %cst_118 = arith.constant 5.000000e-01 : f32
    %338 = vector.broadcast %cst_118 : f32 to vector<8x128xf32>
    %339 = arith.mulf %338, %337 : vector<8x128xf32>
    %340 = vector.extract_strided_slice %317 {offsets = [0, 256], sizes = [8, 128], strides = [1, 1]} : vector<8x384xf32> to vector<8x128xf32>
    %341 = vector.extract_strided_slice %319 {offsets = [0, 256], sizes = [8, 128], strides = [1, 1]} : vector<8x384xf32> to vector<8x128xf32>
    %342 = arith.addf %341, %23 : vector<8x128xf32>
    %343 = arith.mulf %329, %342 : vector<8x128xf32>
    %344 = arith.addf %340, %343 : vector<8x128xf32>
    %345 = math.tanh %344 : vector<8x128xf32>
    %cst_119 = arith.constant 1.000000e+00 : f32
    %346 = vector.broadcast %cst_119 : f32 to vector<8x128xf32>
    %347 = arith.subf %346, %339 : vector<8x128xf32>
    %348 = arith.mulf %347, %345 : vector<8x128xf32>
    %349 = arith.mulf %339, %314 : vector<8x128xf32>
    %350 = arith.addf %348, %349 : vector<8x128xf32>
    %351 = arith.index_cast %c0_i32_109 : i32 to index
    %c0_120 = arith.constant 0 : index
    %c0_121 = arith.constant 0 : index
    %352 = vector.load %arg17[%351, %c0_120, %c0_121] : memref<8x8x128xf32, #tpu.memory_space<vmem>>, vector<1x8x128xf32>
    %353 = vector.shape_cast %352 : vector<1x8x128xf32> to vector<8x128xf32>
    %354 = vector.shape_cast %350 : vector<8x128xf32> to vector<1x8x128xf32>
    tpu.vector_store %arg17[%351, %c0_120, %c0_121], %354 {strides = array<i32>} : memref<8x8x128xf32, #tpu.memory_space<vmem>>, vector<1x8x128xf32>,
    %c1_i32_122 = arith.constant 1 : i32
    %355 = arith.index_cast %c1_i32_122 : i32 to index
    %c0_123 = arith.constant 0 : index
    %c0_124 = arith.constant 0 : index
    %356 = vector.load %arg16[%355, %c0_123, %c0_124] : memref<8x8x384xf32, #tpu.memory_space<vmem>>, vector<1x8x384xf32>
    %357 = vector.shape_cast %356 : vector<1x8x384xf32> to vector<8x384xf32>
    %358 = arith.truncf %350 : vector<8x128xf32> to vector<8x128xbf16>
    %cst_125 = arith.constant dense<0.000000e+00> : vector<8x384xf32>
    %359 = tpu.matmul %358, %25, %cst_125 {dimension_numbers = #tpu.dot_dimension_numbers<[1], [0], [0], [1], [0, 0, 1, 1], [], []>} : vector<8x128xbf16>, vector<128x384xbf16>, vector<8x384xf32> -> vector<8x384xf32>
    %360 = vector.extract_strided_slice %357 {offsets = [0, 0], sizes = [8, 128], strides = [1, 1]} : vector<8x384xf32> to vector<8x128xf32>
    %361 = vector.extract_strided_slice %359 {offsets = [0, 0], sizes = [8, 128], strides = [1, 1]} : vector<8x384xf32> to vector<8x128xf32>
    %362 = arith.addf %360, %361 : vector<8x128xf32>
    %cst_126 = arith.constant 5.000000e-01 : f32
    %363 = vector.broadcast %cst_126 : f32 to vector<8x128xf32>
    %364 = arith.mulf %363, %362 : vector<8x128xf32>
    %365 = math.tanh %364 : vector<8x128xf32>
    %cst_127 = arith.constant 1.000000e+00 : f32
    %366 = vector.broadcast %cst_127 : f32 to vector<8x128xf32>
    %367 = arith.addf %365, %366 : vector<8x128xf32>
    %cst_128 = arith.constant 5.000000e-01 : f32
    %368 = vector.broadcast %cst_128 : f32 to vector<8x128xf32>
    %369 = arith.mulf %368, %367 : vector<8x128xf32>
    %370 = vector.extract_strided_slice %357 {offsets = [0, 128], sizes = [8, 128], strides = [1, 1]} : vector<8x384xf32> to vector<8x128xf32>
    %371 = vector.extract_strided_slice %359 {offsets = [0, 128], sizes = [8, 128], strides = [1, 1]} : vector<8x384xf32> to vector<8x128xf32>
    %372 = arith.addf %370, %371 : vector<8x128xf32>
    %cst_129 = arith.constant 5.000000e-01 : f32
    %373 = vector.broadcast %cst_129 : f32 to vector<8x128xf32>
    %374 = arith.mulf %373, %372 : vector<8x128xf32>
    %375 = math.tanh %374 : vector<8x128xf32>
    %cst_130 = arith.constant 1.000000e+00 : f32
    %376 = vector.broadcast %cst_130 : f32 to vector<8x128xf32>
    %377 = arith.addf %375, %376 : vector<8x128xf32>
    %cst_131 = arith.constant 5.000000e-01 : f32
    %378 = vector.broadcast %cst_131 : f32 to vector<8x128xf32>
    %379 = arith.mulf %378, %377 : vector<8x128xf32>
    %380 = vector.extract_strided_slice %357 {offsets = [0, 256], sizes = [8, 128], strides = [1, 1]} : vector<8x384xf32> to vector<8x128xf32>
    %381 = vector.extract_strided_slice %359 {offsets = [0, 256], sizes = [8, 128], strides = [1, 1]} : vector<8x384xf32> to vector<8x128xf32>
    %382 = arith.addf %381, %23 : vector<8x128xf32>
    %383 = arith.mulf %369, %382 : vector<8x128xf32>
    %384 = arith.addf %380, %383 : vector<8x128xf32>
    %385 = math.tanh %384 : vector<8x128xf32>
    %cst_132 = arith.constant 1.000000e+00 : f32
    %386 = vector.broadcast %cst_132 : f32 to vector<8x128xf32>
    %387 = arith.subf %386, %379 : vector<8x128xf32>
    %388 = arith.mulf %387, %385 : vector<8x128xf32>
    %389 = arith.mulf %379, %350 : vector<8x128xf32>
    %390 = arith.addf %388, %389 : vector<8x128xf32>
    %391 = arith.index_cast %c1_i32_122 : i32 to index
    %c0_133 = arith.constant 0 : index
    %c0_134 = arith.constant 0 : index
    %392 = vector.load %arg17[%391, %c0_133, %c0_134] : memref<8x8x128xf32, #tpu.memory_space<vmem>>, vector<1x8x128xf32>
    %393 = vector.shape_cast %392 : vector<1x8x128xf32> to vector<8x128xf32>
    %394 = vector.shape_cast %390 : vector<8x128xf32> to vector<1x8x128xf32>
    tpu.vector_store %arg17[%391, %c0_133, %c0_134], %394 {strides = array<i32>} : memref<8x8x128xf32, #tpu.memory_space<vmem>>, vector<1x8x128xf32>,
    %c2_i32_135 = arith.constant 2 : i32
    %395 = arith.index_cast %c2_i32_135 : i32 to index
    %c0_136 = arith.constant 0 : index
    %c0_137 = arith.constant 0 : index
    %396 = vector.load %arg16[%395, %c0_136, %c0_137] : memref<8x8x384xf32, #tpu.memory_space<vmem>>, vector<1x8x384xf32>
    %397 = vector.shape_cast %396 : vector<1x8x384xf32> to vector<8x384xf32>
    %398 = arith.truncf %390 : vector<8x128xf32> to vector<8x128xbf16>
    %cst_138 = arith.constant dense<0.000000e+00> : vector<8x384xf32>
    %399 = tpu.matmul %398, %25, %cst_138 {dimension_numbers = #tpu.dot_dimension_numbers<[1], [0], [0], [1], [0, 0, 1, 1], [], []>} : vector<8x128xbf16>, vector<128x384xbf16>, vector<8x384xf32> -> vector<8x384xf32>
    %400 = vector.extract_strided_slice %397 {offsets = [0, 0], sizes = [8, 128], strides = [1, 1]} : vector<8x384xf32> to vector<8x128xf32>
    %401 = vector.extract_strided_slice %399 {offsets = [0, 0], sizes = [8, 128], strides = [1, 1]} : vector<8x384xf32> to vector<8x128xf32>
    %402 = arith.addf %400, %401 : vector<8x128xf32>
    %cst_139 = arith.constant 5.000000e-01 : f32
    %403 = vector.broadcast %cst_139 : f32 to vector<8x128xf32>
    %404 = arith.mulf %403, %402 : vector<8x128xf32>
    %405 = math.tanh %404 : vector<8x128xf32>
    %cst_140 = arith.constant 1.000000e+00 : f32
    %406 = vector.broadcast %cst_140 : f32 to vector<8x128xf32>
    %407 = arith.addf %405, %406 : vector<8x128xf32>
    %cst_141 = arith.constant 5.000000e-01 : f32
    %408 = vector.broadcast %cst_141 : f32 to vector<8x128xf32>
    %409 = arith.mulf %408, %407 : vector<8x128xf32>
    %410 = vector.extract_strided_slice %397 {offsets = [0, 128], sizes = [8, 128], strides = [1, 1]} : vector<8x384xf32> to vector<8x128xf32>
    %411 = vector.extract_strided_slice %399 {offsets = [0, 128], sizes = [8, 128], strides = [1, 1]} : vector<8x384xf32> to vector<8x128xf32>
    %412 = arith.addf %410, %411 : vector<8x128xf32>
    %cst_142 = arith.constant 5.000000e-01 : f32
    %413 = vector.broadcast %cst_142 : f32 to vector<8x128xf32>
    %414 = arith.mulf %413, %412 : vector<8x128xf32>
    %415 = math.tanh %414 : vector<8x128xf32>
    %cst_143 = arith.constant 1.000000e+00 : f32
    %416 = vector.broadcast %cst_143 : f32 to vector<8x128xf32>
    %417 = arith.addf %415, %416 : vector<8x128xf32>
    %cst_144 = arith.constant 5.000000e-01 : f32
    %418 = vector.broadcast %cst_144 : f32 to vector<8x128xf32>
    %419 = arith.mulf %418, %417 : vector<8x128xf32>
    %420 = vector.extract_strided_slice %397 {offsets = [0, 256], sizes = [8, 128], strides = [1, 1]} : vector<8x384xf32> to vector<8x128xf32>
    %421 = vector.extract_strided_slice %399 {offsets = [0, 256], sizes = [8, 128], strides = [1, 1]} : vector<8x384xf32> to vector<8x128xf32>
    %422 = arith.addf %421, %23 : vector<8x128xf32>
    %423 = arith.mulf %409, %422 : vector<8x128xf32>
    %424 = arith.addf %420, %423 : vector<8x128xf32>
    %425 = math.tanh %424 : vector<8x128xf32>
    %cst_145 = arith.constant 1.000000e+00 : f32
    %426 = vector.broadcast %cst_145 : f32 to vector<8x128xf32>
    %427 = arith.subf %426, %419 : vector<8x128xf32>
    %428 = arith.mulf %427, %425 : vector<8x128xf32>
    %429 = arith.mulf %419, %390 : vector<8x128xf32>
    %430 = arith.addf %428, %429 : vector<8x128xf32>
    %431 = arith.index_cast %c2_i32_135 : i32 to index
    %c0_146 = arith.constant 0 : index
    %c0_147 = arith.constant 0 : index
    %432 = vector.load %arg17[%431, %c0_146, %c0_147] : memref<8x8x128xf32, #tpu.memory_space<vmem>>, vector<1x8x128xf32>
    %433 = vector.shape_cast %432 : vector<1x8x128xf32> to vector<8x128xf32>
    %434 = vector.shape_cast %430 : vector<8x128xf32> to vector<1x8x128xf32>
    tpu.vector_store %arg17[%431, %c0_146, %c0_147], %434 {strides = array<i32>} : memref<8x8x128xf32, #tpu.memory_space<vmem>>, vector<1x8x128xf32>,
    %c3_i32_148 = arith.constant 3 : i32
    %435 = arith.index_cast %c3_i32_148 : i32 to index
    %c0_149 = arith.constant 0 : index
    %c0_150 = arith.constant 0 : index
    %436 = vector.load %arg16[%435, %c0_149, %c0_150] : memref<8x8x384xf32, #tpu.memory_space<vmem>>, vector<1x8x384xf32>
    %437 = vector.shape_cast %436 : vector<1x8x384xf32> to vector<8x384xf32>
    %438 = arith.truncf %430 : vector<8x128xf32> to vector<8x128xbf16>
    %cst_151 = arith.constant dense<0.000000e+00> : vector<8x384xf32>
    %439 = tpu.matmul %438, %25, %cst_151 {dimension_numbers = #tpu.dot_dimension_numbers<[1], [0], [0], [1], [0, 0, 1, 1], [], []>} : vector<8x128xbf16>, vector<128x384xbf16>, vector<8x384xf32> -> vector<8x384xf32>
    %440 = vector.extract_strided_slice %437 {offsets = [0, 0], sizes = [8, 128], strides = [1, 1]} : vector<8x384xf32> to vector<8x128xf32>
    %441 = vector.extract_strided_slice %439 {offsets = [0, 0], sizes = [8, 128], strides = [1, 1]} : vector<8x384xf32> to vector<8x128xf32>
    %442 = arith.addf %440, %441 : vector<8x128xf32>
    %cst_152 = arith.constant 5.000000e-01 : f32
    %443 = vector.broadcast %cst_152 : f32 to vector<8x128xf32>
    %444 = arith.mulf %443, %442 : vector<8x128xf32>
    %445 = math.tanh %444 : vector<8x128xf32>
    %cst_153 = arith.constant 1.000000e+00 : f32
    %446 = vector.broadcast %cst_153 : f32 to vector<8x128xf32>
    %447 = arith.addf %445, %446 : vector<8x128xf32>
    %cst_154 = arith.constant 5.000000e-01 : f32
    %448 = vector.broadcast %cst_154 : f32 to vector<8x128xf32>
    %449 = arith.mulf %448, %447 : vector<8x128xf32>
    %450 = vector.extract_strided_slice %437 {offsets = [0, 128], sizes = [8, 128], strides = [1, 1]} : vector<8x384xf32> to vector<8x128xf32>
    %451 = vector.extract_strided_slice %439 {offsets = [0, 128], sizes = [8, 128], strides = [1, 1]} : vector<8x384xf32> to vector<8x128xf32>
    %452 = arith.addf %450, %451 : vector<8x128xf32>
    %cst_155 = arith.constant 5.000000e-01 : f32
    %453 = vector.broadcast %cst_155 : f32 to vector<8x128xf32>
    %454 = arith.mulf %453, %452 : vector<8x128xf32>
    %455 = math.tanh %454 : vector<8x128xf32>
    %cst_156 = arith.constant 1.000000e+00 : f32
    %456 = vector.broadcast %cst_156 : f32 to vector<8x128xf32>
    %457 = arith.addf %455, %456 : vector<8x128xf32>
    %cst_157 = arith.constant 5.000000e-01 : f32
    %458 = vector.broadcast %cst_157 : f32 to vector<8x128xf32>
    %459 = arith.mulf %458, %457 : vector<8x128xf32>
    %460 = vector.extract_strided_slice %437 {offsets = [0, 256], sizes = [8, 128], strides = [1, 1]} : vector<8x384xf32> to vector<8x128xf32>
    %461 = vector.extract_strided_slice %439 {offsets = [0, 256], sizes = [8, 128], strides = [1, 1]} : vector<8x384xf32> to vector<8x128xf32>
    %462 = arith.addf %461, %23 : vector<8x128xf32>
    %463 = arith.mulf %449, %462 : vector<8x128xf32>
    %464 = arith.addf %460, %463 : vector<8x128xf32>
    %465 = math.tanh %464 : vector<8x128xf32>
    %cst_158 = arith.constant 1.000000e+00 : f32
    %466 = vector.broadcast %cst_158 : f32 to vector<8x128xf32>
    %467 = arith.subf %466, %459 : vector<8x128xf32>
    %468 = arith.mulf %467, %465 : vector<8x128xf32>
    %469 = arith.mulf %459, %430 : vector<8x128xf32>
    %470 = arith.addf %468, %469 : vector<8x128xf32>
    %471 = arith.index_cast %c3_i32_148 : i32 to index
    %c0_159 = arith.constant 0 : index
    %c0_160 = arith.constant 0 : index
    %472 = vector.load %arg17[%471, %c0_159, %c0_160] : memref<8x8x128xf32, #tpu.memory_space<vmem>>, vector<1x8x128xf32>
    %473 = vector.shape_cast %472 : vector<1x8x128xf32> to vector<8x128xf32>
    %474 = vector.shape_cast %470 : vector<8x128xf32> to vector<1x8x128xf32>
    tpu.vector_store %arg17[%471, %c0_159, %c0_160], %474 {strides = array<i32>} : memref<8x8x128xf32, #tpu.memory_space<vmem>>, vector<1x8x128xf32>,
    %c4_i32_161 = arith.constant 4 : i32
    %475 = arith.index_cast %c4_i32_161 : i32 to index
    %c0_162 = arith.constant 0 : index
    %c0_163 = arith.constant 0 : index
    %476 = vector.load %arg16[%475, %c0_162, %c0_163] : memref<8x8x384xf32, #tpu.memory_space<vmem>>, vector<1x8x384xf32>
    %477 = vector.shape_cast %476 : vector<1x8x384xf32> to vector<8x384xf32>
    %478 = arith.truncf %470 : vector<8x128xf32> to vector<8x128xbf16>
    %cst_164 = arith.constant dense<0.000000e+00> : vector<8x384xf32>
    %479 = tpu.matmul %478, %25, %cst_164 {dimension_numbers = #tpu.dot_dimension_numbers<[1], [0], [0], [1], [0, 0, 1, 1], [], []>} : vector<8x128xbf16>, vector<128x384xbf16>, vector<8x384xf32> -> vector<8x384xf32>
    %480 = vector.extract_strided_slice %477 {offsets = [0, 0], sizes = [8, 128], strides = [1, 1]} : vector<8x384xf32> to vector<8x128xf32>
    %481 = vector.extract_strided_slice %479 {offsets = [0, 0], sizes = [8, 128], strides = [1, 1]} : vector<8x384xf32> to vector<8x128xf32>
    %482 = arith.addf %480, %481 : vector<8x128xf32>
    %cst_165 = arith.constant 5.000000e-01 : f32
    %483 = vector.broadcast %cst_165 : f32 to vector<8x128xf32>
    %484 = arith.mulf %483, %482 : vector<8x128xf32>
    %485 = math.tanh %484 : vector<8x128xf32>
    %cst_166 = arith.constant 1.000000e+00 : f32
    %486 = vector.broadcast %cst_166 : f32 to vector<8x128xf32>
    %487 = arith.addf %485, %486 : vector<8x128xf32>
    %cst_167 = arith.constant 5.000000e-01 : f32
    %488 = vector.broadcast %cst_167 : f32 to vector<8x128xf32>
    %489 = arith.mulf %488, %487 : vector<8x128xf32>
    %490 = vector.extract_strided_slice %477 {offsets = [0, 128], sizes = [8, 128], strides = [1, 1]} : vector<8x384xf32> to vector<8x128xf32>
    %491 = vector.extract_strided_slice %479 {offsets = [0, 128], sizes = [8, 128], strides = [1, 1]} : vector<8x384xf32> to vector<8x128xf32>
    %492 = arith.addf %490, %491 : vector<8x128xf32>
    %cst_168 = arith.constant 5.000000e-01 : f32
    %493 = vector.broadcast %cst_168 : f32 to vector<8x128xf32>
    %494 = arith.mulf %493, %492 : vector<8x128xf32>
    %495 = math.tanh %494 : vector<8x128xf32>
    %cst_169 = arith.constant 1.000000e+00 : f32
    %496 = vector.broadcast %cst_169 : f32 to vector<8x128xf32>
    %497 = arith.addf %495, %496 : vector<8x128xf32>
    %cst_170 = arith.constant 5.000000e-01 : f32
    %498 = vector.broadcast %cst_170 : f32 to vector<8x128xf32>
    %499 = arith.mulf %498, %497 : vector<8x128xf32>
    %500 = vector.extract_strided_slice %477 {offsets = [0, 256], sizes = [8, 128], strides = [1, 1]} : vector<8x384xf32> to vector<8x128xf32>
    %501 = vector.extract_strided_slice %479 {offsets = [0, 256], sizes = [8, 128], strides = [1, 1]} : vector<8x384xf32> to vector<8x128xf32>
    %502 = arith.addf %501, %23 : vector<8x128xf32>
    %503 = arith.mulf %489, %502 : vector<8x128xf32>
    %504 = arith.addf %500, %503 : vector<8x128xf32>
    %505 = math.tanh %504 : vector<8x128xf32>
    %cst_171 = arith.constant 1.000000e+00 : f32
    %506 = vector.broadcast %cst_171 : f32 to vector<8x128xf32>
    %507 = arith.subf %506, %499 : vector<8x128xf32>
    %508 = arith.mulf %507, %505 : vector<8x128xf32>
    %509 = arith.mulf %499, %470 : vector<8x128xf32>
    %510 = arith.addf %508, %509 : vector<8x128xf32>
    %511 = arith.index_cast %c4_i32_161 : i32 to index
    %c0_172 = arith.constant 0 : index
    %c0_173 = arith.constant 0 : index
    %512 = vector.load %arg17[%511, %c0_172, %c0_173] : memref<8x8x128xf32, #tpu.memory_space<vmem>>, vector<1x8x128xf32>
    %513 = vector.shape_cast %512 : vector<1x8x128xf32> to vector<8x128xf32>
    %514 = vector.shape_cast %510 : vector<8x128xf32> to vector<1x8x128xf32>
    tpu.vector_store %arg17[%511, %c0_172, %c0_173], %514 {strides = array<i32>} : memref<8x8x128xf32, #tpu.memory_space<vmem>>, vector<1x8x128xf32>,
    %c5_i32_174 = arith.constant 5 : i32
    %515 = arith.index_cast %c5_i32_174 : i32 to index
    %c0_175 = arith.constant 0 : index
    %c0_176 = arith.constant 0 : index
    %516 = vector.load %arg16[%515, %c0_175, %c0_176] : memref<8x8x384xf32, #tpu.memory_space<vmem>>, vector<1x8x384xf32>
    %517 = vector.shape_cast %516 : vector<1x8x384xf32> to vector<8x384xf32>
    %518 = arith.truncf %510 : vector<8x128xf32> to vector<8x128xbf16>
    %cst_177 = arith.constant dense<0.000000e+00> : vector<8x384xf32>
    %519 = tpu.matmul %518, %25, %cst_177 {dimension_numbers = #tpu.dot_dimension_numbers<[1], [0], [0], [1], [0, 0, 1, 1], [], []>} : vector<8x128xbf16>, vector<128x384xbf16>, vector<8x384xf32> -> vector<8x384xf32>
    %520 = vector.extract_strided_slice %517 {offsets = [0, 0], sizes = [8, 128], strides = [1, 1]} : vector<8x384xf32> to vector<8x128xf32>
    %521 = vector.extract_strided_slice %519 {offsets = [0, 0], sizes = [8, 128], strides = [1, 1]} : vector<8x384xf32> to vector<8x128xf32>
    %522 = arith.addf %520, %521 : vector<8x128xf32>
    %cst_178 = arith.constant 5.000000e-01 : f32
    %523 = vector.broadcast %cst_178 : f32 to vector<8x128xf32>
    %524 = arith.mulf %523, %522 : vector<8x128xf32>
    %525 = math.tanh %524 : vector<8x128xf32>
    %cst_179 = arith.constant 1.000000e+00 : f32
    %526 = vector.broadcast %cst_179 : f32 to vector<8x128xf32>
    %527 = arith.addf %525, %526 : vector<8x128xf32>
    %cst_180 = arith.constant 5.000000e-01 : f32
    %528 = vector.broadcast %cst_180 : f32 to vector<8x128xf32>
    %529 = arith.mulf %528, %527 : vector<8x128xf32>
    %530 = vector.extract_strided_slice %517 {offsets = [0, 128], sizes = [8, 128], strides = [1, 1]} : vector<8x384xf32> to vector<8x128xf32>
    %531 = vector.extract_strided_slice %519 {offsets = [0, 128], sizes = [8, 128], strides = [1, 1]} : vector<8x384xf32> to vector<8x128xf32>
    %532 = arith.addf %530, %531 : vector<8x128xf32>
    %cst_181 = arith.constant 5.000000e-01 : f32
    %533 = vector.broadcast %cst_181 : f32 to vector<8x128xf32>
    %534 = arith.mulf %533, %532 : vector<8x128xf32>
    %535 = math.tanh %534 : vector<8x128xf32>
    %cst_182 = arith.constant 1.000000e+00 : f32
    %536 = vector.broadcast %cst_182 : f32 to vector<8x128xf32>
    %537 = arith.addf %535, %536 : vector<8x128xf32>
    %cst_183 = arith.constant 5.000000e-01 : f32
    %538 = vector.broadcast %cst_183 : f32 to vector<8x128xf32>
    %539 = arith.mulf %538, %537 : vector<8x128xf32>
    %540 = vector.extract_strided_slice %517 {offsets = [0, 256], sizes = [8, 128], strides = [1, 1]} : vector<8x384xf32> to vector<8x128xf32>
    %541 = vector.extract_strided_slice %519 {offsets = [0, 256], sizes = [8, 128], strides = [1, 1]} : vector<8x384xf32> to vector<8x128xf32>
    %542 = arith.addf %541, %23 : vector<8x128xf32>
    %543 = arith.mulf %529, %542 : vector<8x128xf32>
    %544 = arith.addf %540, %543 : vector<8x128xf32>
    %545 = math.tanh %544 : vector<8x128xf32>
    %cst_184 = arith.constant 1.000000e+00 : f32
    %546 = vector.broadcast %cst_184 : f32 to vector<8x128xf32>
    %547 = arith.subf %546, %539 : vector<8x128xf32>
    %548 = arith.mulf %547, %545 : vector<8x128xf32>
    %549 = arith.mulf %539, %510 : vector<8x128xf32>
    %550 = arith.addf %548, %549 : vector<8x128xf32>
    %551 = arith.index_cast %c5_i32_174 : i32 to index
    %c0_185 = arith.constant 0 : index
    %c0_186 = arith.constant 0 : index
    %552 = vector.load %arg17[%551, %c0_185, %c0_186] : memref<8x8x128xf32, #tpu.memory_space<vmem>>, vector<1x8x128xf32>
    %553 = vector.shape_cast %552 : vector<1x8x128xf32> to vector<8x128xf32>
    %554 = vector.shape_cast %550 : vector<8x128xf32> to vector<1x8x128xf32>
    tpu.vector_store %arg17[%551, %c0_185, %c0_186], %554 {strides = array<i32>} : memref<8x8x128xf32, #tpu.memory_space<vmem>>, vector<1x8x128xf32>,
    %c6_i32_187 = arith.constant 6 : i32
    %555 = arith.index_cast %c6_i32_187 : i32 to index
    %c0_188 = arith.constant 0 : index
    %c0_189 = arith.constant 0 : index
    %556 = vector.load %arg16[%555, %c0_188, %c0_189] : memref<8x8x384xf32, #tpu.memory_space<vmem>>, vector<1x8x384xf32>
    %557 = vector.shape_cast %556 : vector<1x8x384xf32> to vector<8x384xf32>
    %558 = arith.truncf %550 : vector<8x128xf32> to vector<8x128xbf16>
    %cst_190 = arith.constant dense<0.000000e+00> : vector<8x384xf32>
    %559 = tpu.matmul %558, %25, %cst_190 {dimension_numbers = #tpu.dot_dimension_numbers<[1], [0], [0], [1], [0, 0, 1, 1], [], []>} : vector<8x128xbf16>, vector<128x384xbf16>, vector<8x384xf32> -> vector<8x384xf32>
    %560 = vector.extract_strided_slice %557 {offsets = [0, 0], sizes = [8, 128], strides = [1, 1]} : vector<8x384xf32> to vector<8x128xf32>
    %561 = vector.extract_strided_slice %559 {offsets = [0, 0], sizes = [8, 128], strides = [1, 1]} : vector<8x384xf32> to vector<8x128xf32>
    %562 = arith.addf %560, %561 : vector<8x128xf32>
    %cst_191 = arith.constant 5.000000e-01 : f32
    %563 = vector.broadcast %cst_191 : f32 to vector<8x128xf32>
    %564 = arith.mulf %563, %562 : vector<8x128xf32>
    %565 = math.tanh %564 : vector<8x128xf32>
    %cst_192 = arith.constant 1.000000e+00 : f32
    %566 = vector.broadcast %cst_192 : f32 to vector<8x128xf32>
    %567 = arith.addf %565, %566 : vector<8x128xf32>
    %cst_193 = arith.constant 5.000000e-01 : f32
    %568 = vector.broadcast %cst_193 : f32 to vector<8x128xf32>
    %569 = arith.mulf %568, %567 : vector<8x128xf32>
    %570 = vector.extract_strided_slice %557 {offsets = [0, 128], sizes = [8, 128], strides = [1, 1]} : vector<8x384xf32> to vector<8x128xf32>
    %571 = vector.extract_strided_slice %559 {offsets = [0, 128], sizes = [8, 128], strides = [1, 1]} : vector<8x384xf32> to vector<8x128xf32>
    %572 = arith.addf %570, %571 : vector<8x128xf32>
    %cst_194 = arith.constant 5.000000e-01 : f32
    %573 = vector.broadcast %cst_194 : f32 to vector<8x128xf32>
    %574 = arith.mulf %573, %572 : vector<8x128xf32>
    %575 = math.tanh %574 : vector<8x128xf32>
    %cst_195 = arith.constant 1.000000e+00 : f32
    %576 = vector.broadcast %cst_195 : f32 to vector<8x128xf32>
    %577 = arith.addf %575, %576 : vector<8x128xf32>
    %cst_196 = arith.constant 5.000000e-01 : f32
    %578 = vector.broadcast %cst_196 : f32 to vector<8x128xf32>
    %579 = arith.mulf %578, %577 : vector<8x128xf32>
    %580 = vector.extract_strided_slice %557 {offsets = [0, 256], sizes = [8, 128], strides = [1, 1]} : vector<8x384xf32> to vector<8x128xf32>
    %581 = vector.extract_strided_slice %559 {offsets = [0, 256], sizes = [8, 128], strides = [1, 1]} : vector<8x384xf32> to vector<8x128xf32>
    %582 = arith.addf %581, %23 : vector<8x128xf32>
    %583 = arith.mulf %569, %582 : vector<8x128xf32>
    %584 = arith.addf %580, %583 : vector<8x128xf32>
    %585 = math.tanh %584 : vector<8x128xf32>
    %cst_197 = arith.constant 1.000000e+00 : f32
    %586 = vector.broadcast %cst_197 : f32 to vector<8x128xf32>
    %587 = arith.subf %586, %579 : vector<8x128xf32>
    %588 = arith.mulf %587, %585 : vector<8x128xf32>
    %589 = arith.mulf %579, %550 : vector<8x128xf32>
    %590 = arith.addf %588, %589 : vector<8x128xf32>
    %591 = arith.index_cast %c6_i32_187 : i32 to index
    %c0_198 = arith.constant 0 : index
    %c0_199 = arith.constant 0 : index
    %592 = vector.load %arg17[%591, %c0_198, %c0_199] : memref<8x8x128xf32, #tpu.memory_space<vmem>>, vector<1x8x128xf32>
    %593 = vector.shape_cast %592 : vector<1x8x128xf32> to vector<8x128xf32>
    %594 = vector.shape_cast %590 : vector<8x128xf32> to vector<1x8x128xf32>
    tpu.vector_store %arg17[%591, %c0_198, %c0_199], %594 {strides = array<i32>} : memref<8x8x128xf32, #tpu.memory_space<vmem>>, vector<1x8x128xf32>,
    %c7_i32_200 = arith.constant 7 : i32
    %595 = arith.index_cast %c7_i32_200 : i32 to index
    %c0_201 = arith.constant 0 : index
    %c0_202 = arith.constant 0 : index
    %596 = vector.load %arg16[%595, %c0_201, %c0_202] : memref<8x8x384xf32, #tpu.memory_space<vmem>>, vector<1x8x384xf32>
    %597 = vector.shape_cast %596 : vector<1x8x384xf32> to vector<8x384xf32>
    %598 = arith.truncf %590 : vector<8x128xf32> to vector<8x128xbf16>
    %cst_203 = arith.constant dense<0.000000e+00> : vector<8x384xf32>
    %599 = tpu.matmul %598, %25, %cst_203 {dimension_numbers = #tpu.dot_dimension_numbers<[1], [0], [0], [1], [0, 0, 1, 1], [], []>} : vector<8x128xbf16>, vector<128x384xbf16>, vector<8x384xf32> -> vector<8x384xf32>
    %600 = vector.extract_strided_slice %597 {offsets = [0, 0], sizes = [8, 128], strides = [1, 1]} : vector<8x384xf32> to vector<8x128xf32>
    %601 = vector.extract_strided_slice %599 {offsets = [0, 0], sizes = [8, 128], strides = [1, 1]} : vector<8x384xf32> to vector<8x128xf32>
    %602 = arith.addf %600, %601 : vector<8x128xf32>
    %cst_204 = arith.constant 5.000000e-01 : f32
    %603 = vector.broadcast %cst_204 : f32 to vector<8x128xf32>
    %604 = arith.mulf %603, %602 : vector<8x128xf32>
    %605 = math.tanh %604 : vector<8x128xf32>
    %cst_205 = arith.constant 1.000000e+00 : f32
    %606 = vector.broadcast %cst_205 : f32 to vector<8x128xf32>
    %607 = arith.addf %605, %606 : vector<8x128xf32>
    %cst_206 = arith.constant 5.000000e-01 : f32
    %608 = vector.broadcast %cst_206 : f32 to vector<8x128xf32>
    %609 = arith.mulf %608, %607 : vector<8x128xf32>
    %610 = vector.extract_strided_slice %597 {offsets = [0, 128], sizes = [8, 128], strides = [1, 1]} : vector<8x384xf32> to vector<8x128xf32>
    %611 = vector.extract_strided_slice %599 {offsets = [0, 128], sizes = [8, 128], strides = [1, 1]} : vector<8x384xf32> to vector<8x128xf32>
    %612 = arith.addf %610, %611 : vector<8x128xf32>
    %cst_207 = arith.constant 5.000000e-01 : f32
    %613 = vector.broadcast %cst_207 : f32 to vector<8x128xf32>
    %614 = arith.mulf %613, %612 : vector<8x128xf32>
    %615 = math.tanh %614 : vector<8x128xf32>
    %cst_208 = arith.constant 1.000000e+00 : f32
    %616 = vector.broadcast %cst_208 : f32 to vector<8x128xf32>
    %617 = arith.addf %615, %616 : vector<8x128xf32>
    %cst_209 = arith.constant 5.000000e-01 : f32
    %618 = vector.broadcast %cst_209 : f32 to vector<8x128xf32>
    %619 = arith.mulf %618, %617 : vector<8x128xf32>
    %620 = vector.extract_strided_slice %597 {offsets = [0, 256], sizes = [8, 128], strides = [1, 1]} : vector<8x384xf32> to vector<8x128xf32>
    %621 = vector.extract_strided_slice %599 {offsets = [0, 256], sizes = [8, 128], strides = [1, 1]} : vector<8x384xf32> to vector<8x128xf32>
    %622 = arith.addf %621, %23 : vector<8x128xf32>
    %623 = arith.mulf %609, %622 : vector<8x128xf32>
    %624 = arith.addf %620, %623 : vector<8x128xf32>
    %625 = math.tanh %624 : vector<8x128xf32>
    %cst_210 = arith.constant 1.000000e+00 : f32
    %626 = vector.broadcast %cst_210 : f32 to vector<8x128xf32>
    %627 = arith.subf %626, %619 : vector<8x128xf32>
    %628 = arith.mulf %627, %625 : vector<8x128xf32>
    %629 = arith.mulf %619, %590 : vector<8x128xf32>
    %630 = arith.addf %628, %629 : vector<8x128xf32>
    %631 = arith.index_cast %c7_i32_200 : i32 to index
    %c0_211 = arith.constant 0 : index
    %c0_212 = arith.constant 0 : index
    %632 = vector.load %arg17[%631, %c0_211, %c0_212] : memref<8x8x128xf32, #tpu.memory_space<vmem>>, vector<1x8x128xf32>
    %633 = vector.shape_cast %632 : vector<1x8x128xf32> to vector<8x128xf32>
    %634 = vector.shape_cast %630 : vector<8x128xf32> to vector<1x8x128xf32>
    tpu.vector_store %arg17[%631, %c0_211, %c0_212], %634 {strides = array<i32>} : memref<8x8x128xf32, #tpu.memory_space<vmem>>, vector<1x8x128xf32>,
    %c8_i32_213 = arith.constant 8 : i32
    %c0_214 = arith.constant 0 : index
    %c0_215 = arith.constant 0 : index
    %635 = vector.load %arg14[%c0_214, %c0_215] : memref<8x128xf32, #tpu.memory_space<vmem>>, vector<8x128xf32>
    tpu.vector_store %arg14[%c0_214, %c0_215], %630 {strides = array<i32>} : memref<8x128xf32, #tpu.memory_space<vmem>>, vector<8x128xf32>,
    %c0_216 = arith.constant 0 : index
    %c0_217 = arith.constant 0 : index
    %636 = vector.load %arg11[%c0_216, %c0_217] : memref<1x128xf32, #tpu.memory_space<vmem>>, vector<1x128xf32>
    %c0_218 = arith.constant 0 : index
    %c0_219 = arith.constant 0 : index
    %c0_220 = arith.constant 0 : index
    %637 = vector.load %arg17[%c0_218, %c0_219, %c0_220] : memref<8x8x128xf32, #tpu.memory_space<vmem>>, vector<8x8x128xf32>
    %638 = vector.shape_cast %636 : vector<1x128xf32> to vector<1x1x128xf32>
    %639 = vector.broadcast %638 : vector<1x1x128xf32> to vector<8x8x128xf32>
    %640 = arith.mulf %637, %639 : vector<8x8x128xf32>
    %cst_221 = arith.constant dense<0.000000e+00> : vector<8x8xf32>
    %641 = vector.multi_reduction <add>, %640, %cst_221 [2] : vector<8x8x128xf32> to vector<8x8xf32>
    %642 = tpu.transpose %641, [1, 0] : vector<8x8xf32> -> vector<8x8xf32>
    %c0_222 = arith.constant 0 : index
    %c0_223 = arith.constant 0 : index
    %643 = vector.load %arg12[%c0_222, %c0_223] : memref<1x1xf32, #tpu.memory_space<vmem>>, vector<1x1xf32>
    %644 = vector.broadcast %643 : vector<1x1xf32> to vector<8x8xf32>
    %645 = arith.addf %642, %644 : vector<8x8xf32>
    %c0_224 = arith.constant 0 : index
    %c0_225 = arith.constant 0 : index
    %646 = vector.load %arg13[%c0_224, %c0_225] : memref<8x8xf32, #tpu.memory_space<vmem>>, vector<8x8xf32>
    tpu.vector_store %arg13[%c0_224, %c0_225], %645 {strides = array<i32>} : memref<8x8xf32, #tpu.memory_space<vmem>>, vector<8x8xf32>,
    return
  }
  func.func @transform_0(%arg0: i32) -> (i32, i32, i32) {
    %c0_i32 = arith.constant 0 : i32
    %c0_i32_0 = arith.constant 0 : i32
    %c0_i32_1 = arith.constant 0 : i32
    return %c0_i32, %arg0, %c0_i32_0 : i32, i32, i32
  }
  func.func @transform_1(%arg0: i32) -> (i32, i32, i32) {
    %c0_i32 = arith.constant 0 : i32
    %c0_i32_0 = arith.constant 0 : i32
    %c0_i32_1 = arith.constant 0 : i32
    return %c0_i32, %arg0, %c0_i32_0 : i32, i32, i32
  }
  func.func @transform_2(%arg0: i32) -> (i32, i32) {
    %c0_i32 = arith.constant 0 : i32
    %c0_i32_0 = arith.constant 0 : i32
    %c0_i32_1 = arith.constant 0 : i32
    return %c0_i32, %c0_i32_0 : i32, i32
  }
  func.func @transform_3(%arg0: i32) -> (i32, i32) {
    %c0_i32 = arith.constant 0 : i32
    %c0_i32_0 = arith.constant 0 : i32
    %c0_i32_1 = arith.constant 0 : i32
    return %c0_i32, %c0_i32_0 : i32, i32
  }
  func.func @transform_4(%arg0: i32) -> (i32, i32) {
    %c0_i32 = arith.constant 0 : i32
    %c0_i32_0 = arith.constant 0 : i32
    %c0_i32_1 = arith.constant 0 : i32
    return %c0_i32, %c0_i32_0 : i32, i32
  }
  func.func @transform_5(%arg0: i32) -> (i32, i32) {
    %c0_i32 = arith.constant 0 : i32
    %c0_i32_0 = arith.constant 0 : i32
    %c0_i32_1 = arith.constant 0 : i32
    return %c0_i32, %c0_i32_0 : i32, i32
  }
  func.func @transform_6(%arg0: i32) -> (i32, i32) {
    %c0_i32 = arith.constant 0 : i32
    %c0_i32_0 = arith.constant 0 : i32
    %c0_i32_1 = arith.constant 0 : i32
    return %c0_i32, %c0_i32_0 : i32, i32
  }
  func.func @transform_7(%arg0: i32) -> (i32, i32) {
    %c0_i32 = arith.constant 0 : i32
    %c0_i32_0 = arith.constant 0 : i32
    %c0_i32_1 = arith.constant 0 : i32
    return %c0_i32, %c0_i32_0 : i32, i32
  }
  func.func @transform_8(%arg0: i32) -> (i32, i32) {
    %c0_i32 = arith.constant 0 : i32
    %c0_i32_0 = arith.constant 0 : i32
    %c0_i32_1 = arith.constant 0 : i32
    return %c0_i32, %c0_i32_0 : i32, i32
  }
  func.func @transform_9(%arg0: i32) -> (i32, i32) {
    %c0_i32 = arith.constant 0 : i32
    %c0_i32_0 = arith.constant 0 : i32
    %c0_i32_1 = arith.constant 0 : i32
    return %c0_i32, %c0_i32_0 : i32, i32
  }
  func.func @transform_10(%arg0: i32) -> (i32, i32) {
    %c0_i32 = arith.constant 0 : i32
    %c0_i32_0 = arith.constant 0 : i32
    %c0_i32_1 = arith.constant 0 : i32
    return %c0_i32, %c0_i32_0 : i32, i32
  }
  func.func @transform_11(%arg0: i32) -> (i32, i32) {
    %c0_i32 = arith.constant 0 : i32
    %c0_i32_0 = arith.constant 0 : i32
    %c0_i32_1 = arith.constant 0 : i32
    return %c0_i32, %c0_i32_0 : i32, i32
  }
  func.func @transform_12(%arg0: i32) -> (i32, i32) {
    %c0_i32 = arith.constant 0 : i32
    %c0_i32_0 = arith.constant 0 : i32
    return %arg0, %c0_i32 : i32, i32
  }
  func.func @transform_13(%arg0: i32) -> (i32, i32) {
    %c0_i32 = arith.constant 0 : i32
    %c0_i32_0 = arith.constant 0 : i32
    return %arg0, %c0_i32 : i32, i32
  }
}

</mosaic_0001>

<llo_original>
// kernel: discriminator_forward.1
$region0: #{discriminator_forward.1}
  #allocation0 [shape = 'u32[]', space=smem, size = 0x4, offset = 0x4, fixed_abs, tag = 'smem constant byte address 0x4 - core index']
  #allocation1 [shape = 'u32[72,128]{1,0:T(1,128)}', space=vmem, size = 0x9000, scoped, tag = 'internal scratch']
  #allocation2 [shape = 'f32[8,8,384]{2,1,0:T(8,128)}', space=vmem, size = 0x18000, scoped, tag = 'scratch operand']
  #allocation3 [shape = 'f32[8,8,384]{2,1,0:T(8,128)}', space=vmem, size = 0x18000, scoped, tag = 'scratch operand']
  #allocation4 [shape = 'f32[8,8,128]{2,1,0:T(8,128)}', space=vmem, size = 0x8000, scoped, tag = 'scratch operand']
  #allocation5 [shape = 'f32[1,1]{1,0:T(1,128)S(1)}', space=vmem, size = 0x200, scoped, tag = 'scoped memory for discriminator_forward.1']
  %s0 = inlined_call_operand.vmem [shape: bf16[8,16,128], index: 0, kind: input, shape index: {}]
  %s1 = inlined_call_operand.vmem [shape: bf16[8,16,128], index: 1, kind: input, shape index: {}]
  %s2 = inlined_call_operand.vmem [shape: bf16[128,384], index: 2, kind: input, shape index: {}]
  %s3 = inlined_call_operand.vmem [shape: bf16[128,384], index: 3, kind: input, shape index: {}]
  %s4 = inlined_call_operand.vmem [shape: f32[1,384], index: 4, kind: input, shape index: {}]
  %s5 = inlined_call_operand.vmem [shape: f32[1,128], index: 5, kind: input, shape index: {}]
  %s6 = inlined_call_operand.vmem [shape: bf16[128,384], index: 6, kind: input, shape index: {}]
  %s7 = inlined_call_operand.vmem [shape: bf16[128,384], index: 7, kind: input, shape index: {}]
  %s8 = inlined_call_operand.vmem [shape: f32[1,384], index: 8, kind: input, shape index: {}]
  %s9 = inlined_call_operand.vmem [shape: f32[1,128], index: 9, kind: input, shape index: {}]
  %s10 = inlined_call_operand.vmem [shape: f32[1,128], index: 10, kind: input, shape index: {}]
  %s11 = inlined_call_operand.<no memory space> [shape: f32[1,1], index: 11, kind: input, shape index: {}]
  %s12 = inlined_call_operand.vmem [shape: f32[16,8], index: 12, kind: output, shape index: {0}]
  %s13 = inlined_call_operand.hbm [shape: f32[16,128], index: 13, kind: output, shape index: {1}]
  %14 = xla_tuple %s12, %s13
  %s15 = sld [smem:[#allocation0]]
  $region171: #{discriminator_forward.1} parent=0
    _
  %s17 = ssub.s32 1, %s15
  %s18 = scalar_select 0, %s17, %s15
  %v19 = vstv %s11
  %20 = vst [vmem:[#allocation5] sm:$0x1] %v19
  $region1: #{discriminator_forward.1} parent=0
    #allocation6 [shape = 'u8[32768]{0}', space=vmem, size = 0x8000, scoped, tag = 'input window, operand 0']
    #allocation7 [shape = 'u8[32768]{0}', space=vmem, size = 0x8000, scoped, tag = 'input window, operand 1']
    #allocation8 [shape = 'u8[8192]{0}', space=vmem, size = 0x2000, scoped, tag = 'output window, operand 1']
    #allocation9 [shape = 's32[2]{0}', space=sflag, size = 0x8, scoped, tag = 'scoped memory for discriminator_forward.1']
    %21 = vsyncpa [#allocation9], 0
    %s22 = scalar_lea.sflag [#allocation9], 1
    %23 = vsyncpa %s22, 0
    loop: start=0, step=1, limit=4
    $region2: #{discriminator_forward.1} parent=1 // loop_pre_header
      _
    $region3: #{discriminator_forward.1} parent=1 // loop_header
      %s25 = sphi 0, %s29
      %p26 = scmp.ge.s32.totalorder %s25, 4
      %s35 = sphi 0, %s37
      %s38 = sphi 0, %s35
      %s39 = sphi 0, %s38
      %s55 = sphi 0, %s39
      %s61 = sphi 0, %s63
      %s64 = sphi 0, %s61
      %s65 = sphi 0, %s64
      %s81 = sphi 0, %s65
      %s85 = sphi 0, %s85
      %s87 = sphi 0, %s85
      %s88 = sphi 0, %s87
      %s102 = sphi 0, %s88
      %s106 = sphi 0, %s106
      %s108 = sphi 0, %s106
      %s109 = sphi 0, %s108
      %s123 = sphi 0, %s109
      %s127 = sphi 0, %s127
      %s129 = sphi 0, %s127
      %s130 = sphi 0, %s129
      %s144 = sphi 0, %s130
      %s148 = sphi 0, %s148
      %s150 = sphi 0, %s148
      %s151 = sphi 0, %s150
      %s165 = sphi 0, %s151
      %s169 = sphi 0, %s169
      %s171 = sphi 0, %s169
      %s172 = sphi 0, %s171
      %s186 = sphi 0, %s172
      %s190 = sphi 0, %s190
      %s192 = sphi 0, %s190
      %s193 = sphi 0, %s192
      %s207 = sphi 0, %s193
      %s211 = sphi 0, %s211
      %s213 = sphi 0, %s211
      %s214 = sphi 0, %s213
      %s228 = sphi 0, %s214
      %s232 = sphi 0, %s232
      %s234 = sphi 0, %s232
      %s235 = sphi 0, %s234
      %s249 = sphi 0, %s235
      %s253 = sphi 0, %s253
      %s255 = sphi 0, %s253
      %s256 = sphi 0, %s255
      %s270 = sphi 0, %s256
      %s274 = sphi 0, %s274
      %s276 = sphi 0, %s274
      %s277 = sphi 0, %s276
      %s291 = sphi 0, %s277
      %s297 = sphi 0, %s299
      %s300 = sphi 0, %s297
      %s301 = sphi 0, %s300
      %s317 = sphi 0, %s301
      %s323 = sphi 0, %s325
      %s326 = sphi 0, %s323
      %s327 = sphi 0, %s326
      %s343 = sphi 0, %s327
    $region4: #{discriminator_forward.1} parent=1 // loop_header_branch
      %28 = sbr.rel (%p26) target = $region8
    $region5: #{discriminator_forward.1} parent=1 // loop_body
      %s30 = ssub.s32 %s25, 1
      %s31 = ssub.s32 %s25, 2
      %s32 = sadd.s32 %s25, 1
      %s33 = ssub.s32 %s25, %s32
      %p34 = scmp.eq.s32.totalorder %s33, 0
      %s36 = sadd.s32 %s35, 1
      %s37 = scalar_select %p34, %s35, %s36
      %p40 = pneg %p34
      %p41 = scmp.eq.s32.totalorder %s25, 1
      %p42 = por %p40, %p41
      %p43 = scmp.ne.s32.totalorder %s35, %s38
      %p44 = scmp.eq.s32.totalorder %s25, 0
      %p45 = por %p43, %p44
      %p46 = scmp.ne.s32.totalorder %s35, %s38
      %p47 = scmp.eq.s32.totalorder %s30, 1
      %p48 = por %p46, %p47
      %p49 = scmp.ne.s32.totalorder %s38, %s39
      %p50 = scmp.eq.s32.totalorder %s30, 0
      %p51 = por %p49, %p50
      %p52 = scmp.ne.s32.totalorder %s38, %s39
      %p53 = scmp.eq.s32.totalorder %s31, 1
      %p54 = por %p52, %p53
      %p56 = scmp.ne.s32.totalorder %s39, %s55
      %p57 = scmp.eq.s32.totalorder %s31, 0
      %p58 = por %p56, %p57
      %s59 = ssub.s32 %s25, %s32
      %p60 = scmp.eq.s32.totalorder %s59, 0
      %s62 = sadd.s32 %s61, 1
      %s63 = scalar_select %p60, %s61, %s62
      %p66 = pneg %p60
      %p67 = scmp.eq.s32.totalorder %s25, 1
      %p68 = por %p66, %p67
      %p69 = scmp.ne.s32.totalorder %s61, %s64
      %p70 = scmp.eq.s32.totalorder %s25, 0
      %p71 = por %p69, %p70
      %p72 = scmp.ne.s32.totalorder %s61, %s64
      %p73 = scmp.eq.s32.totalorder %s30, 1
      %p74 = por %p72, %p73
      %p75 = scmp.ne.s32.totalorder %s64, %s65
      %p76 = scmp.eq.s32.totalorder %s30, 0
      %p77 = por %p75, %p76
      %p78 = scmp.ne.s32.totalorder %s64, %s65
      %p79 = scmp.eq.s32.totalorder %s31, 1
      %p80 = por %p78, %p79
      %p82 = scmp.ne.s32.totalorder %s65, %s81
      %p83 = scmp.eq.s32.totalorder %s31, 0
      %p84 = por %p82, %p83
      %s86 = sadd.s32 %s85, 1
      %p89 = scmp.eq.s32.totalorder %s25, 1
      %p90 = scmp.ne.s32.totalorder %s85, %s87
      %p91 = scmp.eq.s32.totalorder %s25, 0
      %p92 = por %p90, %p91
      %p93 = scmp.ne.s32.totalorder %s85, %s87
      %p94 = scmp.eq.s32.totalorder %s30, 1
      %p95 = por %p93, %p94
      %p96 = scmp.ne.s32.totalorder %s87, %s88
      %p97 = scmp.eq.s32.totalorder %s30, 0
      %p98 = por %p96, %p97
      %p99 = scmp.ne.s32.totalorder %s87, %s88
      %p100 = scmp.eq.s32.totalorder %s31, 1
      %p101 = por %p99, %p100
      %p103 = scmp.ne.s32.totalorder %s88, %s102
      %p104 = scmp.eq.s32.totalorder %s31, 0
      %p105 = por %p103, %p104
      %s107 = sadd.s32 %s106, 1
      %p110 = scmp.eq.s32.totalorder %s25, 1
      %p111 = scmp.ne.s32.totalorder %s106, %s108
      %p112 = scmp.eq.s32.totalorder %s25, 0
      %p113 = por %p111, %p112
      %p114 = scmp.ne.s32.totalorder %s106, %s108
      %p115 = scmp.eq.s32.totalorder %s30, 1
      %p116 = por %p114, %p115
      %p117 = scmp.ne.s32.totalorder %s108, %s109
      %p118 = scmp.eq.s32.totalorder %s30, 0
      %p119 = por %p117, %p118
      %p120 = scmp.ne.s32.totalorder %s108, %s109
      %p121 = scmp.eq.s32.totalorder %s31, 1
      %p122 = por %p120, %p121
      %p124 = scmp.ne.s32.totalorder %s109, %s123
      %p125 = scmp.eq.s32.totalorder %s31, 0
      %p126 = por %p124, %p125
      %s128 = sadd.s32 %s127, 1
      %p131 = scmp.eq.s32.totalorder %s25, 1
      %p132 = scmp.ne.s32.totalorder %s127, %s129
      %p133 = scmp.eq.s32.totalorder %s25, 0
      %p134 = por %p132, %p133
      %p135 = scmp.ne.s32.totalorder %s127, %s129
      %p136 = scmp.eq.s32.totalorder %s30, 1
      %p137 = por %p135, %p136
      %p138 = scmp.ne.s32.totalorder %s129, %s130
      %p139 = scmp.eq.s32.totalorder %s30, 0
      %p140 = por %p138, %p139
      %p141 = scmp.ne.s32.totalorder %s129, %s130
      %p142 = scmp.eq.s32.totalorder %s31, 1
      %p143 = por %p141, %p142
      %p145 = scmp.ne.s32.totalorder %s130, %s144
      %p146 = scmp.eq.s32.totalorder %s31, 0
      %p147 = por %p145, %p146
      %s149 = sadd.s32 %s148, 1
      %p152 = scmp.eq.s32.totalorder %s25, 1
      %p153 = scmp.ne.s32.totalorder %s148, %s150
      %p154 = scmp.eq.s32.totalorder %s25, 0
      %p155 = por %p153, %p154
      %p156 = scmp.ne.s32.totalorder %s148, %s150
      %p157 = scmp.eq.s32.totalorder %s30, 1
      %p158 = por %p156, %p157
      %p159 = scmp.ne.s32.totalorder %s150, %s151
      %p160 = scmp.eq.s32.totalorder %s30, 0
      %p161 = por %p159, %p160
      %p162 = scmp.ne.s32.totalorder %s150, %s151
      %p163 = scmp.eq.s32.totalorder %s31, 1
      %p164 = por %p162, %p163
      %p166 = scmp.ne.s32.totalorder %s151, %s165
      %p167 = scmp.eq.s32.totalorder %s31, 0
      %p168 = por %p166, %p167
      %s170 = sadd.s32 %s169, 1
      %p173 = scmp.eq.s32.totalorder %s25, 1
      %p174 = scmp.ne.s32.totalorder %s169, %s171
      %p175 = scmp.eq.s32.totalorder %s25, 0
      %p176 = por %p174, %p175
      %p177 = scmp.ne.s32.totalorder %s169, %s171
      %p178 = scmp.eq.s32.totalorder %s30, 1
      %p179 = por %p177, %p178
      %p180 = scmp.ne.s32.totalorder %s171, %s172
      %p181 = scmp.eq.s32.totalorder %s30, 0
      %p182 = por %p180, %p181
      %p183 = scmp.ne.s32.totalorder %s171, %s172
      %p184 = scmp.eq.s32.totalorder %s31, 1
      %p185 = por %p183, %p184
      %p187 = scmp.ne.s32.totalorder %s172, %s186
      %p188 = scmp.eq.s32.totalorder %s31, 0
      %p189 = por %p187, %p188
      %s191 = sadd.s32 %s190, 1
      %p194 = scmp.eq.s32.totalorder %s25, 1
      %p195 = scmp.ne.s32.totalorder %s190, %s192
      %p196 = scmp.eq.s32.totalorder %s25, 0
      %p197 = por %p195, %p196
      %p198 = scmp.ne.s32.totalorder %s190, %s192
      %p199 = scmp.eq.s32.totalorder %s30, 1
      %p200 = por %p198, %p199
      %p201 = scmp.ne.s32.totalorder %s192, %s193
      %p202 = scmp.eq.s32.totalorder %s30, 0
      %p203 = por %p201, %p202
      %p204 = scmp.ne.s32.totalorder %s192, %s193
      %p205 = scmp.eq.s32.totalorder %s31, 1
      %p206 = por %p204, %p205
      %p208 = scmp.ne.s32.totalorder %s193, %s207
      %p209 = scmp.eq.s32.totalorder %s31, 0
      %p210 = por %p208, %p209
      %s212 = sadd.s32 %s211, 1
      %p215 = scmp.eq.s32.totalorder %s25, 1
      %p216 = scmp.ne.s32.totalorder %s211, %s213
      %p217 = scmp.eq.s32.totalorder %s25, 0
      %p218 = por %p216, %p217
      %p219 = scmp.ne.s32.totalorder %s211, %s213
      %p220 = scmp.eq.s32.totalorder %s30, 1
      %p221 = por %p219, %p220
      %p222 = scmp.ne.s32.totalorder %s213, %s214
      %p223 = scmp.eq.s32.totalorder %s30, 0
      %p224 = por %p222, %p223
      %p225 = scmp.ne.s32.totalorder %s213, %s214
      %p226 = scmp.eq.s32.totalorder %s31, 1
      %p227 = por %p225, %p226
      %p229 = scmp.ne.s32.totalorder %s214, %s228
      %p230 = scmp.eq.s32.totalorder %s31, 0
      %p231 = por %p229, %p230
      %s233 = sadd.s32 %s232, 1
      %p236 = scmp.eq.s32.totalorder %s25, 1
      %p237 = scmp.ne.s32.totalorder %s232, %s234
      %p238 = scmp.eq.s32.totalorder %s25, 0
      %p239 = por %p237, %p238
      %p240 = scmp.ne.s32.totalorder %s232, %s234
      %p241 = scmp.eq.s32.totalorder %s30, 1
      %p242 = por %p240, %p241
      %p243 = scmp.ne.s32.totalorder %s234, %s235
      %p244 = scmp.eq.s32.totalorder %s30, 0
      %p245 = por %p243, %p244
      %p246 = scmp.ne.s32.totalorder %s234, %s235
      %p247 = scmp.eq.s32.totalorder %s31, 1
      %p248 = por %p246, %p247
      %p250 = scmp.ne.s32.totalorder %s235, %s249
      %p251 = scmp.eq.s32.totalorder %s31, 0
      %p252 = por %p250, %p251
      %s254 = sadd.s32 %s253, 1
      %p257 = scmp.eq.s32.totalorder %s25, 1
      %p258 = scmp.ne.s32.totalorder %s253, %s255
      %p259 = scmp.eq.s32.totalorder %s25, 0
      %p260 = por %p258, %p259
      %p261 = scmp.ne.s32.totalorder %s253, %s255
      %p262 = scmp.eq.s32.totalorder %s30, 1
      %p263 = por %p261, %p262
      %p264 = scmp.ne.s32.totalorder %s255, %s256
      %p265 = scmp.eq.s32.totalorder %s30, 0
      %p266 = por %p264, %p265
      %p267 = scmp.ne.s32.totalorder %s255, %s256
      %p268 = scmp.eq.s32.totalorder %s31, 1
      %p269 = por %p267, %p268
      %p271 = scmp.ne.s32.totalorder %s256, %s270
      %p272 = scmp.eq.s32.totalorder %s31, 0
      %p273 = por %p271, %p272
      %s275 = sadd.s32 %s274, 1
      %p278 = scmp.eq.s32.totalorder %s25, 1
      %p279 = scmp.ne.s32.totalorder %s274, %s276
      %p280 = scmp.eq.s32.totalorder %s25, 0
      %p281 = por %p279, %p280
      %p282 = scmp.ne.s32.totalorder %s274, %s276
      %p283 = scmp.eq.s32.totalorder %s30, 1
      %p284 = por %p282, %p283
      %p285 = scmp.ne.s32.totalorder %s276, %s277
      %p286 = scmp.eq.s32.totalorder %s30, 0
      %p287 = por %p285, %p286
      %p288 = scmp.ne.s32.totalorder %s276, %s277
      %p289 = scmp.eq.s32.totalorder %s31, 1
      %p290 = por %p288, %p289
      %p292 = scmp.ne.s32.totalorder %s277, %s291
      %p293 = scmp.eq.s32.totalorder %s31, 0
      %p294 = por %p292, %p293
      %s295 = ssub.s32 %s25, %s32
      %p296 = scmp.eq.s32.totalorder %s295, 0
      %s298 = sadd.s32 %s297, 1
      %s299 = scalar_select %p296, %s297, %s298
      %p302 = pneg %p296
      %p303 = scmp.eq.s32.totalorder %s25, 1
      %p304 = por %p302, %p303
      %p305 = scmp.ne.s32.totalorder %s297, %s300
      %p306 = scmp.eq.s32.totalorder %s25, 0
      %p307 = por %p305, %p306
      %p308 = scmp.ne.s32.totalorder %s297, %s300
      %p309 = scmp.eq.s32.totalorder %s30, 1
      %p310 = por %p308, %p309
      %p311 = scmp.ne.s32.totalorder %s300, %s301
      %p312 = scmp.eq.s32.totalorder %s30, 0
      %p313 = por %p311, %p312
      %p314 = scmp.ne.s32.totalorder %s300, %s301
      %p315 = scmp.eq.s32.totalorder %s31, 1
      %p316 = por %p314, %p315
      %p318 = scmp.ne.s32.totalorder %s301, %s317
      %p319 = scmp.eq.s32.totalorder %s31, 0
      %p320 = por %p318, %p319
      %s321 = ssub.s32 %s25, %s32
      %p322 = scmp.eq.s32.totalorder %s321, 0
      %s324 = sadd.s32 %s323, 1
      %s325 = scalar_select %p322, %s323, %s324
      %p328 = pneg %p322
      %p329 = scmp.eq.s32.totalorder %s25, 1
      %p330 = por %p328, %p329
      %p331 = scmp.ne.s32.totalorder %s323, %s326
      %p332 = scmp.eq.s32.totalorder %s25, 0
      %p333 = por %p331, %p332
      %p334 = scmp.ne.s32.totalorder %s323, %s326
      %p335 = scmp.eq.s32.totalorder %s30, 1
      %p336 = por %p334, %p335
      %p337 = scmp.ne.s32.totalorder %s326, %s327
      %p338 = scmp.eq.s32.totalorder %s30, 0
      %p339 = por %p337, %p338
      %p340 = scmp.ne.s32.totalorder %s326, %s327
      %p341 = scmp.eq.s32.totalorder %s31, 1
      %p342 = por %p340, %p341
      %p344 = scmp.ne.s32.totalorder %s327, %s343
      %p345 = scmp.eq.s32.totalorder %s31, 0
      %p346 = por %p344, %p345
      %p347 = scmp.le.s32.totalorder 1, %s25
      %p348 = scmp.lt.s32.totalorder %s25, 3
      %p349 = pnand %p347, %p348
      %p350 = pneg %p349
      // Predicated region
      $region9: #{discriminator_forward.1} parent=5 // pred_check
        _
      $region10: #{discriminator_forward.1} parent=5 // pred_check_branch
        %352 = sbr.rel (%p349) target = $region12
      $region11: #{discriminator_forward.1} parent=5 // pred_region
        %s353 = ssub.s32 %s25, 1
        // Predicated region
        $region13: #{discriminator_forward.1} parent=11 // pred_check
          %p354 = pneg %p98
        $region14: #{discriminator_forward.1} parent=11 // pred_check_branch
          %356 = sbr.rel (%p354) target = $region16
        $region15: #{discriminator_forward.1} parent=11 // pred_region
          _
        $region16: #{discriminator_forward.1} parent=11 // pred_fallthru
          _
        // Predicated region
        $region17: #{discriminator_forward.1} parent=11 // pred_check
          %p357 = pneg %p119
        $region18: #{discriminator_forward.1} parent=11 // pred_check_branch
          %359 = sbr.rel (%p357) target = $region20
        $region19: #{discriminator_forward.1} parent=11 // pred_region
          _
        $region20: #{discriminator_forward.1} parent=11 // pred_fallthru
          _
        // Predicated region
        $region21: #{discriminator_forward.1} parent=11 // pred_check
          %p360 = pneg %p140
        $region22: #{discriminator_forward.1} parent=11 // pred_check_branch
          %362 = sbr.rel (%p360) target = $region24
        $region23: #{discriminator_forward.1} parent=11 // pred_region
          _
        $region24: #{discriminator_forward.1} parent=11 // pred_fallthru
          _
        // Predicated region
        $region25: #{discriminator_forward.1} parent=11 // pred_check
          %p363 = pneg %p161
        $region26: #{discriminator_forward.1} parent=11 // pred_check_branch
          %365 = sbr.rel (%p363) target = $region28
        $region27: #{discriminator_forward.1} parent=11 // pred_region
          _
        $region28: #{discriminator_forward.1} parent=11 // pred_fallthru
          _
        // Predicated region
        $region29: #{discriminator_forward.1} parent=11 // pred_check
          %p366 = pneg %p182
        $region30: #{discriminator_forward.1} parent=11 // pred_check_branch
          %368 = sbr.rel (%p366) target = $region32
        $region31: #{discriminator_forward.1} parent=11 // pred_region
          _
        $region32: #{discriminator_forward.1} parent=11 // pred_fallthru
          _
        // Predicated region
        $region33: #{discriminator_forward.1} parent=11 // pred_check
          %p369 = pneg %p203
        $region34: #{discriminator_forward.1} parent=11 // pred_check_branch
          %371 = sbr.rel (%p369) target = $region36
        $region35: #{discriminator_forward.1} parent=11 // pred_region
          _
        $region36: #{discriminator_forward.1} parent=11 // pred_fallthru
          _
        // Predicated region
        $region37: #{discriminator_forward.1} parent=11 // pred_check
          %p372 = pneg %p224
        $region38: #{discriminator_forward.1} parent=11 // pred_check_branch
          %374 = sbr.rel (%p372) target = $region40
        $region39: #{discriminator_forward.1} parent=11 // pred_region
          _
        $region40: #{discriminator_forward.1} parent=11 // pred_fallthru
          _
        // Predicated region
        $region41: #{discriminator_forward.1} parent=11 // pred_check
          %p375 = pneg %p245
        $region42: #{discriminator_forward.1} parent=11 // pred_check_branch
          %377 = sbr.rel (%p375) target = $region44
        $region43: #{discriminator_forward.1} parent=11 // pred_region
          _
        $region44: #{discriminator_forward.1} parent=11 // pred_fallthru
          _
        // Predicated region
        $region45: #{discriminator_forward.1} parent=11 // pred_check
          %p378 = pneg %p266
        $region46: #{discriminator_forward.1} parent=11 // pred_check_branch
          %380 = sbr.rel (%p378) target = $region48
        $region47: #{discriminator_forward.1} parent=11 // pred_region
          _
        $region48: #{discriminator_forward.1} parent=11 // pred_fallthru
          _
        // Predicated region
        $region49: #{discriminator_forward.1} parent=11 // pred_check
          %p381 = pneg %p287
        $region50: #{discriminator_forward.1} parent=11 // pred_check_branch
          %383 = sbr.rel (%p381) target = $region52
        $region51: #{discriminator_forward.1} parent=11 // pred_region
          _
        $region52: #{discriminator_forward.1} parent=11 // pred_fallthru
          _
      $region12: #{discriminator_forward.1} parent=5 // pred_fallthru
        _
      %p384 = scmp.lt.s32.totalorder %s25, 2
      // Predicated region
      $region53: #{discriminator_forward.1} parent=5 // pred_check
        %p385 = pneg %p384
      $region54: #{discriminator_forward.1} parent=5 // pred_check_branch
        %387 = sbr.rel (%p385) target = $region56
      $region55: #{discriminator_forward.1} parent=5 // pred_region
        // Predicated region
        $region57: #{discriminator_forward.1} parent=55 // pred_check
          %p388 = pneg %p45
        $region58: #{discriminator_forward.1} parent=55 // pred_check_branch
          %390 = sbr.rel (%p388) target = $region60
        $region59: #{discriminator_forward.1} parent=55 // pred_region
          %s391 = sand.u32 %s35, 1
          %s392 = sand.u32 %s35, 1
          %s393 = smul.addr %s392, 32
          %s394 = scalar_lea.vmem [#allocation6], %s393
          %s395 = smul.addr %s25, 4
          %s396 = scalar_lea.vmem %s0, %s395
          // Predicated region
          $region61: #{discriminator_forward.1} parent=59 // pred_check
            _
          $region62: #{discriminator_forward.1} parent=59 // pred_check_branch
            %398 = sbr.rel (0) target = $region64
          $region63: #{discriminator_forward.1} parent=59 // pred_region
            // Predicated region
            $region65: #{discriminator_forward.1} parent=63 // pred_check
              _
            $region66: #{discriminator_forward.1} parent=63 // pred_check_branch
              %400 = sbr.rel target = $region68
            $region67: #{discriminator_forward.1} parent=63 // pred_region
              // Predicated region
              $region80: #{discriminator_forward.1} parent=67 // pred_check
                _
              $region81: #{discriminator_forward.1} parent=67 // pred_check_branch
                %430 = sbr.rel (0) target = $region83
              $region82: #{discriminator_forward.1} parent=67 // pred_region
                loop: start=0, step=1, limit=1
                $region84: #{discriminator_forward.1} parent=82 // loop_pre_header
                  _
                $region85: #{discriminator_forward.1} parent=82 // loop_header
                  %s432 = sphi 0, %s436
                  %p433 = scmp.ge.s32.totalorder %s432, 1
                  %s437 = sphi %s396, %s396
                  %s438 = sphi %s394, %s394
                $region86: #{discriminator_forward.1} parent=82 // loop_header_branch
                  %435 = sbr.rel (%p433) target = $region90
                $region87: #{discriminator_forward.1} parent=82 // loop_body
                  _
                $region88: #{discriminator_forward.1} parent=82 // loop_footer
                  %s436 = sadd.s32 1, %s432
                $region89: #{discriminator_forward.1} parent=82 // loop_footer_branch
                  %431 = sbr.rel target = $region85
                $region90: #{discriminator_forward.1} parent=82 // loop_exit
                  _
                %s440 = ssub.s32 16, 1
                loop: start=0, step=1, limit=1
                $region91: #{discriminator_forward.1} parent=82 // loop_pre_header
                  _
                $region92: #{discriminator_forward.1} parent=82 // loop_header
                  %s442 = sphi 0, %s446
                  %p443 = scmp.ge.s32.totalorder %s442, 1
                  %s447 = sphi %s396, %s396
                  %s448 = sphi %s394, %s394
                $region93: #{discriminator_forward.1} parent=82 // loop_header_branch
                  %445 = sbr.rel (%p443) target = $region97
                $region94: #{discriminator_forward.1} parent=82 // loop_body
                  %v449 = vld [vmem:[%s447] sm:%s440]
                  %450 = vst [vmem:[%s448] sm:%s440] %v449
                  %v451 = vld [vmem:[%s447 + $0x8] sm:%s440]
                  %452 = vst [vmem:[%s448 + $0x4] sm:%s440] %v451
                  %v453 = vld [vmem:[%s447 + $0x10] sm:%s440]
                  %454 = vst [vmem:[%s448 + $0x8] sm:%s440] %v453
                  %v455 = vld [vmem:[%s447 + $0x18] sm:%s440]
                  %456 = vst [vmem:[%s448 + $0xc] sm:%s440] %v455
                  %v457 = vld [vmem:[%s447 + $0x20] sm:%s440]
                  %458 = vst [vmem:[%s448 + $0x10] sm:%s440] %v457
                  %v459 = vld [vmem:[%s447 + $0x28] sm:%s440]
                  %460 = vst [vmem:[%s448 + $0x14] sm:%s440] %v459
                  %v461 = vld [vmem:[%s447 + $0x30] sm:%s440]
                  %462 = vst [vmem:[%s448 + $0x18] sm:%s440] %v461
                  %v463 = vld [vmem:[%s447 + $0x38] sm:%s440]
                  %464 = vst [vmem:[%s448 + $0x1c] sm:%s440] %v463
                $region95: #{discriminator_forward.1} parent=82 // loop_footer
                  %s446 = sadd.s32 1, %s442
                $region96: #{discriminator_forward.1} parent=82 // loop_footer_branch
                  %441 = sbr.rel target = $region92
                $region97: #{discriminator_forward.1} parent=82 // loop_exit
                  _
              $region83: #{discriminator_forward.1} parent=67 // pred_fallthru
                _
            $region68: #{discriminator_forward.1} parent=63 // pred_fallthru
              _
            // Predicated region
            $region69: #{discriminator_forward.1} parent=63 // pred_check
              _
            $region70: #{discriminator_forward.1} parent=63 // pred_check_branch
              %402 = sbr.rel (0) target = $region72
            $region71: #{discriminator_forward.1} parent=63 // pred_region
              %s404 = ssub.s32 16, 1
              loop: start=0, step=1, limit=1
              $region73: #{discriminator_forward.1} parent=71 // loop_pre_header
                _
              $region74: #{discriminator_forward.1} parent=71 // loop_header
                %s406 = sphi 0, %s410
                %p407 = scmp.ge.s32.totalorder %s406, 1
                %s411 = sphi %s396, %s396
                %s412 = sphi %s394, %s394
              $region75: #{discriminator_forward.1} parent=71 // loop_header_branch
                %409 = sbr.rel (%p407) target = $region79
              $region76: #{discriminator_forward.1} parent=71 // loop_body
                %v413 = vld [vmem:[%s411] sm:%s404]
                %414 = vst [vmem:[%s412] sm:%s404] %v413
                %v415 = vld [vmem:[%s411 + $0x8] sm:%s404]
                %416 = vst [vmem:[%s412 + $0x4] sm:%s404] %v415
                %v417 = vld [vmem:[%s411 + $0x10] sm:%s404]
                %418 = vst [vmem:[%s412 + $0x8] sm:%s404] %v417
                %v419 = vld [vmem:[%s411 + $0x18] sm:%s404]
                %420 = vst [vmem:[%s412 + $0xc] sm:%s404] %v419
                %v421 = vld [vmem:[%s411 + $0x20] sm:%s404]
                %422 = vst [vmem:[%s412 + $0x10] sm:%s404] %v421
                %v423 = vld [vmem:[%s411 + $0x28] sm:%s404]
                %424 = vst [vmem:[%s412 + $0x14] sm:%s404] %v423
                %v425 = vld [vmem:[%s411 + $0x30] sm:%s404]
                %426 = vst [vmem:[%s412 + $0x18] sm:%s404] %v425
                %v427 = vld [vmem:[%s411 + $0x38] sm:%s404]
                %428 = vst [vmem:[%s412 + $0x1c] sm:%s404] %v427
              $region77: #{discriminator_forward.1} parent=71 // loop_footer
                %s410 = sadd.s32 1, %s406
              $region78: #{discriminator_forward.1} parent=71 // loop_footer_branch
                %405 = sbr.rel target = $region74
              $region79: #{discriminator_forward.1} parent=71 // loop_exit
                _
            $region72: #{discriminator_forward.1} parent=63 // pred_fallthru
              _
          $region64: #{discriminator_forward.1} parent=59 // pred_fallthru
            _
          %465 = vnop
        $region60: #{discriminator_forward.1} parent=55 // pred_fallthru
          _
        // Predicated region
        $region98: #{discriminator_forward.1} parent=55 // pred_check
          %p466 = pneg %p71
        $region99: #{discriminator_forward.1} parent=55 // pred_check_branch
          %468 = sbr.rel (%p466) target = $region101
        $region100: #{discriminator_forward.1} parent=55 // pred_region
          %s469 = sand.u32 %s61, 1
          %s470 = sand.u32 %s61, 1
          %s471 = smul.addr %s470, 32
          %s472 = scalar_lea.vmem [#allocation7], %s471
          %s473 = smul.addr %s25, 4
          %s474 = scalar_lea.vmem %s1, %s473
          // Predicated region
          $region102: #{discriminator_forward.1} parent=100 // pred_check
            _
          $region103: #{discriminator_forward.1} parent=100 // pred_check_branch
            %476 = sbr.rel (0) target = $region105
          $region104: #{discriminator_forward.1} parent=100 // pred_region
            // Predicated region
            $region106: #{discriminator_forward.1} parent=104 // pred_check
              _
            $region107: #{discriminator_forward.1} parent=104 // pred_check_branch
              %478 = sbr.rel target = $region109
            $region108: #{discriminator_forward.1} parent=104 // pred_region
              // Predicated region
              $region121: #{discriminator_forward.1} parent=108 // pred_check
                _
              $region122: #{discriminator_forward.1} parent=108 // pred_check_branch
                %508 = sbr.rel (0) target = $region124
              $region123: #{discriminator_forward.1} parent=108 // pred_region
                loop: start=0, step=1, limit=1
                $region125: #{discriminator_forward.1} parent=123 // loop_pre_header
                  _
                $region126: #{discriminator_forward.1} parent=123 // loop_header
                  %s510 = sphi 0, %s514
                  %p511 = scmp.ge.s32.totalorder %s510, 1
                  %s515 = sphi %s474, %s474
                  %s516 = sphi %s472, %s472
                $region127: #{discriminator_forward.1} parent=123 // loop_header_branch
                  %513 = sbr.rel (%p511) target = $region131
                $region128: #{discriminator_forward.1} parent=123 // loop_body
                  _
                $region129: #{discriminator_forward.1} parent=123 // loop_footer
                  %s514 = sadd.s32 1, %s510
                $region130: #{discriminator_forward.1} parent=123 // loop_footer_branch
                  %509 = sbr.rel target = $region126
                $region131: #{discriminator_forward.1} parent=123 // loop_exit
                  _
                %s518 = ssub.s32 16, 1
                loop: start=0, step=1, limit=1
                $region132: #{discriminator_forward.1} parent=123 // loop_pre_header
                  _
                $region133: #{discriminator_forward.1} parent=123 // loop_header
                  %s520 = sphi 0, %s524
                  %p521 = scmp.ge.s32.totalorder %s520, 1
                  %s525 = sphi %s474, %s474
                  %s526 = sphi %s472, %s472
                $region134: #{discriminator_forward.1} parent=123 // loop_header_branch
                  %523 = sbr.rel (%p521) target = $region138
                $region135: #{discriminator_forward.1} parent=123 // loop_body
                  %v527 = vld [vmem:[%s525] sm:%s518]
                  %528 = vst [vmem:[%s526] sm:%s518] %v527
                  %v529 = vld [vmem:[%s525 + $0x8] sm:%s518]
                  %530 = vst [vmem:[%s526 + $0x4] sm:%s518] %v529
                  %v531 = vld [vmem:[%s525 + $0x10] sm:%s518]
                  %532 = vst [vmem:[%s526 + $0x8] sm:%s518] %v531
                  %v533 = vld [vmem:[%s525 + $0x18] sm:%s518]
                  %534 = vst [vmem:[%s526 + $0xc] sm:%s518] %v533
                  %v535 = vld [vmem:[%s525 + $0x20] sm:%s518]
                  %536 = vst [vmem:[%s526 + $0x10] sm:%s518] %v535
                  %v537 = vld [vmem:[%s525 + $0x28] sm:%s518]
                  %538 = vst [vmem:[%s526 + $0x14] sm:%s518] %v537
                  %v539 = vld [vmem:[%s525 + $0x30] sm:%s518]
                  %540 = vst [vmem:[%s526 + $0x18] sm:%s518] %v539
                  %v541 = vld [vmem:[%s525 + $0x38] sm:%s518]
                  %542 = vst [vmem:[%s526 + $0x1c] sm:%s518] %v541
                $region136: #{discriminator_forward.1} parent=123 // loop_footer
                  %s524 = sadd.s32 1, %s520
                $region137: #{discriminator_forward.1} parent=123 // loop_footer_branch
                  %519 = sbr.rel target = $region133
                $region138: #{discriminator_forward.1} parent=123 // loop_exit
                  _
              $region124: #{discriminator_forward.1} parent=108 // pred_fallthru
                _
            $region109: #{discriminator_forward.1} parent=104 // pred_fallthru
              _
            // Predicated region
            $region110: #{discriminator_forward.1} parent=104 // pred_check
              _
            $region111: #{discriminator_forward.1} parent=104 // pred_check_branch
              %480 = sbr.rel (0) target = $region113
            $region112: #{discriminator_forward.1} parent=104 // pred_region
              %s482 = ssub.s32 16, 1
              loop: start=0, step=1, limit=1
              $region114: #{discriminator_forward.1} parent=112 // loop_pre_header
                _
              $region115: #{discriminator_forward.1} parent=112 // loop_header
                %s484 = sphi 0, %s488
                %p485 = scmp.ge.s32.totalorder %s484, 1
                %s489 = sphi %s474, %s474
                %s490 = sphi %s472, %s472
              $region116: #{discriminator_forward.1} parent=112 // loop_header_branch
                %487 = sbr.rel (%p485) target = $region120
              $region117: #{discriminator_forward.1} parent=112 // loop_body
                %v491 = vld [vmem:[%s489] sm:%s482]
                %492 = vst [vmem:[%s490] sm:%s482] %v491
                %v493 = vld [vmem:[%s489 + $0x8] sm:%s482]
                %494 = vst [vmem:[%s490 + $0x4] sm:%s482] %v493
                %v495 = vld [vmem:[%s489 + $0x10] sm:%s482]
                %496 = vst [vmem:[%s490 + $0x8] sm:%s482] %v495
                %v497 = vld [vmem:[%s489 + $0x18] sm:%s482]
                %498 = vst [vmem:[%s490 + $0xc] sm:%s482] %v497
                %v499 = vld [vmem:[%s489 + $0x20] sm:%s482]
                %500 = vst [vmem:[%s490 + $0x10] sm:%s482] %v499
                %v501 = vld [vmem:[%s489 + $0x28] sm:%s482]
                %502 = vst [vmem:[%s490 + $0x14] sm:%s482] %v501
                %v503 = vld [vmem:[%s489 + $0x30] sm:%s482]
                %504 = vst [vmem:[%s490 + $0x18] sm:%s482] %v503
                %v505 = vld [vmem:[%s489 + $0x38] sm:%s482]
                %506 = vst [vmem:[%s490 + $0x1c] sm:%s482] %v505
              $region118: #{discriminator_forward.1} parent=112 // loop_footer
                %s488 = sadd.s32 1, %s484
              $region119: #{discriminator_forward.1} parent=112 // loop_footer_branch
                %483 = sbr.rel target = $region115
              $region120: #{discriminator_forward.1} parent=112 // loop_exit
                _
            $region113: #{discriminator_forward.1} parent=104 // pred_fallthru
              _
          $region105: #{discriminator_forward.1} parent=100 // pred_fallthru
            _
          %543 = vnop
        $region101: #{discriminator_forward.1} parent=55 // pred_fallthru
          _
      $region56: #{discriminator_forward.1} parent=5 // pred_fallthru
        _
      %p544 = scmp.le.s32.totalorder 1, %s25
      %p545 = scmp.lt.s32.totalorder %s25, 3
      %p546 = pnand %p544, %p545
      %p547 = pneg %p546
      // Predicated region
      $region139: #{discriminator_forward.1} parent=5 // pred_check
        _
      $region140: #{discriminator_forward.1} parent=5 // pred_check_branch
        %549 = sbr.rel (%p546) target = $region142
      $region141: #{discriminator_forward.1} parent=5 // pred_region
        %s550 = ssub.s32 %s25, 1
        %s551 = sand.u32 %s38, 1
        %s552 = sand.u32 %s38, 1
        %s553 = smul.addr %s552, 32
        %s554 = scalar_lea.vmem [#allocation6], %s553
        // Predicated region
        $region143: #{discriminator_forward.1} parent=141 // pred_check
          %p555 = pneg %p51
        $region144: #{discriminator_forward.1} parent=141 // pred_check_branch
          %557 = sbr.rel (%p555) target = $region146
        $region145: #{discriminator_forward.1} parent=141 // pred_region
          _
        $region146: #{discriminator_forward.1} parent=141 // pred_fallthru
          _
        %s558 = sand.u32 %s64, 1
        %s559 = sand.u32 %s64, 1
        %s560 = smul.addr %s559, 32
        %s561 = scalar_lea.vmem [#allocation7], %s560
        // Predicated region
        $region147: #{discriminator_forward.1} parent=141 // pred_check
          %p562 = pneg %p77
        $region148: #{discriminator_forward.1} parent=141 // pred_check_branch
          %564 = sbr.rel (%p562) target = $region150
        $region149: #{discriminator_forward.1} parent=141 // pred_region
          _
        $region150: #{discriminator_forward.1} parent=141 // pred_fallthru
          _
        %s565 = sand.u32 %s38, 1
        %s566 = sand.u32 %s38, 1
        %s567 = smul.addr %s566, 32
        %s568 = scalar_lea.vmem [#allocation6], %s567
        %p569 = pneg %p51
        %p570 = pneg %p48
        %s571 = sand.u32 %s64, 1
        %s572 = sand.u32 %s64, 1
        %s573 = smul.addr %s572, 32
        %s574 = scalar_lea.vmem [#allocation7], %s573
        %p575 = pneg %p77
        %p576 = pneg %p74
        %p577 = pneg %p98
        %p578 = pneg %p95
        %p579 = pneg %p119
        %p580 = pneg %p116
        %p581 = pneg %p140
        %p582 = pneg %p137
        %p583 = pneg %p161
        %p584 = pneg %p158
        %p585 = pneg %p182
        %p586 = pneg %p179
        %p587 = pneg %p203
        %p588 = pneg %p200
        %p589 = pneg %p224
        %p590 = pneg %p221
        %p591 = pneg %p245
        %p592 = pneg %p242
        %p593 = pneg %p266
        %p594 = pneg %p263
        %p595 = pneg %p287
        %p596 = pneg %p284
        %p597 = pneg %p313
        %p598 = pneg %p310
        %p599 = scmp.lt.s32.totalorder %s30, 1
        %s600 = scalar_select %p599, %s30, 1
        %s601 = smul.addr %s600, 8
        %s602 = scalar_lea.vmem %s12, %s601
        %p603 = pneg %p339
        %p604 = pneg %p336
        %s605 = sand.u32 %s326, 1
        %s606 = scalar_lea.sflag [#allocation9], %s605
        %s607 = sand.u32 %s326, 1
        %s608 = smul.addr %s607, 8
        %s609 = scalar_lea.vmem [#allocation8], %s608
        %p610 = scmp.lt.s32.totalorder %s30, 1
        %s611 = scalar_select %p610, %s30, 1
        %s612 = smul.addr %s611, 8
        %s613 = scalar_lea.vmem %s12, %s612
        %v615 = vld [vmem:[%s554] sm:$0xf]
        %v616 = vld [vmem:[%s554 + $0x4] sm:$0xf]
        %v617 = vld [vmem:[%s554 + $0x8] sm:$0xf]
        %v618 = vld [vmem:[%s554 + $0xc] sm:$0xf]
        %v619 = vld [vmem:[%s554 + $0x10] sm:$0xf]
        %v620 = vld [vmem:[%s554 + $0x14] sm:$0xf]
        %v621 = vld [vmem:[%s554 + $0x18] sm:$0xf]
        %v622 = vld [vmem:[%s554 + $0x1c] sm:$0xf]
        %v623 = vld [vmem:[%s561] sm:$0xf]
        %v624 = vld [vmem:[%s561 + $0x4] sm:$0xf]
        %v625 = vld [vmem:[%s561 + $0x8] sm:$0xf]
        %v626 = vld [vmem:[%s561 + $0xc] sm:$0xf]
        %v627 = vld [vmem:[%s561 + $0x10] sm:$0xf]
        %v628 = vld [vmem:[%s561 + $0x14] sm:$0xf]
        %v629 = vld [vmem:[%s561 + $0x18] sm:$0xf]
        %v630 = vld [vmem:[%s561 + $0x1c] sm:$0xf]
        %v631 = vld [vmem:[%s2] sm:$0xff]
        %v632 = vld [vmem:[%s2 + $0x8] sm:$0xf]
        %v633 = vld [vmem:[%s2 + $0xc] sm:$0xff]
        %v634 = vld [vmem:[%s2 + $0x14] sm:$0xf]
        %v635 = vld [vmem:[%s2 + $0x18] sm:$0xff]
        %v636 = vld [vmem:[%s2 + $0x20] sm:$0xf]
        %v637 = vld [vmem:[%s2 + $0x24] sm:$0xff]
        %v638 = vld [vmem:[%s2 + $0x2c] sm:$0xf]
        %v639 = vld [vmem:[%s2 + $0x30] sm:$0xff]
        %v640 = vld [vmem:[%s2 + $0x38] sm:$0xf]
        %v641 = vld [vmem:[%s2 + $0x3c] sm:$0xff]
        %v642 = vld [vmem:[%s2 + $0x44] sm:$0xf]
        %v643 = vld [vmem:[%s2 + $0x48] sm:$0xff]
        %v644 = vld [vmem:[%s2 + $0x50] sm:$0xf]
        %v645 = vld [vmem:[%s2 + $0x54] sm:$0xff]
        %v646 = vld [vmem:[%s2 + $0x5c] sm:$0xf]
        %v647 = vld [vmem:[%s2 + $0x60] sm:$0xff]
        %v648 = vld [vmem:[%s2 + $0x68] sm:$0xf]
        %v649 = vld [vmem:[%s2 + $0x6c] sm:$0xff]
        %v650 = vld [vmem:[%s2 + $0x74] sm:$0xf]
        %v651 = vld [vmem:[%s2 + $0x78] sm:$0xff]
        %v652 = vld [vmem:[%s2 + $0x80] sm:$0xf]
        %v653 = vld [vmem:[%s2 + $0x84] sm:$0xff]
        %v654 = vld [vmem:[%s2 + $0x8c] sm:$0xf]
        %v655 = vld [vmem:[%s2 + $0x90] sm:$0xff]
        %v656 = vld [vmem:[%s2 + $0x98] sm:$0xf]
        %v657 = vld [vmem:[%s2 + $0x9c] sm:$0xff]
        %v658 = vld [vmem:[%s2 + $0xa4] sm:$0xf]
        %v659 = vld [vmem:[%s2 + $0xa8] sm:$0xff]
        %v660 = vld [vmem:[%s2 + $0xb0] sm:$0xf]
        %v661 = vld [vmem:[%s2 + $0xb4] sm:$0xff]
        %v662 = vld [vmem:[%s2 + $0xbc] sm:$0xf]
        %v663 = vld [vmem:[%s4] sm:$0x7]
        %v665 = vperm.slane %v663, 0
        %v666 = vperm.slane %v663, 1
        %v667 = vperm.slane %v663, 2
        %v679 = vunpack.c.l.b16 %v615
        %v680 = vunpack.c.l.b16 %v616
        %v681 = vunpack.c.l.b16 %v617
        %v682 = vunpack.c.l.b16 %v618
        %v683 = vunpack.c.l.b16 %v619
        %v684 = vunpack.c.l.b16 %v620
        %v685 = vunpack.c.l.b16 %v621
        %v686 = vunpack.c.l.b16 %v622
        %v687 = vpack.c.b16 %v680, %v679
        %v688 = vpack.c.b16 %v682, %v681
        %v689 = vpack.c.b16 %v684, %v683
        %v690 = vpack.c.b16 %v686, %v685
        %v727 = vunpack.c.l.b16 %v631
        %v728 = vunpack.c.h.b16 %v631
        %v729 = vunpack.c.l.b16 %v632
        %v730 = vunpack.c.l.b16 %v633
        %v731 = vunpack.c.h.b16 %v633
        %v732 = vunpack.c.l.b16 %v634
        %v733 = vunpack.c.l.b16 %v635
        %v734 = vunpack.c.h.b16 %v635
        %v735 = vunpack.c.l.b16 %v636
        %v736 = vunpack.c.l.b16 %v637
        %v737 = vunpack.c.h.b16 %v637
        %v738 = vunpack.c.l.b16 %v638
        %v739 = vunpack.c.l.b16 %v639
        %v740 = vunpack.c.h.b16 %v639
        %v741 = vunpack.c.l.b16 %v640
        %v742 = vunpack.c.l.b16 %v641
        %v743 = vunpack.c.h.b16 %v641
        %v744 = vunpack.c.l.b16 %v642
        %v745 = vunpack.c.l.b16 %v643
        %v746 = vunpack.c.h.b16 %v643
        %v747 = vunpack.c.l.b16 %v644
        %v748 = vunpack.c.l.b16 %v645
        %v749 = vunpack.c.h.b16 %v645
        %v750 = vunpack.c.l.b16 %v646
        %v751 = vunpack.c.l.b16 %v647
        %v752 = vunpack.c.h.b16 %v647
        %v753 = vunpack.c.l.b16 %v648
        %v754 = vunpack.c.l.b16 %v649
        %v755 = vunpack.c.h.b16 %v649
        %v756 = vunpack.c.l.b16 %v650
        %v757 = vunpack.c.l.b16 %v651
        %v758 = vunpack.c.h.b16 %v651
        %v759 = vunpack.c.l.b16 %v652
        %v760 = vunpack.c.l.b16 %v653
        %v761 = vunpack.c.h.b16 %v653
        %v762 = vunpack.c.l.b16 %v654
        %v763 = vunpack.c.l.b16 %v655
        %v764 = vunpack.c.h.b16 %v655
        %v765 = vunpack.c.l.b16 %v656
        %v766 = vunpack.c.l.b16 %v657
        %v767 = vunpack.c.h.b16 %v657
        %v768 = vunpack.c.l.b16 %v658
        %v769 = vunpack.c.l.b16 %v659
        %v770 = vunpack.c.h.b16 %v659
        %v771 = vunpack.c.l.b16 %v660
        %v772 = vunpack.c.l.b16 %v661
        %v773 = vunpack.c.h.b16 %v661
        %v774 = vunpack.c.l.b16 %v662
        %v775 = vpack.c.b16 %v730, %v727
        %v776 = vpack.c.b16 %v731, %v728
        %v777 = vpack.c.b16 %v732, %v729
        %v778 = vpack.c.b16 %v736, %v733
        %v779 = vpack.c.b16 %v737, %v734
        %v780 = vpack.c.b16 %v738, %v735
        %v781 = vpack.c.b16 %v742, %v739
        %v782 = vpack.c.b16 %v743, %v740
        %v783 = vpack.c.b16 %v744, %v741
        %v784 = vpack.c.b16 %v748, %v745
        %v785 = vpack.c.b16 %v749, %v746
        %v786 = vpack.c.b16 %v750, %v747
        %v787 = vpack.c.b16 %v754, %v751
        %v788 = vpack.c.b16 %v755, %v752
        %v789 = vpack.c.b16 %v756, %v753
        %v790 = vpack.c.b16 %v760, %v757
        %v791 = vpack.c.b16 %v761, %v758
        %v792 = vpack.c.b16 %v762, %v759
        %v793 = vpack.c.b16 %v766, %v763
        %v794 = vpack.c.b16 %v767, %v764
        %v795 = vpack.c.b16 %v768, %v765
        %v796 = vpack.c.b16 %v772, %v769
        %v797 = vpack.c.b16 %v773, %v770
        %v798 = vpack.c.b16 %v774, %v771
        %823 = vmatpush.bf16.msra.mxu0 %v796
        %824 = vmatpush.bf16.msra.mxu0 %v793
        %825 = vmatpush.bf16.msra.mxu0 %v790
        %826 = vmatpush.bf16.msra.mxu0 %v787
        %827 = vmatpush.bf16.msra.mxu0 %v784
        %828 = vmatpush.bf16.msra.mxu0 %v781
        %829 = vmatpush.bf16.msra.mxu0 %v778
        %830 = vmatpush.bf16.msra.mxu0 %v775
        %831 = vmatmul.bf16.gmra.mxu0 %v687
        %v832 = vpop.f32.mrf.mxu0
        %v833 = vadd.f32 %v665, %v832
        %v834 = vpop.f32.mrf.mxu0
        %v835 = vadd.f32 %v665, %v834
        %836 = vmatmul.bf16.gmra.mxu0 %v688
        %v837 = vpop.f32.mrf.mxu0
        %v838 = vadd.f32 %v665, %v837
        %v839 = vpop.f32.mrf.mxu0
        %v840 = vadd.f32 %v665, %v839
        %841 = vmatmul.bf16.gmra.mxu0 %v689
        %v842 = vpop.f32.mrf.mxu0
        %v843 = vadd.f32 %v665, %v842
        %v844 = vpop.f32.mrf.mxu0
        %v845 = vadd.f32 %v665, %v844
        %846 = vmatmul.bf16.gmra.mxu0 %v690
        %v847 = vpop.f32.mrf.mxu0
        %v848 = vadd.f32 %v665, %v847
        %v849 = vpop.f32.mrf.mxu0
        %v850 = vadd.f32 %v665, %v849
        %851 = vdwg.mxu0
        %852 = vmatpush.bf16.msra.mxu0 %v797
        %853 = vmatpush.bf16.msra.mxu0 %v794
        %854 = vmatpush.bf16.msra.mxu0 %v791
        %855 = vmatpush.bf16.msra.mxu0 %v788
        %856 = vmatpush.bf16.msra.mxu0 %v785
        %857 = vmatpush.bf16.msra.mxu0 %v782
        %858 = vmatpush.bf16.msra.mxu0 %v779
        %859 = vmatpush.bf16.msra.mxu0 %v776
        %860 = vmatmul.bf16.gmra.mxu0 %v687
        %v861 = vpop.f32.mrf.mxu0
        %v862 = vadd.f32 %v666, %v861
        %v863 = vpop.f32.mrf.mxu0
        %v864 = vadd.f32 %v666, %v863
        %865 = vmatmul.bf16.gmra.mxu0 %v688
        %v866 = vpop.f32.mrf.mxu0
        %v867 = vadd.f32 %v666, %v866
        %v868 = vpop.f32.mrf.mxu0
        %v869 = vadd.f32 %v666, %v868
        %870 = vmatmul.bf16.gmra.mxu0 %v689
        %v871 = vpop.f32.mrf.mxu0
        %v872 = vadd.f32 %v666, %v871
        %v873 = vpop.f32.mrf.mxu0
        %v874 = vadd.f32 %v666, %v873
        %875 = vmatmul.bf16.gmra.mxu0 %v690
        %v876 = vpop.f32.mrf.mxu0
        %v877 = vadd.f32 %v666, %v876
        %v878 = vpop.f32.mrf.mxu0
        %v879 = vadd.f32 %v666, %v878
        %880 = vdwg.mxu0
        %881 = vmatpush.bf16.msra.mxu0 %v798
        %882 = vmatpush.bf16.msra.mxu0 %v795
        %883 = vmatpush.bf16.msra.mxu0 %v792
        %884 = vmatpush.bf16.msra.mxu0 %v789
        %885 = vmatpush.bf16.msra.mxu0 %v786
        %886 = vmatpush.bf16.msra.mxu0 %v783
        %887 = vmatpush.bf16.msra.mxu0 %v780
        %888 = vmatpush.bf16.msra.mxu0 %v777
        %889 = vmatmul.bf16.gmra.mxu0 %v687
        %v890 = vpop.f32.mrf.mxu0
        %v891 = vadd.f32 %v667, %v890
        %v892 = vpop.f32.mrf.mxu0
        %v893 = vadd.f32 %v667, %v892
        %894 = vmatmul.bf16.gmra.mxu0 %v688
        %v895 = vpop.f32.mrf.mxu0
        %v896 = vadd.f32 %v667, %v895
        %v897 = vpop.f32.mrf.mxu0
        %v898 = vadd.f32 %v667, %v897
        %899 = vmatmul.bf16.gmra.mxu0 %v689
        %v900 = vpop.f32.mrf.mxu0
        %v901 = vadd.f32 %v667, %v900
        %v902 = vpop.f32.mrf.mxu0
        %v903 = vadd.f32 %v667, %v902
        %904 = vmatmul.bf16.gmra.mxu0 %v690
        %v905 = vpop.f32.mrf.mxu0
        %v906 = vadd.f32 %v667, %v905
        %v907 = vpop.f32.mrf.mxu0
        %v908 = vadd.f32 %v667, %v907
        %909 = vdwg.mxu0
        %v910 = vld [vmem:[%s6] sm:$0xff]
        %v911 = vld [vmem:[%s6 + $0x8] sm:$0xf]
        %v912 = vld [vmem:[%s6 + $0xc] sm:$0xff]
        %v913 = vld [vmem:[%s6 + $0x14] sm:$0xf]
        %v914 = vld [vmem:[%s6 + $0x18] sm:$0xff]
        %v915 = vld [vmem:[%s6 + $0x20] sm:$0xf]
        %v916 = vld [vmem:[%s6 + $0x24] sm:$0xff]
        %v917 = vld [vmem:[%s6 + $0x2c] sm:$0xf]
        %v918 = vld [vmem:[%s6 + $0x30] sm:$0xff]
        %v919 = vld [vmem:[%s6 + $0x38] sm:$0xf]
        %v920 = vld [vmem:[%s6 + $0x3c] sm:$0xff]
        %v921 = vld [vmem:[%s6 + $0x44] sm:$0xf]
        %v922 = vld [vmem:[%s6 + $0x48] sm:$0xff]
        %v923 = vld [vmem:[%s6 + $0x50] sm:$0xf]
        %v924 = vld [vmem:[%s6 + $0x54] sm:$0xff]
        %v925 = vld [vmem:[%s6 + $0x5c] sm:$0xf]
        %v926 = vld [vmem:[%s6 + $0x60] sm:$0xff]
        %v927 = vld [vmem:[%s6 + $0x68] sm:$0xf]
        %v928 = vld [vmem:[%s6 + $0x6c] sm:$0xff]
        %v929 = vld [vmem:[%s6 + $0x74] sm:$0xf]
        %v930 = vld [vmem:[%s6 + $0x78] sm:$0xff]
        %v931 = vld [vmem:[%s6 + $0x80] sm:$0xf]
        %v932 = vld [vmem:[%s6 + $0x84] sm:$0xff]
        %v933 = vld [vmem:[%s6 + $0x8c] sm:$0xf]
        %v934 = vld [vmem:[%s6 + $0x90] sm:$0xff]
        %v935 = vld [vmem:[%s6 + $0x98] sm:$0xf]
        %v936 = vld [vmem:[%s6 + $0x9c] sm:$0xff]
        %v937 = vld [vmem:[%s6 + $0xa4] sm:$0xf]
        %v938 = vld [vmem:[%s6 + $0xa8] sm:$0xff]
        %v939 = vld [vmem:[%s6 + $0xb0] sm:$0xf]
        %v940 = vld [vmem:[%s6 + $0xb4] sm:$0xff]
        %v941 = vld [vmem:[%s6 + $0xbc] sm:$0xf]
        %v942 = vld [vmem:[%s8] sm:$0x7]
        %v944 = vperm.slane %v942, 0
        %v945 = vperm.slane %v942, 1
        %v946 = vperm.slane %v942, 2
        %v958 = vunpack.c.l.b16 %v623
        %v959 = vunpack.c.l.b16 %v624
        %v960 = vunpack.c.l.b16 %v625
        %v961 = vunpack.c.l.b16 %v626
        %v962 = vunpack.c.l.b16 %v627
        %v963 = vunpack.c.l.b16 %v628
        %v964 = vunpack.c.l.b16 %v629
        %v965 = vunpack.c.l.b16 %v630
        %v966 = vpack.c.b16 %v959, %v958
        %v967 = vpack.c.b16 %v961, %v960
        %v968 = vpack.c.b16 %v963, %v962
        %v969 = vpack.c.b16 %v965, %v964
        %v1006 = vunpack.c.l.b16 %v910
        %v1007 = vunpack.c.h.b16 %v910
        %v1008 = vunpack.c.l.b16 %v911
        %v1009 = vunpack.c.l.b16 %v912
        %v1010 = vunpack.c.h.b16 %v912
        %v1011 = vunpack.c.l.b16 %v913
        %v1012 = vunpack.c.l.b16 %v914
        %v1013 = vunpack.c.h.b16 %v914
        %v1014 = vunpack.c.l.b16 %v915
        %v1015 = vunpack.c.l.b16 %v916
        %v1016 = vunpack.c.h.b16 %v916
        %v1017 = vunpack.c.l.b16 %v917
        %v1018 = vunpack.c.l.b16 %v918
        %v1019 = vunpack.c.h.b16 %v918
        %v1020 = vunpack.c.l.b16 %v919
        %v1021 = vunpack.c.l.b16 %v920
        %v1022 = vunpack.c.h.b16 %v920
        %v1023 = vunpack.c.l.b16 %v921
        %v1024 = vunpack.c.l.b16 %v922
        %v1025 = vunpack.c.h.b16 %v922
        %v1026 = vunpack.c.l.b16 %v923
        %v1027 = vunpack.c.l.b16 %v924
        %v1028 = vunpack.c.h.b16 %v924
        %v1029 = vunpack.c.l.b16 %v925
        %v1030 = vunpack.c.l.b16 %v926
        %v1031 = vunpack.c.h.b16 %v926
        %v1032 = vunpack.c.l.b16 %v927
        %v1033 = vunpack.c.l.b16 %v928
        %v1034 = vunpack.c.h.b16 %v928
        %v1035 = vunpack.c.l.b16 %v929
        %v1036 = vunpack.c.l.b16 %v930
        %v1037 = vunpack.c.h.b16 %v930
        %v1038 = vunpack.c.l.b16 %v931
        %v1039 = vunpack.c.l.b16 %v932
        %v1040 = vunpack.c.h.b16 %v932
        %v1041 = vunpack.c.l.b16 %v933
        %v1042 = vunpack.c.l.b16 %v934
        %v1043 = vunpack.c.h.b16 %v934
        %v1044 = vunpack.c.l.b16 %v935
        %v1045 = vunpack.c.l.b16 %v936
        %v1046 = vunpack.c.h.b16 %v936
        %v1047 = vunpack.c.l.b16 %v937
        %v1048 = vunpack.c.l.b16 %v938
        %v1049 = vunpack.c.h.b16 %v938
        %v1050 = vunpack.c.l.b16 %v939
        %v1051 = vunpack.c.l.b16 %v940
        %v1052 = vunpack.c.h.b16 %v940
        %v1053 = vunpack.c.l.b16 %v941
        %v1054 = vpack.c.b16 %v1009, %v1006
        %v1055 = vpack.c.b16 %v1010, %v1007
        %v1056 = vpack.c.b16 %v1011, %v1008
        %v1057 = vpack.c.b16 %v1015, %v1012
        %v1058 = vpack.c.b16 %v1016, %v1013
        %v1059 = vpack.c.b16 %v1017, %v1014
        %v1060 = vpack.c.b16 %v1021, %v1018
        %v1061 = vpack.c.b16 %v1022, %v1019
        %v1062 = vpack.c.b16 %v1023, %v1020
        %v1063 = vpack.c.b16 %v1027, %v1024
        %v1064 = vpack.c.b16 %v1028, %v1025
        %v1065 = vpack.c.b16 %v1029, %v1026
        %v1066 = vpack.c.b16 %v1033, %v1030
        %v1067 = vpack.c.b16 %v1034, %v1031
        %v1068 = vpack.c.b16 %v1035, %v1032
        %v1069 = vpack.c.b16 %v1039, %v1036
        %v1070 = vpack.c.b16 %v1040, %v1037
        %v1071 = vpack.c.b16 %v1041, %v1038
        %v1072 = vpack.c.b16 %v1045, %v1042
        %v1073 = vpack.c.b16 %v1046, %v1043
        %v1074 = vpack.c.b16 %v1047, %v1044
        %v1075 = vpack.c.b16 %v1051, %v1048
        %v1076 = vpack.c.b16 %v1052, %v1049
        %v1077 = vpack.c.b16 %v1053, %v1050
        %1102 = vmatpush.bf16.msra.mxu0 %v1075
        %1103 = vmatpush.bf16.msra.mxu0 %v1072
        %1104 = vmatpush.bf16.msra.mxu0 %v1069
        %1105 = vmatpush.bf16.msra.mxu0 %v1066
        %1106 = vmatpush.bf16.msra.mxu0 %v1063
        %1107 = vmatpush.bf16.msra.mxu0 %v1060
        %1108 = vmatpush.bf16.msra.mxu0 %v1057
        %1109 = vmatpush.bf16.msra.mxu0 %v1054
        %1110 = vmatmul.bf16.gmra.mxu0 %v966
        %v1111 = vpop.f32.mrf.mxu0
        %v1112 = vadd.f32 %v944, %v1111
        %v1113 = vpop.f32.mrf.mxu0
        %v1114 = vadd.f32 %v944, %v1113
        %1115 = vmatmul.bf16.gmra.mxu0 %v967
        %v1116 = vpop.f32.mrf.mxu0
        %v1117 = vadd.f32 %v944, %v1116
        %v1118 = vpop.f32.mrf.mxu0
        %v1119 = vadd.f32 %v944, %v1118
        %1120 = vmatmul.bf16.gmra.mxu0 %v968
        %v1121 = vpop.f32.mrf.mxu0
        %v1122 = vadd.f32 %v944, %v1121
        %v1123 = vpop.f32.mrf.mxu0
        %v1124 = vadd.f32 %v944, %v1123
        %1125 = vmatmul.bf16.gmra.mxu0 %v969
        %v1126 = vpop.f32.mrf.mxu0
        %v1127 = vadd.f32 %v944, %v1126
        %v1128 = vpop.f32.mrf.mxu0
        %v1129 = vadd.f32 %v944, %v1128
        %1130 = vdwg.mxu0
        %1131 = vmatpush.bf16.msra.mxu0 %v1076
        %1132 = vmatpush.bf16.msra.mxu0 %v1073
        %1133 = vmatpush.bf16.msra.mxu0 %v1070
        %1134 = vmatpush.bf16.msra.mxu0 %v1067
        %1135 = vmatpush.bf16.msra.mxu0 %v1064
        %1136 = vmatpush.bf16.msra.mxu0 %v1061
        %1137 = vmatpush.bf16.msra.mxu0 %v1058
        %1138 = vmatpush.bf16.msra.mxu0 %v1055
        %1139 = vmatmul.bf16.gmra.mxu0 %v966
        %v1140 = vpop.f32.mrf.mxu0
        %v1141 = vadd.f32 %v945, %v1140
        %v1142 = vpop.f32.mrf.mxu0
        %v1143 = vadd.f32 %v945, %v1142
        %1144 = vmatmul.bf16.gmra.mxu0 %v967
        %v1145 = vpop.f32.mrf.mxu0
        %v1146 = vadd.f32 %v945, %v1145
        %v1147 = vpop.f32.mrf.mxu0
        %v1148 = vadd.f32 %v945, %v1147
        %1149 = vmatmul.bf16.gmra.mxu0 %v968
        %v1150 = vpop.f32.mrf.mxu0
        %v1151 = vadd.f32 %v945, %v1150
        %v1152 = vpop.f32.mrf.mxu0
        %v1153 = vadd.f32 %v945, %v1152
        %1154 = vmatmul.bf16.gmra.mxu0 %v969
        %v1155 = vpop.f32.mrf.mxu0
        %v1156 = vadd.f32 %v945, %v1155
        %v1157 = vpop.f32.mrf.mxu0
        %v1158 = vadd.f32 %v945, %v1157
        %1159 = vdwg.mxu0
        %1160 = vmatpush.bf16.msra.mxu0 %v1077
        %1161 = vmatpush.bf16.msra.mxu0 %v1074
        %1162 = vmatpush.bf16.msra.mxu0 %v1071
        %1163 = vmatpush.bf16.msra.mxu0 %v1068
        %1164 = vmatpush.bf16.msra.mxu0 %v1065
        %1165 = vmatpush.bf16.msra.mxu0 %v1062
        %1166 = vmatpush.bf16.msra.mxu0 %v1059
        %1167 = vmatpush.bf16.msra.mxu0 %v1056
        %1168 = vmatmul.bf16.gmra.mxu0 %v966
        %v1169 = vpop.f32.mrf.mxu0
        %v1170 = vadd.f32 %v946, %v1169
        %v1171 = vpop.f32.mrf.mxu0
        %v1172 = vadd.f32 %v946, %v1171
        %1173 = vmatmul.bf16.gmra.mxu0 %v967
        %v1174 = vpop.f32.mrf.mxu0
        %v1175 = vadd.f32 %v946, %v1174
        %v1176 = vpop.f32.mrf.mxu0
        %v1177 = vadd.f32 %v946, %v1176
        %1178 = vmatmul.bf16.gmra.mxu0 %v968
        %v1179 = vpop.f32.mrf.mxu0
        %v1180 = vadd.f32 %v946, %v1179
        %v1181 = vpop.f32.mrf.mxu0
        %v1182 = vadd.f32 %v946, %v1181
        %1183 = vmatmul.bf16.gmra.mxu0 %v969
        %v1184 = vpop.f32.mrf.mxu0
        %v1185 = vadd.f32 %v946, %v1184
        %v1186 = vpop.f32.mrf.mxu0
        %v1187 = vadd.f32 %v946, %v1186
        %1188 = vdwg.mxu0
        %1189 = vst [vmem:[#allocation2] sm:$0xff] %v833
        %1190 = vst [vmem:[#allocation2 + $0x8] sm:$0xff] %v862
        %1191 = vst [vmem:[#allocation2 + $0x10] sm:$0xff] %v891
        %1192 = vst [vmem:[#allocation2 + $0x18] sm:$0xff] %v835
        %1193 = vst [vmem:[#allocation2 + $0x20] sm:$0xff] %v864
        %1194 = vst [vmem:[#allocation2 + $0x28] sm:$0xff] %v893
        %1195 = vst [vmem:[#allocation2 + $0x30] sm:$0xff] %v838
        %1196 = vst [vmem:[#allocation2 + $0x38] sm:$0xff] %v867
        %1197 = vst [vmem:[#allocation2 + $0x40] sm:$0xff] %v896
        %1198 = vst [vmem:[#allocation2 + $0x48] sm:$0xff] %v840
        %1199 = vst [vmem:[#allocation2 + $0x50] sm:$0xff] %v869
        %1200 = vst [vmem:[#allocation2 + $0x58] sm:$0xff] %v898
        %1201 = vst [vmem:[#allocation2 + $0x60] sm:$0xff] %v843
        %1202 = vst [vmem:[#allocation2 + $0x68] sm:$0xff] %v872
        %1203 = vst [vmem:[#allocation2 + $0x70] sm:$0xff] %v901
        %1204 = vst [vmem:[#allocation2 + $0x78] sm:$0xff] %v845
        %1205 = vst [vmem:[#allocation2 + $0x80] sm:$0xff] %v874
        %1206 = vst [vmem:[#allocation2 + $0x88] sm:$0xff] %v903
        %1207 = vst [vmem:[#allocation2 + $0x90] sm:$0xff] %v848
        %1208 = vst [vmem:[#allocation2 + $0x98] sm:$0xff] %v877
        %1209 = vst [vmem:[#allocation2 + $0xa0] sm:$0xff] %v906
        %1210 = vst [vmem:[#allocation2 + $0xa8] sm:$0xff] %v850
        %1211 = vst [vmem:[#allocation2 + $0xb0] sm:$0xff] %v879
        %1212 = vst [vmem:[#allocation2 + $0xb8] sm:$0xff] %v908
        %1213 = vst [vmem:[#allocation3] sm:$0xff] %v1112
        %1214 = vst [vmem:[#allocation3 + $0x8] sm:$0xff] %v1141
        %1215 = vst [vmem:[#allocation3 + $0x10] sm:$0xff] %v1170
        %1216 = vst [vmem:[#allocation3 + $0x18] sm:$0xff] %v1114
        %1217 = vst [vmem:[#allocation3 + $0x20] sm:$0xff] %v1143
        %1218 = vst [vmem:[#allocation3 + $0x28] sm:$0xff] %v1172
        %1219 = vst [vmem:[#allocation3 + $0x30] sm:$0xff] %v1117
        %1220 = vst [vmem:[#allocation3 + $0x38] sm:$0xff] %v1146
        %1221 = vst [vmem:[#allocation3 + $0x40] sm:$0xff] %v1175
        %1222 = vst [vmem:[#allocation3 + $0x48] sm:$0xff] %v1119
        %1223 = vst [vmem:[#allocation3 + $0x50] sm:$0xff] %v1148
        %1224 = vst [vmem:[#allocation3 + $0x58] sm:$0xff] %v1177
        %1225 = vst [vmem:[#allocation3 + $0x60] sm:$0xff] %v1122
        %1226 = vst [vmem:[#allocation3 + $0x68] sm:$0xff] %v1151
        %1227 = vst [vmem:[#allocation3 + $0x70] sm:$0xff] %v1180
        %1228 = vst [vmem:[#allocation3 + $0x78] sm:$0xff] %v1124
        %1229 = vst [vmem:[#allocation3 + $0x80] sm:$0xff] %v1153
        %1230 = vst [vmem:[#allocation3 + $0x88] sm:$0xff] %v1182
        %1231 = vst [vmem:[#allocation3 + $0x90] sm:$0xff] %v1127
        %1232 = vst [vmem:[#allocation3 + $0x98] sm:$0xff] %v1156
        %1233 = vst [vmem:[#allocation3 + $0xa0] sm:$0xff] %v1185
        %1234 = vst [vmem:[#allocation3 + $0xa8] sm:$0xff] %v1129
        %1235 = vst [vmem:[#allocation3 + $0xb0] sm:$0xff] %v1158
        %1236 = vst [vmem:[#allocation3 + $0xb8] sm:$0xff] %v1187
        %v1237 = vld [vmem:[%s5] sm:$0x1]
        %v1239 = vperm.slane %v1237, 0
        %v1241 = vld [vmem:[%s9] sm:$0x1]
        %v1243 = vperm.slane %v1241, 0
        %v1245 = vld [vmem:[%s3] sm:$0xff]
        %v1246 = vld [vmem:[%s3 + $0x8] sm:$0xf]
        %v1247 = vld [vmem:[%s3 + $0xc] sm:$0xff]
        %v1248 = vld [vmem:[%s3 + $0x14] sm:$0xf]
        %v1249 = vld [vmem:[%s3 + $0x18] sm:$0xff]
        %v1250 = vld [vmem:[%s3 + $0x20] sm:$0xf]
        %v1251 = vld [vmem:[%s3 + $0x24] sm:$0xff]
        %v1252 = vld [vmem:[%s3 + $0x2c] sm:$0xf]
        %v1253 = vld [vmem:[%s3 + $0x30] sm:$0xff]
        %v1254 = vld [vmem:[%s3 + $0x38] sm:$0xf]
        %v1255 = vld [vmem:[%s3 + $0x3c] sm:$0xff]
        %v1256 = vld [vmem:[%s3 + $0x44] sm:$0xf]
        %v1257 = vld [vmem:[%s3 + $0x48] sm:$0xff]
        %v1258 = vld [vmem:[%s3 + $0x50] sm:$0xf]
        %v1259 = vld [vmem:[%s3 + $0x54] sm:$0xff]
        %v1260 = vld [vmem:[%s3 + $0x5c] sm:$0xf]
        %v1261 = vld [vmem:[%s3 + $0x60] sm:$0xff]
        %v1262 = vld [vmem:[%s3 + $0x68] sm:$0xf]
        %v1263 = vld [vmem:[%s3 + $0x6c] sm:$0xff]
        %v1264 = vld [vmem:[%s3 + $0x74] sm:$0xf]
        %v1265 = vld [vmem:[%s3 + $0x78] sm:$0xff]
        %v1266 = vld [vmem:[%s3 + $0x80] sm:$0xf]
        %v1267 = vld [vmem:[%s3 + $0x84] sm:$0xff]
        %v1268 = vld [vmem:[%s3 + $0x8c] sm:$0xf]
        %v1269 = vld [vmem:[%s3 + $0x90] sm:$0xff]
        %v1270 = vld [vmem:[%s3 + $0x98] sm:$0xf]
        %v1271 = vld [vmem:[%s3 + $0x9c] sm:$0xff]
        %v1272 = vld [vmem:[%s3 + $0xa4] sm:$0xf]
        %v1273 = vld [vmem:[%s3 + $0xa8] sm:$0xff]
        %v1274 = vld [vmem:[%s3 + $0xb0] sm:$0xf]
        %v1275 = vld [vmem:[%s3 + $0xb4] sm:$0xff]
        %v1276 = vld [vmem:[%s3 + $0xbc] sm:$0xf]
        %v1277 = vld [vmem:[%s7] sm:$0xff]
        %v1278 = vld [vmem:[%s7 + $0x8] sm:$0xf]
        %v1279 = vld [vmem:[%s7 + $0xc] sm:$0xff]
        %v1280 = vld [vmem:[%s7 + $0x14] sm:$0xf]
        %v1281 = vld [vmem:[%s7 + $0x18] sm:$0xff]
        %v1282 = vld [vmem:[%s7 + $0x20] sm:$0xf]
        %v1283 = vld [vmem:[%s7 + $0x24] sm:$0xff]
        %v1284 = vld [vmem:[%s7 + $0x2c] sm:$0xf]
        %v1285 = vld [vmem:[%s7 + $0x30] sm:$0xff]
        %v1286 = vld [vmem:[%s7 + $0x38] sm:$0xf]
        %v1287 = vld [vmem:[%s7 + $0x3c] sm:$0xff]
        %v1288 = vld [vmem:[%s7 + $0x44] sm:$0xf]
        %v1289 = vld [vmem:[%s7 + $0x48] sm:$0xff]
        %v1290 = vld [vmem:[%s7 + $0x50] sm:$0xf]
        %v1291 = vld [vmem:[%s7 + $0x54] sm:$0xff]
        %v1292 = vld [vmem:[%s7 + $0x5c] sm:$0xf]
        %v1293 = vld [vmem:[%s7 + $0x60] sm:$0xff]
        %v1294 = vld [vmem:[%s7 + $0x68] sm:$0xf]
        %v1295 = vld [vmem:[%s7 + $0x6c] sm:$0xff]
        %v1296 = vld [vmem:[%s7 + $0x74] sm:$0xf]
        %v1297 = vld [vmem:[%s7 + $0x78] sm:$0xff]
        %v1298 = vld [vmem:[%s7 + $0x80] sm:$0xf]
        %v1299 = vld [vmem:[%s7 + $0x84] sm:$0xff]
        %v1300 = vld [vmem:[%s7 + $0x8c] sm:$0xf]
        %v1301 = vld [vmem:[%s7 + $0x90] sm:$0xff]
        %v1302 = vld [vmem:[%s7 + $0x98] sm:$0xf]
        %v1303 = vld [vmem:[%s7 + $0x9c] sm:$0xff]
        %v1304 = vld [vmem:[%s7 + $0xa4] sm:$0xf]
        %v1305 = vld [vmem:[%s7 + $0xa8] sm:$0xff]
        %v1306 = vld [vmem:[%s7 + $0xb0] sm:$0xf]
        %v1307 = vld [vmem:[%s7 + $0xb4] sm:$0xff]
        %v1308 = vld [vmem:[%s7 + $0xbc] sm:$0xf]
        %v1309 = vld [vmem:[#allocation2] sm:$0xff]
        %v1310 = vld [vmem:[#allocation2 + $0x8] sm:$0xff]
        %v1311 = vld [vmem:[#allocation2 + $0x10] sm:$0xff]
        %v1344 = vunpack.c.l.b16 %v1245
        %v1345 = vunpack.c.h.b16 %v1245
        %v1346 = vunpack.c.l.b16 %v1246
        %v1347 = vunpack.c.l.b16 %v1247
        %v1348 = vunpack.c.h.b16 %v1247
        %v1349 = vunpack.c.l.b16 %v1248
        %v1350 = vunpack.c.l.b16 %v1249
        %v1351 = vunpack.c.h.b16 %v1249
        %v1352 = vunpack.c.l.b16 %v1250
        %v1353 = vunpack.c.l.b16 %v1251
        %v1354 = vunpack.c.h.b16 %v1251
        %v1355 = vunpack.c.l.b16 %v1252
        %v1356 = vunpack.c.l.b16 %v1253
        %v1357 = vunpack.c.h.b16 %v1253
        %v1358 = vunpack.c.l.b16 %v1254
        %v1359 = vunpack.c.l.b16 %v1255
        %v1360 = vunpack.c.h.b16 %v1255
        %v1361 = vunpack.c.l.b16 %v1256
        %v1362 = vunpack.c.l.b16 %v1257
        %v1363 = vunpack.c.h.b16 %v1257
        %v1364 = vunpack.c.l.b16 %v1258
        %v1365 = vunpack.c.l.b16 %v1259
        %v1366 = vunpack.c.h.b16 %v1259
        %v1367 = vunpack.c.l.b16 %v1260
        %v1368 = vunpack.c.l.b16 %v1261
        %v1369 = vunpack.c.h.b16 %v1261
        %v1370 = vunpack.c.l.b16 %v1262
        %v1371 = vunpack.c.l.b16 %v1263
        %v1372 = vunpack.c.h.b16 %v1263
        %v1373 = vunpack.c.l.b16 %v1264
        %v1374 = vunpack.c.l.b16 %v1265
        %v1375 = vunpack.c.h.b16 %v1265
        %v1376 = vunpack.c.l.b16 %v1266
        %v1377 = vunpack.c.l.b16 %v1267
        %v1378 = vunpack.c.h.b16 %v1267
        %v1379 = vunpack.c.l.b16 %v1268
        %v1380 = vunpack.c.l.b16 %v1269
        %v1381 = vunpack.c.h.b16 %v1269
        %v1382 = vunpack.c.l.b16 %v1270
        %v1383 = vunpack.c.l.b16 %v1271
        %v1384 = vunpack.c.h.b16 %v1271
        %v1385 = vunpack.c.l.b16 %v1272
        %v1386 = vunpack.c.l.b16 %v1273
        %v1387 = vunpack.c.h.b16 %v1273
        %v1388 = vunpack.c.l.b16 %v1274
        %v1389 = vunpack.c.l.b16 %v1275
        %v1390 = vunpack.c.h.b16 %v1275
        %v1391 = vunpack.c.l.b16 %v1276
        %v1392 = vpack.c.b16 %v1347, %v1344
        %v1393 = vpack.c.b16 %v1348, %v1345
        %v1394 = vpack.c.b16 %v1349, %v1346
        %v1395 = vpack.c.b16 %v1353, %v1350
        %v1396 = vpack.c.b16 %v1354, %v1351
        %v1397 = vpack.c.b16 %v1355, %v1352
        %v1398 = vpack.c.b16 %v1359, %v1356
        %v1399 = vpack.c.b16 %v1360, %v1357
        %v1400 = vpack.c.b16 %v1361, %v1358
        %v1401 = vpack.c.b16 %v1365, %v1362
        %v1402 = vpack.c.b16 %v1366, %v1363
        %v1403 = vpack.c.b16 %v1367, %v1364
        %v1404 = vpack.c.b16 %v1371, %v1368
        %v1405 = vpack.c.b16 %v1372, %v1369
        %v1406 = vpack.c.b16 %v1373, %v1370
        %v1407 = vpack.c.b16 %v1377, %v1374
        %v1408 = vpack.c.b16 %v1378, %v1375
        %v1409 = vpack.c.b16 %v1379, %v1376
        %v1410 = vpack.c.b16 %v1383, %v1380
        %v1411 = vpack.c.b16 %v1384, %v1381
        %v1412 = vpack.c.b16 %v1385, %v1382
        %v1413 = vpack.c.b16 %v1389, %v1386
        %v1414 = vpack.c.b16 %v1390, %v1387
        %v1415 = vpack.c.b16 %v1391, %v1388
        %1440 = vmatpush.bf16.msra.mxu0 %v1413
        %1441 = vmatpush.bf16.msra.mxu0 %v1410
        %1442 = vmatpush.bf16.msra.mxu0 %v1407
        %1443 = vmatpush.bf16.msra.mxu0 %v1404
        %1444 = vmatpush.bf16.msra.mxu0 %v1401
        %1445 = vmatpush.bf16.msra.mxu0 %v1398
        %1446 = vmatpush.bf16.msra.mxu0 %v1395
        %1447 = vmatpush.bf16.msra.mxu0 %v1392
        %1448 = vmatmul.bf16.gmra.mxu0 0
        %v1449 = vpop.f32.mrf.mxu0
        %v1450 = vadd.f32 0.0, %v1449
        %v1451 = vpop.f32.mrf.mxu0
        %1452 = vdwg.mxu0
        %1453 = vmatpush.bf16.msra.mxu0 %v1414
        %1454 = vmatpush.bf16.msra.mxu0 %v1411
        %1455 = vmatpush.bf16.msra.mxu0 %v1408
        %1456 = vmatpush.bf16.msra.mxu0 %v1405
        %1457 = vmatpush.bf16.msra.mxu0 %v1402
        %1458 = vmatpush.bf16.msra.mxu0 %v1399
        %1459 = vmatpush.bf16.msra.mxu0 %v1396
        %1460 = vmatpush.bf16.msra.mxu0 %v1393
        %1461 = vmatmul.bf16.gmra.mxu0 0
        %v1462 = vpop.f32.mrf.mxu0
        %v1463 = vadd.f32 0.0, %v1462
        %v1464 = vpop.f32.mrf.mxu0
        %1465 = vdwg.mxu0
        %1466 = vmatpush.bf16.msra.mxu0 %v1415
        %1467 = vmatpush.bf16.msra.mxu0 %v1412
        %1468 = vmatpush.bf16.msra.mxu0 %v1409
        %1469 = vmatpush.bf16.msra.mxu0 %v1406
        %1470 = vmatpush.bf16.msra.mxu0 %v1403
        %1471 = vmatpush.bf16.msra.mxu0 %v1400
        %1472 = vmatpush.bf16.msra.mxu0 %v1397
        %1473 = vmatpush.bf16.msra.mxu0 %v1394
        %1474 = vmatmul.bf16.gmra.mxu0 0
        %v1475 = vpop.f32.mrf.mxu0
        %v1476 = vadd.f32 0.0, %v1475
        %v1477 = vpop.f32.mrf.mxu0
        %1478 = vdwg.mxu0
        %v1479 = vadd.f32 %v1309, %v1450
        %v1480 = vmul.f32 %v1479, 0.5
        %v1481 = vtanh.pop %v1480
        %v1482 = vadd.f32 %v1481, 1.0
        %v1483 = vmul.f32 %v1482, 0.5
        %v1484 = vadd.f32 %v1310, %v1463
        %v1485 = vmul.f32 %v1484, 0.5
        %v1486 = vtanh.pop %v1485
        %v1487 = vadd.f32 %v1486, 1.0
        %v1488 = vmul.f32 %v1487, 0.5
        %v1489 = vadd.f32 %v1476, %v1239
        %v1490 = vmul.f32 %v1483, %v1489
        %v1491 = vadd.f32 %v1311, %v1490
        %v1492 = vtanh.pop %v1491
        %v1493 = vsub.f32 1.0, %v1488
        %v1494 = vmul.f32 %v1493, %v1492
        %v1495 = vmul.f32 %v1488, 0.0
        %v1496 = vadd.f32 %v1494, %v1495
        %s1497 = scalar_lea.vmem [#allocation2], 24
        %v1498 = vld [vmem:[%s1497] sm:$0xff]
        %v1499 = vld [vmem:[%s1497 + $0x8] sm:$0xff]
        %v1500 = vld [vmem:[%s1497 + $0x10] sm:$0xff]
        %v1501 = vpack.c.bf16 %v1496, %v1496
        %1502 = vmatpush.bf16.msra.mxu0 %v1413
        %1503 = vmatpush.bf16.msra.mxu0 %v1410
        %1504 = vmatpush.bf16.msra.mxu0 %v1407
        %1505 = vmatpush.bf16.msra.mxu0 %v1404
        %1506 = vmatpush.bf16.msra.mxu0 %v1401
        %1507 = vmatpush.bf16.msra.mxu0 %v1398
        %1508 = vmatpush.bf16.msra.mxu0 %v1395
        %1509 = vmatpush.bf16.msra.mxu0 %v1392
        %1510 = vmatmul.bf16.gmra.mxu0 %v1501
        %v1511 = vpop.f32.mrf.mxu0
        %v1512 = vadd.f32 0.0, %v1511
        %v1513 = vpop.f32.mrf.mxu0
        %1514 = vdwg.mxu0
        %1515 = vmatpush.bf16.msra.mxu0 %v1414
        %1516 = vmatpush.bf16.msra.mxu0 %v1411
        %1517 = vmatpush.bf16.msra.mxu0 %v1408
        %1518 = vmatpush.bf16.msra.mxu0 %v1405
        %1519 = vmatpush.bf16.msra.mxu0 %v1402
        %1520 = vmatpush.bf16.msra.mxu0 %v1399
        %1521 = vmatpush.bf16.msra.mxu0 %v1396
        %1522 = vmatpush.bf16.msra.mxu0 %v1393
        %1523 = vmatmul.bf16.gmra.mxu0 %v1501
        %v1524 = vpop.f32.mrf.mxu0
        %v1525 = vadd.f32 0.0, %v1524
        %v1526 = vpop.f32.mrf.mxu0
        %1527 = vdwg.mxu0
        %1528 = vmatpush.bf16.msra.mxu0 %v1415
        %1529 = vmatpush.bf16.msra.mxu0 %v1412
        %1530 = vmatpush.bf16.msra.mxu0 %v1409
        %1531 = vmatpush.bf16.msra.mxu0 %v1406
        %1532 = vmatpush.bf16.msra.mxu0 %v1403
        %1533 = vmatpush.bf16.msra.mxu0 %v1400
        %1534 = vmatpush.bf16.msra.mxu0 %v1397
        %1535 = vmatpush.bf16.msra.mxu0 %v1394
        %1536 = vmatmul.bf16.gmra.mxu0 %v1501
        %v1537 = vpop.f32.mrf.mxu0
        %v1538 = vadd.f32 0.0, %v1537
        %v1539 = vpop.f32.mrf.mxu0
        %1540 = vdwg.mxu0
        %v1541 = vadd.f32 %v1498, %v1512
        %v1542 = vmul.f32 %v1541, 0.5
        %v1543 = vtanh.pop %v1542
        %v1544 = vadd.f32 %v1543, 1.0
        %v1545 = vmul.f32 %v1544, 0.5
        %v1546 = vadd.f32 %v1499, %v1525
        %v1547 = vmul.f32 %v1546, 0.5
        %v1548 = vtanh.pop %v1547
        %v1549 = vadd.f32 %v1548, 1.0
        %v1550 = vmul.f32 %v1549, 0.5
        %v1551 = vadd.f32 %v1538, %v1239
        %v1552 = vmul.f32 %v1545, %v1551
        %v1553 = vadd.f32 %v1500, %v1552
        %v1554 = vtanh.pop %v1553
        %v1555 = vsub.f32 1.0, %v1550
        %v1556 = vmul.f32 %v1555, %v1554
        %v1557 = vmul.f32 %v1550, %v1496
        %v1558 = vadd.f32 %v1556, %v1557
        %s1559 = scalar_lea.vmem [#allocation2], 48
        %v1560 = vld [vmem:[%s1559] sm:$0xff]
        %v1561 = vld [vmem:[%s1559 + $0x8] sm:$0xff]
        %v1562 = vld [vmem:[%s1559 + $0x10] sm:$0xff]
        %v1563 = vpack.c.bf16 %v1558, %v1558
        %1564 = vmatpush.bf16.msra.mxu0 %v1413
        %1565 = vmatpush.bf16.msra.mxu0 %v1410
        %1566 = vmatpush.bf16.msra.mxu0 %v1407
        %1567 = vmatpush.bf16.msra.mxu0 %v1404
        %1568 = vmatpush.bf16.msra.mxu0 %v1401
        %1569 = vmatpush.bf16.msra.mxu0 %v1398
        %1570 = vmatpush.bf16.msra.mxu0 %v1395
        %1571 = vmatpush.bf16.msra.mxu0 %v1392
        %1572 = vmatmul.bf16.gmra.mxu0 %v1563
        %v1573 = vpop.f32.mrf.mxu0
        %v1574 = vadd.f32 0.0, %v1573
        %v1575 = vpop.f32.mrf.mxu0
        %1576 = vdwg.mxu0
        %1577 = vmatpush.bf16.msra.mxu0 %v1414
        %1578 = vmatpush.bf16.msra.mxu0 %v1411
        %1579 = vmatpush.bf16.msra.mxu0 %v1408
        %1580 = vmatpush.bf16.msra.mxu0 %v1405
        %1581 = vmatpush.bf16.msra.mxu0 %v1402
        %1582 = vmatpush.bf16.msra.mxu0 %v1399
        %1583 = vmatpush.bf16.msra.mxu0 %v1396
        %1584 = vmatpush.bf16.msra.mxu0 %v1393
        %1585 = vmatmul.bf16.gmra.mxu0 %v1563
        %v1586 = vpop.f32.mrf.mxu0
        %v1587 = vadd.f32 0.0, %v1586
        %v1588 = vpop.f32.mrf.mxu0
        %1589 = vdwg.mxu0
        %1590 = vmatpush.bf16.msra.mxu0 %v1415
        %1591 = vmatpush.bf16.msra.mxu0 %v1412
        %1592 = vmatpush.bf16.msra.mxu0 %v1409
        %1593 = vmatpush.bf16.msra.mxu0 %v1406
        %1594 = vmatpush.bf16.msra.mxu0 %v1403
        %1595 = vmatpush.bf16.msra.mxu0 %v1400
        %1596 = vmatpush.bf16.msra.mxu0 %v1397
        %1597 = vmatpush.bf16.msra.mxu0 %v1394
        %1598 = vmatmul.bf16.gmra.mxu0 %v1563
        %v1599 = vpop.f32.mrf.mxu0
        %v1600 = vadd.f32 0.0, %v1599
        %v1601 = vpop.f32.mrf.mxu0
        %1602 = vdwg.mxu0
        %v1603 = vadd.f32 %v1560, %v1574
        %v1604 = vmul.f32 %v1603, 0.5
        %v1605 = vtanh.pop %v1604
        %v1606 = vadd.f32 %v1605, 1.0
        %v1607 = vmul.f32 %v1606, 0.5
        %v1608 = vadd.f32 %v1561, %v1587
        %v1609 = vmul.f32 %v1608, 0.5
        %v1610 = vtanh.pop %v1609
        %v1611 = vadd.f32 %v1610, 1.0
        %v1612 = vmul.f32 %v1611, 0.5
        %v1613 = vadd.f32 %v1600, %v1239
        %v1614 = vmul.f32 %v1607, %v1613
        %v1615 = vadd.f32 %v1562, %v1614
        %v1616 = vtanh.pop %v1615
        %v1617 = vsub.f32 1.0, %v1612
        %v1618 = vmul.f32 %v1617, %v1616
        %v1619 = vmul.f32 %v1612, %v1558
        %v1620 = vadd.f32 %v1618, %v1619
        %s1621 = scalar_lea.vmem [#allocation2], 72
        %v1622 = vld [vmem:[%s1621] sm:$0xff]
        %v1623 = vld [vmem:[%s1621 + $0x8] sm:$0xff]
        %v1624 = vld [vmem:[%s1621 + $0x10] sm:$0xff]
        %v1625 = vpack.c.bf16 %v1620, %v1620
        %1626 = vmatpush.bf16.msra.mxu0 %v1413
        %1627 = vmatpush.bf16.msra.mxu0 %v1410
        %1628 = vmatpush.bf16.msra.mxu0 %v1407
        %1629 = vmatpush.bf16.msra.mxu0 %v1404
        %1630 = vmatpush.bf16.msra.mxu0 %v1401
        %1631 = vmatpush.bf16.msra.mxu0 %v1398
        %1632 = vmatpush.bf16.msra.mxu0 %v1395
        %1633 = vmatpush.bf16.msra.mxu0 %v1392
        %1634 = vmatmul.bf16.gmra.mxu0 %v1625
        %v1635 = vpop.f32.mrf.mxu0
        %v1636 = vadd.f32 0.0, %v1635
        %v1637 = vpop.f32.mrf.mxu0
        %1638 = vdwg.mxu0
        %1639 = vmatpush.bf16.msra.mxu0 %v1414
        %1640 = vmatpush.bf16.msra.mxu0 %v1411
        %1641 = vmatpush.bf16.msra.mxu0 %v1408
        %1642 = vmatpush.bf16.msra.mxu0 %v1405
        %1643 = vmatpush.bf16.msra.mxu0 %v1402
        %1644 = vmatpush.bf16.msra.mxu0 %v1399
        %1645 = vmatpush.bf16.msra.mxu0 %v1396
        %1646 = vmatpush.bf16.msra.mxu0 %v1393
        %1647 = vmatmul.bf16.gmra.mxu0 %v1625
        %v1648 = vpop.f32.mrf.mxu0
        %v1649 = vadd.f32 0.0, %v1648
        %v1650 = vpop.f32.mrf.mxu0
        %1651 = vdwg.mxu0
        %1652 = vmatpush.bf16.msra.mxu0 %v1415
        %1653 = vmatpush.bf16.msra.mxu0 %v1412
        %1654 = vmatpush.bf16.msra.mxu0 %v1409
        %1655 = vmatpush.bf16.msra.mxu0 %v1406
        %1656 = vmatpush.bf16.msra.mxu0 %v1403
        %1657 = vmatpush.bf16.msra.mxu0 %v1400
        %1658 = vmatpush.bf16.msra.mxu0 %v1397
        %1659 = vmatpush.bf16.msra.mxu0 %v1394
        %1660 = vmatmul.bf16.gmra.mxu0 %v1625
        %v1661 = vpop.f32.mrf.mxu0
        %v1662 = vadd.f32 0.0, %v1661
        %v1663 = vpop.f32.mrf.mxu0
        %1664 = vdwg.mxu0
        %v1665 = vadd.f32 %v1622, %v1636
        %v1666 = vmul.f32 %v1665, 0.5
        %v1667 = vtanh.pop %v1666
        %v1668 = vadd.f32 %v1667, 1.0
        %v1669 = vmul.f32 %v1668, 0.5
        %v1670 = vadd.f32 %v1623, %v1649
        %v1671 = vmul.f32 %v1670, 0.5
        %v1672 = vtanh.pop %v1671
        %v1673 = vadd.f32 %v1672, 1.0
        %v1674 = vmul.f32 %v1673, 0.5
        %v1675 = vadd.f32 %v1662, %v1239
        %v1676 = vmul.f32 %v1669, %v1675
        %v1677 = vadd.f32 %v1624, %v1676
        %v1678 = vtanh.pop %v1677
        %v1679 = vsub.f32 1.0, %v1674
        %v1680 = vmul.f32 %v1679, %v1678
        %v1681 = vmul.f32 %v1674, %v1620
        %v1682 = vadd.f32 %v1680, %v1681
        %s1683 = scalar_lea.vmem [#allocation2], 96
        %v1684 = vld [vmem:[%s1683] sm:$0xff]
        %v1685 = vld [vmem:[%s1683 + $0x8] sm:$0xff]
        %v1686 = vld [vmem:[%s1683 + $0x10] sm:$0xff]
        %v1687 = vpack.c.bf16 %v1682, %v1682
        %1688 = vmatpush.bf16.msra.mxu0 %v1413
        %1689 = vmatpush.bf16.msra.mxu0 %v1410
        %1690 = vmatpush.bf16.msra.mxu0 %v1407
        %1691 = vmatpush.bf16.msra.mxu0 %v1404
        %1692 = vmatpush.bf16.msra.mxu0 %v1401
        %1693 = vmatpush.bf16.msra.mxu0 %v1398
        %1694 = vmatpush.bf16.msra.mxu0 %v1395
        %1695 = vmatpush.bf16.msra.mxu0 %v1392
        %1696 = vmatmul.bf16.gmra.mxu0 %v1687
        %v1697 = vpop.f32.mrf.mxu0
        %v1698 = vadd.f32 0.0, %v1697
        %v1699 = vpop.f32.mrf.mxu0
        %1700 = vdwg.mxu0
        %1701 = vmatpush.bf16.msra.mxu0 %v1414
        %1702 = vmatpush.bf16.msra.mxu0 %v1411
        %1703 = vmatpush.bf16.msra.mxu0 %v1408
        %1704 = vmatpush.bf16.msra.mxu0 %v1405
        %1705 = vmatpush.bf16.msra.mxu0 %v1402
        %1706 = vmatpush.bf16.msra.mxu0 %v1399
        %1707 = vmatpush.bf16.msra.mxu0 %v1396
        %1708 = vmatpush.bf16.msra.mxu0 %v1393
        %1709 = vmatmul.bf16.gmra.mxu0 %v1687
        %v1710 = vpop.f32.mrf.mxu0
        %v1711 = vadd.f32 0.0, %v1710
        %v1712 = vpop.f32.mrf.mxu0
        %1713 = vdwg.mxu0
        %1714 = vmatpush.bf16.msra.mxu0 %v1415
        %1715 = vmatpush.bf16.msra.mxu0 %v1412
        %1716 = vmatpush.bf16.msra.mxu0 %v1409
        %1717 = vmatpush.bf16.msra.mxu0 %v1406
        %1718 = vmatpush.bf16.msra.mxu0 %v1403
        %1719 = vmatpush.bf16.msra.mxu0 %v1400
        %1720 = vmatpush.bf16.msra.mxu0 %v1397
        %1721 = vmatpush.bf16.msra.mxu0 %v1394
        %1722 = vmatmul.bf16.gmra.mxu0 %v1687
        %v1723 = vpop.f32.mrf.mxu0
        %v1724 = vadd.f32 0.0, %v1723
        %v1725 = vpop.f32.mrf.mxu0
        %1726 = vdwg.mxu0
        %v1727 = vadd.f32 %v1684, %v1698
        %v1728 = vmul.f32 %v1727, 0.5
        %v1729 = vtanh.pop %v1728
        %v1730 = vadd.f32 %v1729, 1.0
        %v1731 = vmul.f32 %v1730, 0.5
        %v1732 = vadd.f32 %v1685, %v1711
        %v1733 = vmul.f32 %v1732, 0.5
        %v1734 = vtanh.pop %v1733
        %v1735 = vadd.f32 %v1734, 1.0
        %v1736 = vmul.f32 %v1735, 0.5
        %v1737 = vadd.f32 %v1724, %v1239
        %v1738 = vmul.f32 %v1731, %v1737
        %v1739 = vadd.f32 %v1686, %v1738
        %v1740 = vtanh.pop %v1739
        %v1741 = vsub.f32 1.0, %v1736
        %v1742 = vmul.f32 %v1741, %v1740
        %v1743 = vmul.f32 %v1736, %v1682
        %v1744 = vadd.f32 %v1742, %v1743
        %s1745 = scalar_lea.vmem [#allocation2], 120
        %v1746 = vld [vmem:[%s1745] sm:$0xff]
        %v1747 = vld [vmem:[%s1745 + $0x8] sm:$0xff]
        %v1748 = vld [vmem:[%s1745 + $0x10] sm:$0xff]
        %v1749 = vpack.c.bf16 %v1744, %v1744
        %1750 = vmatpush.bf16.msra.mxu0 %v1413
        %1751 = vmatpush.bf16.msra.mxu0 %v1410
        %1752 = vmatpush.bf16.msra.mxu0 %v1407
        %1753 = vmatpush.bf16.msra.mxu0 %v1404
        %1754 = vmatpush.bf16.msra.mxu0 %v1401
        %1755 = vmatpush.bf16.msra.mxu0 %v1398
        %1756 = vmatpush.bf16.msra.mxu0 %v1395
        %1757 = vmatpush.bf16.msra.mxu0 %v1392
        %1758 = vmatmul.bf16.gmra.mxu0 %v1749
        %v1759 = vpop.f32.mrf.mxu0
        %v1760 = vadd.f32 0.0, %v1759
        %v1761 = vpop.f32.mrf.mxu0
        %1762 = vdwg.mxu0
        %1763 = vmatpush.bf16.msra.mxu0 %v1414
        %1764 = vmatpush.bf16.msra.mxu0 %v1411
        %1765 = vmatpush.bf16.msra.mxu0 %v1408
        %1766 = vmatpush.bf16.msra.mxu0 %v1405
        %1767 = vmatpush.bf16.msra.mxu0 %v1402
        %1768 = vmatpush.bf16.msra.mxu0 %v1399
        %1769 = vmatpush.bf16.msra.mxu0 %v1396
        %1770 = vmatpush.bf16.msra.mxu0 %v1393
        %1771 = vmatmul.bf16.gmra.mxu0 %v1749
        %v1772 = vpop.f32.mrf.mxu0
        %v1773 = vadd.f32 0.0, %v1772
        %v1774 = vpop.f32.mrf.mxu0
        %1775 = vdwg.mxu0
        %1776 = vmatpush.bf16.msra.mxu0 %v1415
        %1777 = vmatpush.bf16.msra.mxu0 %v1412
        %1778 = vmatpush.bf16.msra.mxu0 %v1409
        %1779 = vmatpush.bf16.msra.mxu0 %v1406
        %1780 = vmatpush.bf16.msra.mxu0 %v1403
        %1781 = vmatpush.bf16.msra.mxu0 %v1400
        %1782 = vmatpush.bf16.msra.mxu0 %v1397
        %1783 = vmatpush.bf16.msra.mxu0 %v1394
        %1784 = vmatmul.bf16.gmra.mxu0 %v1749
        %v1785 = vpop.f32.mrf.mxu0
        %v1786 = vadd.f32 0.0, %v1785
        %v1787 = vpop.f32.mrf.mxu0
        %1788 = vdwg.mxu0
        %v1789 = vadd.f32 %v1746, %v1760
        %v1790 = vmul.f32 %v1789, 0.5
        %v1791 = vtanh.pop %v1790
        %v1792 = vadd.f32 %v1791, 1.0
        %v1793 = vmul.f32 %v1792, 0.5
        %v1794 = vadd.f32 %v1747, %v1773
        %v1795 = vmul.f32 %v1794, 0.5
        %v1796 = vtanh.pop %v1795
        %v1797 = vadd.f32 %v1796, 1.0
        %v1798 = vmul.f32 %v1797, 0.5
        %v1799 = vadd.f32 %v1786, %v1239
        %v1800 = vmul.f32 %v1793, %v1799
        %v1801 = vadd.f32 %v1748, %v1800
        %v1802 = vtanh.pop %v1801
        %v1803 = vsub.f32 1.0, %v1798
        %v1804 = vmul.f32 %v1803, %v1802
        %v1805 = vmul.f32 %v1798, %v1744
        %v1806 = vadd.f32 %v1804, %v1805
        %s1807 = scalar_lea.vmem [#allocation2], 144
        %v1808 = vld [vmem:[%s1807] sm:$0xff]
        %v1809 = vld [vmem:[%s1807 + $0x8] sm:$0xff]
        %v1810 = vld [vmem:[%s1807 + $0x10] sm:$0xff]
        %v1811 = vpack.c.bf16 %v1806, %v1806
        %1812 = vmatpush.bf16.msra.mxu0 %v1413
        %1813 = vmatpush.bf16.msra.mxu0 %v1410
        %1814 = vmatpush.bf16.msra.mxu0 %v1407
        %1815 = vmatpush.bf16.msra.mxu0 %v1404
        %1816 = vmatpush.bf16.msra.mxu0 %v1401
        %1817 = vmatpush.bf16.msra.mxu0 %v1398
        %1818 = vmatpush.bf16.msra.mxu0 %v1395
        %1819 = vmatpush.bf16.msra.mxu0 %v1392
        %1820 = vmatmul.bf16.gmra.mxu0 %v1811
        %v1821 = vpop.f32.mrf.mxu0
        %v1822 = vadd.f32 0.0, %v1821
        %v1823 = vpop.f32.mrf.mxu0
        %1824 = vdwg.mxu0
        %1825 = vmatpush.bf16.msra.mxu0 %v1414
        %1826 = vmatpush.bf16.msra.mxu0 %v1411
        %1827 = vmatpush.bf16.msra.mxu0 %v1408
        %1828 = vmatpush.bf16.msra.mxu0 %v1405
        %1829 = vmatpush.bf16.msra.mxu0 %v1402
        %1830 = vmatpush.bf16.msra.mxu0 %v1399
        %1831 = vmatpush.bf16.msra.mxu0 %v1396
        %1832 = vmatpush.bf16.msra.mxu0 %v1393
        %1833 = vmatmul.bf16.gmra.mxu0 %v1811
        %v1834 = vpop.f32.mrf.mxu0
        %v1835 = vadd.f32 0.0, %v1834
        %v1836 = vpop.f32.mrf.mxu0
        %1837 = vdwg.mxu0
        %1838 = vmatpush.bf16.msra.mxu0 %v1415
        %1839 = vmatpush.bf16.msra.mxu0 %v1412
        %1840 = vmatpush.bf16.msra.mxu0 %v1409
        %1841 = vmatpush.bf16.msra.mxu0 %v1406
        %1842 = vmatpush.bf16.msra.mxu0 %v1403
        %1843 = vmatpush.bf16.msra.mxu0 %v1400
        %1844 = vmatpush.bf16.msra.mxu0 %v1397
        %1845 = vmatpush.bf16.msra.mxu0 %v1394
        %1846 = vmatmul.bf16.gmra.mxu0 %v1811
        %v1847 = vpop.f32.mrf.mxu0
        %v1848 = vadd.f32 0.0, %v1847
        %v1849 = vpop.f32.mrf.mxu0
        %1850 = vdwg.mxu0
        %v1851 = vadd.f32 %v1808, %v1822
        %v1852 = vmul.f32 %v1851, 0.5
        %v1853 = vtanh.pop %v1852
        %v1854 = vadd.f32 %v1853, 1.0
        %v1855 = vmul.f32 %v1854, 0.5
        %v1856 = vadd.f32 %v1809, %v1835
        %v1857 = vmul.f32 %v1856, 0.5
        %v1858 = vtanh.pop %v1857
        %v1859 = vadd.f32 %v1858, 1.0
        %v1860 = vmul.f32 %v1859, 0.5
        %v1861 = vadd.f32 %v1848, %v1239
        %v1862 = vmul.f32 %v1855, %v1861
        %v1863 = vadd.f32 %v1810, %v1862
        %v1864 = vtanh.pop %v1863
        %v1865 = vsub.f32 1.0, %v1860
        %v1866 = vmul.f32 %v1865, %v1864
        %v1867 = vmul.f32 %v1860, %v1806
        %v1868 = vadd.f32 %v1866, %v1867
        %s1869 = scalar_lea.vmem [#allocation2], 168
        %v1870 = vld [vmem:[%s1869] sm:$0xff]
        %v1871 = vld [vmem:[%s1869 + $0x8] sm:$0xff]
        %v1872 = vld [vmem:[%s1869 + $0x10] sm:$0xff]
        %v1873 = vpack.c.bf16 %v1868, %v1868
        %1874 = vmatpush.bf16.msra.mxu0 %v1413
        %1875 = vmatpush.bf16.msra.mxu0 %v1410
        %1876 = vmatpush.bf16.msra.mxu0 %v1407
        %1877 = vmatpush.bf16.msra.mxu0 %v1404
        %1878 = vmatpush.bf16.msra.mxu0 %v1401
        %1879 = vmatpush.bf16.msra.mxu0 %v1398
        %1880 = vmatpush.bf16.msra.mxu0 %v1395
        %1881 = vmatpush.bf16.msra.mxu0 %v1392
        %1882 = vmatmul.bf16.gmra.mxu0 %v1873
        %v1883 = vpop.f32.mrf.mxu0
        %v1884 = vadd.f32 0.0, %v1883
        %v1885 = vpop.f32.mrf.mxu0
        %1886 = vdwg.mxu0
        %1887 = vmatpush.bf16.msra.mxu0 %v1414
        %1888 = vmatpush.bf16.msra.mxu0 %v1411
        %1889 = vmatpush.bf16.msra.mxu0 %v1408
        %1890 = vmatpush.bf16.msra.mxu0 %v1405
        %1891 = vmatpush.bf16.msra.mxu0 %v1402
        %1892 = vmatpush.bf16.msra.mxu0 %v1399
        %1893 = vmatpush.bf16.msra.mxu0 %v1396
        %1894 = vmatpush.bf16.msra.mxu0 %v1393
        %1895 = vmatmul.bf16.gmra.mxu0 %v1873
        %v1896 = vpop.f32.mrf.mxu0
        %v1897 = vadd.f32 0.0, %v1896
        %v1898 = vpop.f32.mrf.mxu0
        %1899 = vdwg.mxu0
        %1900 = vmatpush.bf16.msra.mxu0 %v1415
        %1901 = vmatpush.bf16.msra.mxu0 %v1412
        %1902 = vmatpush.bf16.msra.mxu0 %v1409
        %1903 = vmatpush.bf16.msra.mxu0 %v1406
        %1904 = vmatpush.bf16.msra.mxu0 %v1403
        %1905 = vmatpush.bf16.msra.mxu0 %v1400
        %1906 = vmatpush.bf16.msra.mxu0 %v1397
        %1907 = vmatpush.bf16.msra.mxu0 %v1394
        %1908 = vmatmul.bf16.gmra.mxu0 %v1873
        %v1909 = vpop.f32.mrf.mxu0
        %v1910 = vadd.f32 0.0, %v1909
        %v1911 = vpop.f32.mrf.mxu0
        %1912 = vdwg.mxu0
        %v1913 = vadd.f32 %v1870, %v1884
        %v1914 = vmul.f32 %v1913, 0.5
        %v1915 = vtanh.pop %v1914
        %v1916 = vadd.f32 %v1915, 1.0
        %v1917 = vmul.f32 %v1916, 0.5
        %v1918 = vadd.f32 %v1871, %v1897
        %v1919 = vmul.f32 %v1918, 0.5
        %v1920 = vtanh.pop %v1919
        %v1921 = vadd.f32 %v1920, 1.0
        %v1922 = vmul.f32 %v1921, 0.5
        %v1923 = vadd.f32 %v1910, %v1239
        %v1924 = vmul.f32 %v1917, %v1923
        %v1925 = vadd.f32 %v1872, %v1924
        %v1926 = vtanh.pop %v1925
        %v1927 = vsub.f32 1.0, %v1922
        %v1928 = vmul.f32 %v1927, %v1926
        %v1929 = vmul.f32 %v1922, %v1868
        %v1930 = vadd.f32 %v1928, %v1929
        %v1931 = vld [vmem:[#allocation3] sm:$0xff]
        %v1932 = vld [vmem:[#allocation3 + $0x8] sm:$0xff]
        %v1933 = vld [vmem:[#allocation3 + $0x10] sm:$0xff]
        %v1934 = vpack.c.bf16 %v1930, %v1930
        %v1967 = vunpack.c.l.b16 %v1277
        %v1968 = vunpack.c.h.b16 %v1277
        %v1969 = vunpack.c.l.b16 %v1278
        %v1970 = vunpack.c.l.b16 %v1279
        %v1971 = vunpack.c.h.b16 %v1279
        %v1972 = vunpack.c.l.b16 %v1280
        %v1973 = vunpack.c.l.b16 %v1281
        %v1974 = vunpack.c.h.b16 %v1281
        %v1975 = vunpack.c.l.b16 %v1282
        %v1976 = vunpack.c.l.b16 %v1283
        %v1977 = vunpack.c.h.b16 %v1283
        %v1978 = vunpack.c.l.b16 %v1284
        %v1979 = vunpack.c.l.b16 %v1285
        %v1980 = vunpack.c.h.b16 %v1285
        %v1981 = vunpack.c.l.b16 %v1286
        %v1982 = vunpack.c.l.b16 %v1287
        %v1983 = vunpack.c.h.b16 %v1287
        %v1984 = vunpack.c.l.b16 %v1288
        %v1985 = vunpack.c.l.b16 %v1289
        %v1986 = vunpack.c.h.b16 %v1289
        %v1987 = vunpack.c.l.b16 %v1290
        %v1988 = vunpack.c.l.b16 %v1291
        %v1989 = vunpack.c.h.b16 %v1291
        %v1990 = vunpack.c.l.b16 %v1292
        %v1991 = vunpack.c.l.b16 %v1293
        %v1992 = vunpack.c.h.b16 %v1293
        %v1993 = vunpack.c.l.b16 %v1294
        %v1994 = vunpack.c.l.b16 %v1295
        %v1995 = vunpack.c.h.b16 %v1295
        %v1996 = vunpack.c.l.b16 %v1296
        %v1997 = vunpack.c.l.b16 %v1297
        %v1998 = vunpack.c.h.b16 %v1297
        %v1999 = vunpack.c.l.b16 %v1298
        %v2000 = vunpack.c.l.b16 %v1299
        %v2001 = vunpack.c.h.b16 %v1299
        %v2002 = vunpack.c.l.b16 %v1300
        %v2003 = vunpack.c.l.b16 %v1301
        %v2004 = vunpack.c.h.b16 %v1301
        %v2005 = vunpack.c.l.b16 %v1302
        %v2006 = vunpack.c.l.b16 %v1303
        %v2007 = vunpack.c.h.b16 %v1303
        %v2008 = vunpack.c.l.b16 %v1304
        %v2009 = vunpack.c.l.b16 %v1305
        %v2010 = vunpack.c.h.b16 %v1305
        %v2011 = vunpack.c.l.b16 %v1306
        %v2012 = vunpack.c.l.b16 %v1307
        %v2013 = vunpack.c.h.b16 %v1307
        %v2014 = vunpack.c.l.b16 %v1308
        %v2015 = vpack.c.b16 %v1970, %v1967
        %v2016 = vpack.c.b16 %v1971, %v1968
        %v2017 = vpack.c.b16 %v1972, %v1969
        %v2018 = vpack.c.b16 %v1976, %v1973
        %v2019 = vpack.c.b16 %v1977, %v1974
        %v2020 = vpack.c.b16 %v1978, %v1975
        %v2021 = vpack.c.b16 %v1982, %v1979
        %v2022 = vpack.c.b16 %v1983, %v1980
        %v2023 = vpack.c.b16 %v1984, %v1981
        %v2024 = vpack.c.b16 %v1988, %v1985
        %v2025 = vpack.c.b16 %v1989, %v1986
        %v2026 = vpack.c.b16 %v1990, %v1987
        %v2027 = vpack.c.b16 %v1994, %v1991
        %v2028 = vpack.c.b16 %v1995, %v1992
        %v2029 = vpack.c.b16 %v1996, %v1993
        %v2030 = vpack.c.b16 %v2000, %v1997
        %v2031 = vpack.c.b16 %v2001, %v1998
        %v2032 = vpack.c.b16 %v2002, %v1999
        %v2033 = vpack.c.b16 %v2006, %v2003
        %v2034 = vpack.c.b16 %v2007, %v2004
        %v2035 = vpack.c.b16 %v2008, %v2005
        %v2036 = vpack.c.b16 %v2012, %v2009
        %v2037 = vpack.c.b16 %v2013, %v2010
        %v2038 = vpack.c.b16 %v2014, %v2011
        %2063 = vmatpush.bf16.msra.mxu0 %v2036
        %2064 = vmatpush.bf16.msra.mxu0 %v2033
        %2065 = vmatpush.bf16.msra.mxu0 %v2030
        %2066 = vmatpush.bf16.msra.mxu0 %v2027
        %2067 = vmatpush.bf16.msra.mxu0 %v2024
        %2068 = vmatpush.bf16.msra.mxu0 %v2021
        %2069 = vmatpush.bf16.msra.mxu0 %v2018
        %2070 = vmatpush.bf16.msra.mxu0 %v2015
        %2071 = vmatmul.bf16.gmra.mxu0 %v1934
        %v2072 = vpop.f32.mrf.mxu0
        %v2073 = vadd.f32 0.0, %v2072
        %v2074 = vpop.f32.mrf.mxu0
        %2075 = vdwg.mxu0
        %2076 = vmatpush.bf16.msra.mxu0 %v2037
        %2077 = vmatpush.bf16.msra.mxu0 %v2034
        %2078 = vmatpush.bf16.msra.mxu0 %v2031
        %2079 = vmatpush.bf16.msra.mxu0 %v2028
        %2080 = vmatpush.bf16.msra.mxu0 %v2025
        %2081 = vmatpush.bf16.msra.mxu0 %v2022
        %2082 = vmatpush.bf16.msra.mxu0 %v2019
        %2083 = vmatpush.bf16.msra.mxu0 %v2016
        %2084 = vmatmul.bf16.gmra.mxu0 %v1934
        %v2085 = vpop.f32.mrf.mxu0
        %v2086 = vadd.f32 0.0, %v2085
        %v2087 = vpop.f32.mrf.mxu0
        %2088 = vdwg.mxu0
        %2089 = vmatpush.bf16.msra.mxu0 %v2038
        %2090 = vmatpush.bf16.msra.mxu0 %v2035
        %2091 = vmatpush.bf16.msra.mxu0 %v2032
        %2092 = vmatpush.bf16.msra.mxu0 %v2029
        %2093 = vmatpush.bf16.msra.mxu0 %v2026
        %2094 = vmatpush.bf16.msra.mxu0 %v2023
        %2095 = vmatpush.bf16.msra.mxu0 %v2020
        %2096 = vmatpush.bf16.msra.mxu0 %v2017
        %2097 = vmatmul.bf16.gmra.mxu0 %v1934
        %v2098 = vpop.f32.mrf.mxu0
        %v2099 = vadd.f32 0.0, %v2098
        %v2100 = vpop.f32.mrf.mxu0
        %2101 = vdwg.mxu0
        %v2102 = vadd.f32 %v1931, %v2073
        %v2103 = vmul.f32 %v2102, 0.5
        %v2104 = vtanh.pop %v2103
        %v2105 = vadd.f32 %v2104, 1.0
        %v2106 = vmul.f32 %v2105, 0.5
        %v2107 = vadd.f32 %v1932, %v2086
        %v2108 = vmul.f32 %v2107, 0.5
        %v2109 = vtanh.pop %v2108
        %v2110 = vadd.f32 %v2109, 1.0
        %v2111 = vmul.f32 %v2110, 0.5
        %v2112 = vadd.f32 %v2099, %v1243
        %v2113 = vmul.f32 %v2106, %v2112
        %v2114 = vadd.f32 %v1933, %v2113
        %v2115 = vtanh.pop %v2114
        %v2116 = vsub.f32 1.0, %v2111
        %v2117 = vmul.f32 %v2116, %v2115
        %v2118 = vmul.f32 %v2111, %v1930
        %v2119 = vadd.f32 %v2117, %v2118
        %2120 = vst [vmem:[#allocation4] sm:$0xff] %v2119
        %s2121 = scalar_lea.vmem [#allocation3], 24
        %v2122 = vld [vmem:[%s2121] sm:$0xff]
        %v2123 = vld [vmem:[%s2121 + $0x8] sm:$0xff]
        %v2124 = vld [vmem:[%s2121 + $0x10] sm:$0xff]
        %v2125 = vpack.c.bf16 %v2119, %v2119
        %2126 = vmatpush.bf16.msra.mxu0 %v2036
        %2127 = vmatpush.bf16.msra.mxu0 %v2033
        %2128 = vmatpush.bf16.msra.mxu0 %v2030
        %2129 = vmatpush.bf16.msra.mxu0 %v2027
        %2130 = vmatpush.bf16.msra.mxu0 %v2024
        %2131 = vmatpush.bf16.msra.mxu0 %v2021
        %2132 = vmatpush.bf16.msra.mxu0 %v2018
        %2133 = vmatpush.bf16.msra.mxu0 %v2015
        %2134 = vmatmul.bf16.gmra.mxu0 %v2125
        %v2135 = vpop.f32.mrf.mxu0
        %v2136 = vadd.f32 0.0, %v2135
        %v2137 = vpop.f32.mrf.mxu0
        %2138 = vdwg.mxu0
        %2139 = vmatpush.bf16.msra.mxu0 %v2037
        %2140 = vmatpush.bf16.msra.mxu0 %v2034
        %2141 = vmatpush.bf16.msra.mxu0 %v2031
        %2142 = vmatpush.bf16.msra.mxu0 %v2028
        %2143 = vmatpush.bf16.msra.mxu0 %v2025
        %2144 = vmatpush.bf16.msra.mxu0 %v2022
        %2145 = vmatpush.bf16.msra.mxu0 %v2019
        %2146 = vmatpush.bf16.msra.mxu0 %v2016
        %2147 = vmatmul.bf16.gmra.mxu0 %v2125
        %v2148 = vpop.f32.mrf.mxu0
        %v2149 = vadd.f32 0.0, %v2148
        %v2150 = vpop.f32.mrf.mxu0
        %2151 = vdwg.mxu0
        %2152 = vmatpush.bf16.msra.mxu0 %v2038
        %2153 = vmatpush.bf16.msra.mxu0 %v2035
        %2154 = vmatpush.bf16.msra.mxu0 %v2032
        %2155 = vmatpush.bf16.msra.mxu0 %v2029
        %2156 = vmatpush.bf16.msra.mxu0 %v2026
        %2157 = vmatpush.bf16.msra.mxu0 %v2023
        %2158 = vmatpush.bf16.msra.mxu0 %v2020
        %2159 = vmatpush.bf16.msra.mxu0 %v2017
        %2160 = vmatmul.bf16.gmra.mxu0 %v2125
        %v2161 = vpop.f32.mrf.mxu0
        %v2162 = vadd.f32 0.0, %v2161
        %v2163 = vpop.f32.mrf.mxu0
        %2164 = vdwg.mxu0
        %v2165 = vadd.f32 %v2122, %v2136
        %v2166 = vmul.f32 %v2165, 0.5
        %v2167 = vtanh.pop %v2166
        %v2168 = vadd.f32 %v2167, 1.0
        %v2169 = vmul.f32 %v2168, 0.5
        %v2170 = vadd.f32 %v2123, %v2149
        %v2171 = vmul.f32 %v2170, 0.5
        %v2172 = vtanh.pop %v2171
        %v2173 = vadd.f32 %v2172, 1.0
        %v2174 = vmul.f32 %v2173, 0.5
        %v2175 = vadd.f32 %v2162, %v1243
        %v2176 = vmul.f32 %v2169, %v2175
        %v2177 = vadd.f32 %v2124, %v2176
        %v2178 = vtanh.pop %v2177
        %v2179 = vsub.f32 1.0, %v2174
        %v2180 = vmul.f32 %v2179, %v2178
        %v2181 = vmul.f32 %v2174, %v2119
        %v2182 = vadd.f32 %v2180, %v2181
        %s2183 = scalar_lea.vmem [#allocation4], 8
        %2184 = vst [vmem:[%s2183] sm:$0xff] %v2182
        %s2185 = scalar_lea.vmem [#allocation3], 48
        %v2186 = vld [vmem:[%s2185] sm:$0xff]
        %v2187 = vld [vmem:[%s2185 + $0x8] sm:$0xff]
        %v2188 = vld [vmem:[%s2185 + $0x10] sm:$0xff]
        %v2189 = vpack.c.bf16 %v2182, %v2182
        %2190 = vmatpush.bf16.msra.mxu0 %v2036
        %2191 = vmatpush.bf16.msra.mxu0 %v2033
        %2192 = vmatpush.bf16.msra.mxu0 %v2030
        %2193 = vmatpush.bf16.msra.mxu0 %v2027
        %2194 = vmatpush.bf16.msra.mxu0 %v2024
        %2195 = vmatpush.bf16.msra.mxu0 %v2021
        %2196 = vmatpush.bf16.msra.mxu0 %v2018
        %2197 = vmatpush.bf16.msra.mxu0 %v2015
        %2198 = vmatmul.bf16.gmra.mxu0 %v2189
        %v2199 = vpop.f32.mrf.mxu0
        %v2200 = vadd.f32 0.0, %v2199
        %v2201 = vpop.f32.mrf.mxu0
        %2202 = vdwg.mxu0
        %2203 = vmatpush.bf16.msra.mxu0 %v2037
        %2204 = vmatpush.bf16.msra.mxu0 %v2034
        %2205 = vmatpush.bf16.msra.mxu0 %v2031
        %2206 = vmatpush.bf16.msra.mxu0 %v2028
        %2207 = vmatpush.bf16.msra.mxu0 %v2025
        %2208 = vmatpush.bf16.msra.mxu0 %v2022
        %2209 = vmatpush.bf16.msra.mxu0 %v2019
        %2210 = vmatpush.bf16.msra.mxu0 %v2016
        %2211 = vmatmul.bf16.gmra.mxu0 %v2189
        %v2212 = vpop.f32.mrf.mxu0
        %v2213 = vadd.f32 0.0, %v2212
        %v2214 = vpop.f32.mrf.mxu0
        %2215 = vdwg.mxu0
        %2216 = vmatpush.bf16.msra.mxu0 %v2038
        %2217 = vmatpush.bf16.msra.mxu0 %v2035
        %2218 = vmatpush.bf16.msra.mxu0 %v2032
        %2219 = vmatpush.bf16.msra.mxu0 %v2029
        %2220 = vmatpush.bf16.msra.mxu0 %v2026
        %2221 = vmatpush.bf16.msra.mxu0 %v2023
        %2222 = vmatpush.bf16.msra.mxu0 %v2020
        %2223 = vmatpush.bf16.msra.mxu0 %v2017
        %2224 = vmatmul.bf16.gmra.mxu0 %v2189
        %v2225 = vpop.f32.mrf.mxu0
        %v2226 = vadd.f32 0.0, %v2225
        %v2227 = vpop.f32.mrf.mxu0
        %2228 = vdwg.mxu0
        %v2229 = vadd.f32 %v2186, %v2200
        %v2230 = vmul.f32 %v2229, 0.5
        %v2231 = vtanh.pop %v2230
        %v2232 = vadd.f32 %v2231, 1.0
        %v2233 = vmul.f32 %v2232, 0.5
        %v2234 = vadd.f32 %v2187, %v2213
        %v2235 = vmul.f32 %v2234, 0.5
        %v2236 = vtanh.pop %v2235
        %v2237 = vadd.f32 %v2236, 1.0
        %v2238 = vmul.f32 %v2237, 0.5
        %v2239 = vadd.f32 %v2226, %v1243
        %v2240 = vmul.f32 %v2233, %v2239
        %v2241 = vadd.f32 %v2188, %v2240
        %v2242 = vtanh.pop %v2241
        %v2243 = vsub.f32 1.0, %v2238
        %v2244 = vmul.f32 %v2243, %v2242
        %v2245 = vmul.f32 %v2238, %v2182
        %v2246 = vadd.f32 %v2244, %v2245
        %s2247 = scalar_lea.vmem [#allocation4], 16
        %2248 = vst [vmem:[%s2247] sm:$0xff] %v2246
        %s2249 = scalar_lea.vmem [#allocation3], 72
        %v2250 = vld [vmem:[%s2249] sm:$0xff]
        %v2251 = vld [vmem:[%s2249 + $0x8] sm:$0xff]
        %v2252 = vld [vmem:[%s2249 + $0x10] sm:$0xff]
        %v2253 = vpack.c.bf16 %v2246, %v2246
        %2254 = vmatpush.bf16.msra.mxu0 %v2036
        %2255 = vmatpush.bf16.msra.mxu0 %v2033
        %2256 = vmatpush.bf16.msra.mxu0 %v2030
        %2257 = vmatpush.bf16.msra.mxu0 %v2027
        %2258 = vmatpush.bf16.msra.mxu0 %v2024
        %2259 = vmatpush.bf16.msra.mxu0 %v2021
        %2260 = vmatpush.bf16.msra.mxu0 %v2018
        %2261 = vmatpush.bf16.msra.mxu0 %v2015
        %2262 = vmatmul.bf16.gmra.mxu0 %v2253
        %v2263 = vpop.f32.mrf.mxu0
        %v2264 = vadd.f32 0.0, %v2263
        %v2265 = vpop.f32.mrf.mxu0
        %2266 = vdwg.mxu0
        %2267 = vmatpush.bf16.msra.mxu0 %v2037
        %2268 = vmatpush.bf16.msra.mxu0 %v2034
        %2269 = vmatpush.bf16.msra.mxu0 %v2031
        %2270 = vmatpush.bf16.msra.mxu0 %v2028
        %2271 = vmatpush.bf16.msra.mxu0 %v2025
        %2272 = vmatpush.bf16.msra.mxu0 %v2022
        %2273 = vmatpush.bf16.msra.mxu0 %v2019
        %2274 = vmatpush.bf16.msra.mxu0 %v2016
        %2275 = vmatmul.bf16.gmra.mxu0 %v2253
        %v2276 = vpop.f32.mrf.mxu0
        %v2277 = vadd.f32 0.0, %v2276
        %v2278 = vpop.f32.mrf.mxu0
        %2279 = vdwg.mxu0
        %2280 = vmatpush.bf16.msra.mxu0 %v2038
        %2281 = vmatpush.bf16.msra.mxu0 %v2035
        %2282 = vmatpush.bf16.msra.mxu0 %v2032
        %2283 = vmatpush.bf16.msra.mxu0 %v2029
        %2284 = vmatpush.bf16.msra.mxu0 %v2026
        %2285 = vmatpush.bf16.msra.mxu0 %v2023
        %2286 = vmatpush.bf16.msra.mxu0 %v2020
        %2287 = vmatpush.bf16.msra.mxu0 %v2017
        %2288 = vmatmul.bf16.gmra.mxu0 %v2253
        %v2289 = vpop.f32.mrf.mxu0
        %v2290 = vadd.f32 0.0, %v2289
        %v2291 = vpop.f32.mrf.mxu0
        %2292 = vdwg.mxu0
        %v2293 = vadd.f32 %v2250, %v2264
        %v2294 = vmul.f32 %v2293, 0.5
        %v2295 = vtanh.pop %v2294
        %v2296 = vadd.f32 %v2295, 1.0
        %v2297 = vmul.f32 %v2296, 0.5
        %v2298 = vadd.f32 %v2251, %v2277
        %v2299 = vmul.f32 %v2298, 0.5
        %v2300 = vtanh.pop %v2299
        %v2301 = vadd.f32 %v2300, 1.0
        %v2302 = vmul.f32 %v2301, 0.5
        %v2303 = vadd.f32 %v2290, %v1243
        %v2304 = vmul.f32 %v2297, %v2303
        %v2305 = vadd.f32 %v2252, %v2304
        %v2306 = vtanh.pop %v2305
        %v2307 = vsub.f32 1.0, %v2302
        %v2308 = vmul.f32 %v2307, %v2306
        %v2309 = vmul.f32 %v2302, %v2246
        %v2310 = vadd.f32 %v2308, %v2309
        %s2311 = scalar_lea.vmem [#allocation4], 24
        %2312 = vst [vmem:[%s2311] sm:$0xff] %v2310
        %s2313 = scalar_lea.vmem [#allocation3], 96
        %v2314 = vld [vmem:[%s2313] sm:$0xff]
        %v2315 = vld [vmem:[%s2313 + $0x8] sm:$0xff]
        %v2316 = vld [vmem:[%s2313 + $0x10] sm:$0xff]
        %v2317 = vpack.c.bf16 %v2310, %v2310
        %2318 = vmatpush.bf16.msra.mxu0 %v2036
        %2319 = vmatpush.bf16.msra.mxu0 %v2033
        %2320 = vmatpush.bf16.msra.mxu0 %v2030
        %2321 = vmatpush.bf16.msra.mxu0 %v2027
        %2322 = vmatpush.bf16.msra.mxu0 %v2024
        %2323 = vmatpush.bf16.msra.mxu0 %v2021
        %2324 = vmatpush.bf16.msra.mxu0 %v2018
        %2325 = vmatpush.bf16.msra.mxu0 %v2015
        %2326 = vmatmul.bf16.gmra.mxu0 %v2317
        %v2327 = vpop.f32.mrf.mxu0
        %v2328 = vadd.f32 0.0, %v2327
        %v2329 = vpop.f32.mrf.mxu0
        %2330 = vdwg.mxu0
        %2331 = vmatpush.bf16.msra.mxu0 %v2037
        %2332 = vmatpush.bf16.msra.mxu0 %v2034
        %2333 = vmatpush.bf16.msra.mxu0 %v2031
        %2334 = vmatpush.bf16.msra.mxu0 %v2028
        %2335 = vmatpush.bf16.msra.mxu0 %v2025
        %2336 = vmatpush.bf16.msra.mxu0 %v2022
        %2337 = vmatpush.bf16.msra.mxu0 %v2019
        %2338 = vmatpush.bf16.msra.mxu0 %v2016
        %2339 = vmatmul.bf16.gmra.mxu0 %v2317
        %v2340 = vpop.f32.mrf.mxu0
        %v2341 = vadd.f32 0.0, %v2340
        %v2342 = vpop.f32.mrf.mxu0
        %2343 = vdwg.mxu0
        %2344 = vmatpush.bf16.msra.mxu0 %v2038
        %2345 = vmatpush.bf16.msra.mxu0 %v2035
        %2346 = vmatpush.bf16.msra.mxu0 %v2032
        %2347 = vmatpush.bf16.msra.mxu0 %v2029
        %2348 = vmatpush.bf16.msra.mxu0 %v2026
        %2349 = vmatpush.bf16.msra.mxu0 %v2023
        %2350 = vmatpush.bf16.msra.mxu0 %v2020
        %2351 = vmatpush.bf16.msra.mxu0 %v2017
        %2352 = vmatmul.bf16.gmra.mxu0 %v2317
        %v2353 = vpop.f32.mrf.mxu0
        %v2354 = vadd.f32 0.0, %v2353
        %v2355 = vpop.f32.mrf.mxu0
        %2356 = vdwg.mxu0
        %v2357 = vadd.f32 %v2314, %v2328
        %v2358 = vmul.f32 %v2357, 0.5
        %v2359 = vtanh.pop %v2358
        %v2360 = vadd.f32 %v2359, 1.0
        %v2361 = vmul.f32 %v2360, 0.5
        %v2362 = vadd.f32 %v2315, %v2341
        %v2363 = vmul.f32 %v2362, 0.5
        %v2364 = vtanh.pop %v2363
        %v2365 = vadd.f32 %v2364, 1.0
        %v2366 = vmul.f32 %v2365, 0.5
        %v2367 = vadd.f32 %v2354, %v1243
        %v2368 = vmul.f32 %v2361, %v2367
        %v2369 = vadd.f32 %v2316, %v2368
        %v2370 = vtanh.pop %v2369
        %v2371 = vsub.f32 1.0, %v2366
        %v2372 = vmul.f32 %v2371, %v2370
        %v2373 = vmul.f32 %v2366, %v2310
        %v2374 = vadd.f32 %v2372, %v2373
        %s2375 = scalar_lea.vmem [#allocation4], 32
        %2376 = vst [vmem:[%s2375] sm:$0xff] %v2374
        %s2377 = scalar_lea.vmem [#allocation3], 120
        %v2378 = vld [vmem:[%s2377] sm:$0xff]
        %v2379 = vld [vmem:[%s2377 + $0x8] sm:$0xff]
        %v2380 = vld [vmem:[%s2377 + $0x10] sm:$0xff]
        %v2381 = vpack.c.bf16 %v2374, %v2374
        %2382 = vmatpush.bf16.msra.mxu0 %v2036
        %2383 = vmatpush.bf16.msra.mxu0 %v2033
        %2384 = vmatpush.bf16.msra.mxu0 %v2030
        %2385 = vmatpush.bf16.msra.mxu0 %v2027
        %2386 = vmatpush.bf16.msra.mxu0 %v2024
        %2387 = vmatpush.bf16.msra.mxu0 %v2021
        %2388 = vmatpush.bf16.msra.mxu0 %v2018
        %2389 = vmatpush.bf16.msra.mxu0 %v2015
        %2390 = vmatmul.bf16.gmra.mxu0 %v2381
        %v2391 = vpop.f32.mrf.mxu0
        %v2392 = vadd.f32 0.0, %v2391
        %v2393 = vpop.f32.mrf.mxu0
        %2394 = vdwg.mxu0
        %2395 = vmatpush.bf16.msra.mxu0 %v2037
        %2396 = vmatpush.bf16.msra.mxu0 %v2034
        %2397 = vmatpush.bf16.msra.mxu0 %v2031
        %2398 = vmatpush.bf16.msra.mxu0 %v2028
        %2399 = vmatpush.bf16.msra.mxu0 %v2025
        %2400 = vmatpush.bf16.msra.mxu0 %v2022
        %2401 = vmatpush.bf16.msra.mxu0 %v2019
        %2402 = vmatpush.bf16.msra.mxu0 %v2016
        %2403 = vmatmul.bf16.gmra.mxu0 %v2381
        %v2404 = vpop.f32.mrf.mxu0
        %v2405 = vadd.f32 0.0, %v2404
        %v2406 = vpop.f32.mrf.mxu0
        %2407 = vdwg.mxu0
        %2408 = vmatpush.bf16.msra.mxu0 %v2038
        %2409 = vmatpush.bf16.msra.mxu0 %v2035
        %2410 = vmatpush.bf16.msra.mxu0 %v2032
        %2411 = vmatpush.bf16.msra.mxu0 %v2029
        %2412 = vmatpush.bf16.msra.mxu0 %v2026
        %2413 = vmatpush.bf16.msra.mxu0 %v2023
        %2414 = vmatpush.bf16.msra.mxu0 %v2020
        %2415 = vmatpush.bf16.msra.mxu0 %v2017
        %2416 = vmatmul.bf16.gmra.mxu0 %v2381
        %v2417 = vpop.f32.mrf.mxu0
        %v2418 = vadd.f32 0.0, %v2417
        %v2419 = vpop.f32.mrf.mxu0
        %2420 = vdwg.mxu0
        %v2421 = vadd.f32 %v2378, %v2392
        %v2422 = vmul.f32 %v2421, 0.5
        %v2423 = vtanh.pop %v2422
        %v2424 = vadd.f32 %v2423, 1.0
        %v2425 = vmul.f32 %v2424, 0.5
        %v2426 = vadd.f32 %v2379, %v2405
        %v2427 = vmul.f32 %v2426, 0.5
        %v2428 = vtanh.pop %v2427
        %v2429 = vadd.f32 %v2428, 1.0
        %v2430 = vmul.f32 %v2429, 0.5
        %v2431 = vadd.f32 %v2418, %v1243
        %v2432 = vmul.f32 %v2425, %v2431
        %v2433 = vadd.f32 %v2380, %v2432
        %v2434 = vtanh.pop %v2433
        %v2435 = vsub.f32 1.0, %v2430
        %v2436 = vmul.f32 %v2435, %v2434
        %v2437 = vmul.f32 %v2430, %v2374
        %v2438 = vadd.f32 %v2436, %v2437
        %s2439 = scalar_lea.vmem [#allocation4], 40
        %2440 = vst [vmem:[%s2439] sm:$0xff] %v2438
        %s2441 = scalar_lea.vmem [#allocation3], 144
        %v2442 = vld [vmem:[%s2441] sm:$0xff]
        %v2443 = vld [vmem:[%s2441 + $0x8] sm:$0xff]
        %v2444 = vld [vmem:[%s2441 + $0x10] sm:$0xff]
        %v2445 = vpack.c.bf16 %v2438, %v2438
        %2446 = vmatpush.bf16.msra.mxu0 %v2036
        %2447 = vmatpush.bf16.msra.mxu0 %v2033
        %2448 = vmatpush.bf16.msra.mxu0 %v2030
        %2449 = vmatpush.bf16.msra.mxu0 %v2027
        %2450 = vmatpush.bf16.msra.mxu0 %v2024
        %2451 = vmatpush.bf16.msra.mxu0 %v2021
        %2452 = vmatpush.bf16.msra.mxu0 %v2018
        %2453 = vmatpush.bf16.msra.mxu0 %v2015
        %2454 = vmatmul.bf16.gmra.mxu0 %v2445
        %v2455 = vpop.f32.mrf.mxu0
        %v2456 = vadd.f32 0.0, %v2455
        %v2457 = vpop.f32.mrf.mxu0
        %2458 = vdwg.mxu0
        %2459 = vmatpush.bf16.msra.mxu0 %v2037
        %2460 = vmatpush.bf16.msra.mxu0 %v2034
        %2461 = vmatpush.bf16.msra.mxu0 %v2031
        %2462 = vmatpush.bf16.msra.mxu0 %v2028
        %2463 = vmatpush.bf16.msra.mxu0 %v2025
        %2464 = vmatpush.bf16.msra.mxu0 %v2022
        %2465 = vmatpush.bf16.msra.mxu0 %v2019
        %2466 = vmatpush.bf16.msra.mxu0 %v2016
        %2467 = vmatmul.bf16.gmra.mxu0 %v2445
        %v2468 = vpop.f32.mrf.mxu0
        %v2469 = vadd.f32 0.0, %v2468
        %v2470 = vpop.f32.mrf.mxu0
        %2471 = vdwg.mxu0
        %2472 = vmatpush.bf16.msra.mxu0 %v2038
        %2473 = vmatpush.bf16.msra.mxu0 %v2035
        %2474 = vmatpush.bf16.msra.mxu0 %v2032
        %2475 = vmatpush.bf16.msra.mxu0 %v2029
        %2476 = vmatpush.bf16.msra.mxu0 %v2026
        %2477 = vmatpush.bf16.msra.mxu0 %v2023
        %2478 = vmatpush.bf16.msra.mxu0 %v2020
        %2479 = vmatpush.bf16.msra.mxu0 %v2017
        %2480 = vmatmul.bf16.gmra.mxu0 %v2445
        %v2481 = vpop.f32.mrf.mxu0
        %v2482 = vadd.f32 0.0, %v2481
        %v2483 = vpop.f32.mrf.mxu0
        %2484 = vdwg.mxu0
        %v2485 = vadd.f32 %v2442, %v2456
        %v2486 = vmul.f32 %v2485, 0.5
        %v2487 = vtanh.pop %v2486
        %v2488 = vadd.f32 %v2487, 1.0
        %v2489 = vmul.f32 %v2488, 0.5
        %v2490 = vadd.f32 %v2443, %v2469
        %v2491 = vmul.f32 %v2490, 0.5
        %v2492 = vtanh.pop %v2491
        %v2493 = vadd.f32 %v2492, 1.0
        %v2494 = vmul.f32 %v2493, 0.5
        %v2495 = vadd.f32 %v2482, %v1243
        %v2496 = vmul.f32 %v2489, %v2495
        %v2497 = vadd.f32 %v2444, %v2496
        %v2498 = vtanh.pop %v2497
        %v2499 = vsub.f32 1.0, %v2494
        %v2500 = vmul.f32 %v2499, %v2498
        %v2501 = vmul.f32 %v2494, %v2438
        %v2502 = vadd.f32 %v2500, %v2501
        %s2503 = scalar_lea.vmem [#allocation4], 48
        %2504 = vst [vmem:[%s2503] sm:$0xff] %v2502
        %s2505 = scalar_lea.vmem [#allocation3], 168
        %v2506 = vld [vmem:[%s2505] sm:$0xff]
        %v2507 = vld [vmem:[%s2505 + $0x8] sm:$0xff]
        %v2508 = vld [vmem:[%s2505 + $0x10] sm:$0xff]
        %v2509 = vpack.c.bf16 %v2502, %v2502
        %2510 = vmatpush.bf16.msra.mxu0 %v2036
        %2511 = vmatpush.bf16.msra.mxu0 %v2033
        %2512 = vmatpush.bf16.msra.mxu0 %v2030
        %2513 = vmatpush.bf16.msra.mxu0 %v2027
        %2514 = vmatpush.bf16.msra.mxu0 %v2024
        %2515 = vmatpush.bf16.msra.mxu0 %v2021
        %2516 = vmatpush.bf16.msra.mxu0 %v2018
        %2517 = vmatpush.bf16.msra.mxu0 %v2015
        %2518 = vmatmul.bf16.gmra.mxu0 %v2509
        %v2519 = vpop.f32.mrf.mxu0
        %v2520 = vadd.f32 0.0, %v2519
        %v2521 = vpop.f32.mrf.mxu0
        %2522 = vdwg.mxu0
        %2523 = vmatpush.bf16.msra.mxu0 %v2037
        %2524 = vmatpush.bf16.msra.mxu0 %v2034
        %2525 = vmatpush.bf16.msra.mxu0 %v2031
        %2526 = vmatpush.bf16.msra.mxu0 %v2028
        %2527 = vmatpush.bf16.msra.mxu0 %v2025
        %2528 = vmatpush.bf16.msra.mxu0 %v2022
        %2529 = vmatpush.bf16.msra.mxu0 %v2019
        %2530 = vmatpush.bf16.msra.mxu0 %v2016
        %2531 = vmatmul.bf16.gmra.mxu0 %v2509
        %v2532 = vpop.f32.mrf.mxu0
        %v2533 = vadd.f32 0.0, %v2532
        %v2534 = vpop.f32.mrf.mxu0
        %2535 = vdwg.mxu0
        %2536 = vmatpush.bf16.msra.mxu0 %v2038
        %2537 = vmatpush.bf16.msra.mxu0 %v2035
        %2538 = vmatpush.bf16.msra.mxu0 %v2032
        %2539 = vmatpush.bf16.msra.mxu0 %v2029
        %2540 = vmatpush.bf16.msra.mxu0 %v2026
        %2541 = vmatpush.bf16.msra.mxu0 %v2023
        %2542 = vmatpush.bf16.msra.mxu0 %v2020
        %2543 = vmatpush.bf16.msra.mxu0 %v2017
        %2544 = vmatmul.bf16.gmra.mxu0 %v2509
        %v2545 = vpop.f32.mrf.mxu0
        %v2546 = vadd.f32 0.0, %v2545
        %v2547 = vpop.f32.mrf.mxu0
        %2548 = vdwg.mxu0
        %v2549 = vadd.f32 %v2506, %v2520
        %v2550 = vmul.f32 %v2549, 0.5
        %v2551 = vtanh.pop %v2550
        %v2552 = vadd.f32 %v2551, 1.0
        %v2553 = vmul.f32 %v2552, 0.5
        %v2554 = vadd.f32 %v2507, %v2533
        %v2555 = vmul.f32 %v2554, 0.5
        %v2556 = vtanh.pop %v2555
        %v2557 = vadd.f32 %v2556, 1.0
        %v2558 = vmul.f32 %v2557, 0.5
        %v2559 = vadd.f32 %v2546, %v1243
        %v2560 = vmul.f32 %v2553, %v2559
        %v2561 = vadd.f32 %v2508, %v2560
        %v2562 = vtanh.pop %v2561
        %v2563 = vsub.f32 1.0, %v2558
        %v2564 = vmul.f32 %v2563, %v2562
        %v2565 = vmul.f32 %v2558, %v2502
        %v2566 = vadd.f32 %v2564, %v2565
        %s2567 = scalar_lea.vmem [#allocation4], 56
        %2568 = vst [vmem:[%s2567] sm:$0xff] %v2566
        %2569 = vst [vmem:[%s609] sm:$0xff] %v2566
        %v2570 = vld [vmem:[%s10] sm:$0x1]
        %v2571 = vld [vmem:[#allocation4] sm:$0xff]
        %v2572 = vld [vmem:[#allocation4 + $0x8] sm:$0xff]
        %v2573 = vld [vmem:[#allocation4 + $0x10] sm:$0xff]
        %v2574 = vld [vmem:[#allocation4 + $0x18] sm:$0xff]
        %v2575 = vld [vmem:[#allocation4 + $0x20] sm:$0xff]
        %v2576 = vld [vmem:[#allocation4 + $0x28] sm:$0xff]
        %v2577 = vld [vmem:[#allocation4 + $0x30] sm:$0xff]
        %v2578 = vld [vmem:[#allocation4 + $0x38] sm:$0xff]
        %v2580 = vperm.slane %v2570, 0
        %v2582 = vmul.f32 %v2571, %v2580
        %v2583 = vmul.f32 %v2572, %v2580
        %v2584 = vmul.f32 %v2573, %v2580
        %v2585 = vmul.f32 %v2574, %v2580
        %v2586 = vmul.f32 %v2575, %v2580
        %v2587 = vmul.f32 %v2576, %v2580
        %v2588 = vmul.f32 %v2577, %v2580
        %v2589 = vmul.f32 %v2578, %v2580
        %2590 = vadd.xlane.f32.xlu0 %v2582
        %v2591 = vpop.xlane.xlu0 %2590
        %2592 = vadd.xlane.f32.xlu0 %v2583
        %v2593 = vpop.xlane.xlu0 %2592
        %2594 = vadd.xlane.f32.xlu0 %v2584
        %v2595 = vpop.xlane.xlu0 %2594
        %2596 = vadd.xlane.f32.xlu0 %v2585
        %v2597 = vpop.xlane.xlu0 %2596
        %2598 = vadd.xlane.f32.xlu0 %v2586
        %v2599 = vpop.xlane.xlu0 %2598
        %2600 = vadd.xlane.f32.xlu0 %v2587
        %v2601 = vpop.xlane.xlu0 %2600
        %2602 = vadd.xlane.f32.xlu0 %v2588
        %v2603 = vpop.xlane.xlu0 %2602
        %2604 = vadd.xlane.f32.xlu0 %v2589
        %v2605 = vpop.xlane.xlu0 %2604
        %v2614 = vlaneseq
        %v2615 = vand.u32 %v2614, 127
        %v2616 = vperm.slane %v2591, %v2615
        %v2617 = vperm.slane %v2593, %v2615
        %v2618 = vperm.slane %v2595, %v2615
        %v2619 = vperm.slane %v2597, %v2615
        %v2620 = vperm.slane %v2599, %v2615
        %v2621 = vperm.slane %v2601, %v2615
        %v2622 = vperm.slane %v2603, %v2615
        %v2623 = vperm.slane %v2605, %v2615
        %vm2624 = vcmask 1041409
        %v2625 = vsel %vm2624, %v2617, %v2616
        %vm2626 = vcmask 1042434
        %v2627 = vsel %vm2626, %v2618, %v2625
        %vm2628 = vcmask 1043459
        %v2629 = vsel %vm2628, %v2619, %v2627
        %vm2630 = vcmask 1044484
        %v2631 = vsel %vm2630, %v2620, %v2629
        %vm2632 = vcmask 1045509
        %v2633 = vsel %vm2632, %v2621, %v2631
        %vm2634 = vcmask 1046534
        %v2635 = vsel %vm2634, %v2622, %v2633
        %vm2636 = vcmask 1047559
        %v2637 = vsel %vm2636, %v2623, %v2635
        %2639 = vxpose.xlu0.b32.start [1/16] %v2637, 128
        %2640 = vxpose.xlu0.b32.cont [2/16] 0.0, 128
        %2641 = vxpose.xlu0.b32.cont [3/16] 0.0, 128
        %2642 = vxpose.xlu0.b32.cont [4/16] 0.0, 128
        %2643 = vxpose.xlu0.b32.cont [5/16] 0.0, 128
        %2644 = vxpose.xlu0.b32.cont [6/16] 0.0, 128
        %2645 = vxpose.xlu0.b32.cont [7/16] 0.0, 128
        %2646 = vxpose.xlu0.b32.cont [8/16] 0.0, 128
        %2647 = vxpose.xlu0.b32.cont [9/16] 0.0, 128
        %2648 = vxpose.xlu0.b32.cont [10/16] 0.0, 128
        %2649 = vxpose.xlu0.b32.cont [11/16] 0.0, 128
        %2650 = vxpose.xlu0.b32.cont [12/16] 0.0, 128
        %2651 = vxpose.xlu0.b32.cont [13/16] 0.0, 128
        %2652 = vxpose.xlu0.b32.cont [14/16] 0.0, 128
        %2653 = vxpose.xlu0.b32.cont [15/16] 0.0, 128
        %2654 = vxpose.xlu0.b32.end [16/16] 0.0, 128
        %v2655 = vpop.trf.xlu0
        %v2656 = vpop.trf.xlu0
        %v2657 = vpop.trf.xlu0
        %v2658 = vpop.trf.xlu0
        %v2659 = vpop.trf.xlu0
        %v2660 = vpop.trf.xlu0
        %v2661 = vpop.trf.xlu0
        %v2662 = vpop.trf.xlu0
        %v2663 = vpop.trf.xlu0
        %v2664 = vpop.trf.xlu0
        %v2665 = vpop.trf.xlu0
        %v2666 = vpop.trf.xlu0
        %v2667 = vpop.trf.xlu0
        %v2668 = vpop.trf.xlu0
        %v2669 = vpop.trf.xlu0
        %v2670 = vpop.trf.xlu0
        %v2671 = vld [vmem:[#allocation5] sm:$0x1]
        %v2673 = vperm.slane %v2671, 0
        %2674 = vset.pattern.permute.xlu0 0
        %2675 = vperm.xlu0 %2674, %v2673
        %v2676 = vpop.permute.xlu0 %2675
        %v2678 = vadd.f32 %v2655, %v2676
        %vm2679 = vcmask 64512
        %2680 = vst.msk [vmem:[%s613] sm:$0xff] %vm2679, %v2678
        %p2681 = scmp.lt.s32.totalorder %s30, 1
        %s2682 = scalar_select %p2681, %s30, 1
        %s2683 = smul.addr %s2682, 8
        %s2684 = scalar_lea.vmem %s12, %s2683
        %s2685 = sand.u32 %s326, 1
        %s2686 = scalar_lea.sflag [#allocation9], %s2685
        %s2687 = sand.u32 %s326, 1
        %s2688 = smul.addr %s2687, 8
        %s2689 = scalar_lea.vmem [#allocation8], %s2688
        // Predicated region
        $region151: #{discriminator_forward.1} parent=141 // pred_check
          %p2690 = pneg %p310
        $region152: #{discriminator_forward.1} parent=141 // pred_check_branch
          %2692 = sbr.rel (%p2690) target = $region154
        $region153: #{discriminator_forward.1} parent=141 // pred_region
          _
        $region154: #{discriminator_forward.1} parent=141 // pred_fallthru
          _
        // Predicated region
        $region155: #{discriminator_forward.1} parent=141 // pred_check
          %p2693 = pneg %p336
        $region156: #{discriminator_forward.1} parent=141 // pred_check_branch
          %2695 = sbr.rel (%p2693) target = $region158
        $region157: #{discriminator_forward.1} parent=141 // pred_region
          %2697 = vsyncadd %s2686, 0
          %s2698 = smul.addr %s30, 8
          %s2699 = scalar_lea.hbm %s13, %s2698
          %s2701 = sshll.u32 %s2689, 4
          %s2702 = int_to_ptr.vmem [resolvable:$true] %s2701
          %s2703 = sshll.u32 %s2699, 4
          %s2704 = int_to_ptr.hbm [resolvable:$true] %s2703
          %2706 = dma.vmem_to_hbm [thread:$0]  %s2702, 128, %s2704, %s2686
        $region158: #{discriminator_forward.1} parent=141 // pred_fallthru
          _
      $region142: #{discriminator_forward.1} parent=5 // pred_fallthru
        _
      %p2707 = scmp.le.s32.totalorder 2, %s25
      // Predicated region
      $region159: #{discriminator_forward.1} parent=5 // pred_check
        %p2708 = pneg %p2707
      $region160: #{discriminator_forward.1} parent=5 // pred_check_branch
        %2710 = sbr.rel (%p2708) target = $region162
      $region161: #{discriminator_forward.1} parent=5 // pred_region
        %s2711 = ssub.s32 %s25, 2
        // Predicated region
        $region163: #{discriminator_forward.1} parent=161 // pred_check
          %p2712 = pneg %p316
        $region164: #{discriminator_forward.1} parent=161 // pred_check_branch
          %2714 = sbr.rel (%p2712) target = $region166
        $region165: #{discriminator_forward.1} parent=161 // pred_region
          %p2715 = scmp.lt.s32.totalorder %s31, 1
          %s2716 = scalar_select %p2715, %s31, 1
          %s2717 = smul.addr %s2716, 8
          %s2718 = scalar_lea.vmem %s12, %s2717
        $region166: #{discriminator_forward.1} parent=161 // pred_fallthru
          _
        // Predicated region
        $region167: #{discriminator_forward.1} parent=161 // pred_check
          %p2719 = pneg %p342
        $region168: #{discriminator_forward.1} parent=161 // pred_check_branch
          %2721 = sbr.rel (%p2719) target = $region170
        $region169: #{discriminator_forward.1} parent=161 // pred_region
          %s2722 = sand.u32 %s327, 1
          %s2723 = scalar_lea.sflag [#allocation9], %s2722
          %s2724 = sand.u32 %s327, 1
          %s2725 = smul.addr %s2724, 8
          %s2726 = scalar_lea.vmem [#allocation8], %s2725
          %2728 = dma.done %s2723, 128
        $region170: #{discriminator_forward.1} parent=161 // pred_fallthru
          _
      $region162: #{discriminator_forward.1} parent=5 // pred_fallthru
        _
    $region6: #{discriminator_forward.1} parent=1 // loop_footer
      %s29 = sadd.s32 1, %s25
    $region7: #{discriminator_forward.1} parent=1 // loop_footer_branch
      %24 = sbr.rel target = $region3
    $region8: #{discriminator_forward.1} parent=1 // loop_exit
      _
    %2729 = vsyncpa [#allocation9], 1
    %s2730 = scalar_lea.sflag [#allocation9], 1
    %2731 = vsyncpa %s2730, 1

</llo_original>
